<compile_context>
chip_gen: v7x
topology: tpu7x:2x2x1
jax: 0.10.0
libtpu: 0.0.40
codegen_flags: <defaults>
</compile_context>

<pallas_src>
import functools

import jax
import jax.numpy as jnp
from jax.experimental import pallas as pl
from jax.experimental.pallas import tpu as pltpu

EPS = 1e-5                    # nn.LayerNorm default
PARAMS_PER_BLOCK = 10         # w_i, b_i, w_h, b_h, w_out, b_out, w1, b1, w2, b2


def _layer_norm(x):
    # elementwise_affine=False: normalize over last dim, biased variance.
    mu = jnp.mean(x, axis=-1, keepdims=True)
    var = jnp.mean((x - mu) ** 2, axis=-1, keepdims=True)
    return (x - mu) * jax.lax.rsqrt(var + EPS)


def _dot_bf16(a, b):
    # bf16 MXU operands, f32 accumulate (elementwise math stays f32).
    return jnp.dot(a.astype(jnp.bfloat16), b.astype(jnp.bfloat16),
                   preferred_element_type=jnp.float32)


# ---------------------------------------------------------------------------
# Fused model kernel: for each block  x <- RNNLayer(x); x <- ResidBlock(x)
# ---------------------------------------------------------------------------
def fused_rnn_model_kernel(*refs, num_blocks, seq_len, b_tile, hidden_size,
                           input_size):
    T, Bt, H, D = seq_len, b_tile, hidden_size, input_size

    x_ref = refs[0]
    param_refs = refs[1:1 + PARAMS_PER_BLOCK * num_blocks]
    o_ref = refs[1 + PARAMS_PER_BLOCK * num_blocks]
    gi_scr, hs_scr = refs[2 + PARAMS_PER_BLOCK * num_blocks:]

    def to_tmajor(a):        # (Bt, T, C) -> (T*Bt, C), rows grouped by timestep
        C = a.shape[-1]
        if Bt == 1:
            return a.reshape(T, C)
        return jnp.swapaxes(a, 0, 1).reshape(T * Bt, C)

    def from_tmajor(a2):     # (T*Bt, C) -> (Bt, T, C)
        C = a2.shape[-1]
        if Bt == 1:
            return a2.reshape(1, T, C)
        return jnp.swapaxes(a2.reshape(T, Bt, C), 0, 1)

    a = x_ref[...]           # (Bt, T, D) residual stream, f32

    for blk in range(num_blocks):
        (w_i_ref, b_i_ref, w_h_ref, b_h_ref, w_out_ref, b_out_ref,
         w1_ref, b1_ref, w2_ref, b2_ref) = param_refs[
            blk * PARAMS_PER_BLOCK:(blk + 1) * PARAMS_PER_BLOCK]

        # ---------------- RNNLayer: a <- a + Linear(GRU(LayerNorm(a))) -------
        ln_t = to_tmajor(_layer_norm(a))                 # (T*Bt, D), time-major

        # Input-side gate pre-activations for ALL timesteps, one big matmul per
        # gate, staged in VMEM scratch so the serial loop only does row loads.
        for g in range(3):                               # gate order [r, z, n]
            gi_scr[g] = _dot_bf16(ln_t, w_i_ref[g]) + b_i_ref[g]

        # Hidden-side weights/biases loaded once, held resident (bf16) across
        # the recurrence.
        w_hr = w_h_ref[0].astype(jnp.bfloat16)
        w_hz = w_h_ref[1].astype(jnp.bfloat16)
        w_hn = w_h_ref[2].astype(jnp.bfloat16)
        b_hr, b_hz, b_hn = b_h_ref[0], b_h_ref[1], b_h_ref[2]

        h = jnp.zeros((Bt, H), jnp.float32)              # h0 = 0 (PyTorch)
        for t in range(T):                               # serial recurrence
            r0, r1 = t * Bt, (t + 1) * Bt
            hb = h.astype(jnp.bfloat16)
            gh_r = jnp.dot(hb, w_hr, preferred_element_type=jnp.float32) + b_hr
            gh_z = jnp.dot(hb, w_hz, preferred_element_type=jnp.float32) + b_hz
            gh_n = jnp.dot(hb, w_hn, preferred_element_type=jnp.float32) + b_hn
            r = jax.nn.sigmoid(gi_scr[0, r0:r1, :] + gh_r)
            z = jax.nn.sigmoid(gi_scr[1, r0:r1, :] + gh_z)
            n = jnp.tanh(gi_scr[2, r0:r1, :] + r * gh_n)
            h = (1.0 - z) * n + z * h
            hs_scr[r0:r1, :] = h                         # h history -> scratch

        proj_t = _dot_bf16(hs_scr[...], w_out_ref[...]) + b_out_ref[...]
        a = a + from_tmajor(proj_t)

        # ---------------- ResidBlock: a <- a + W2(SiLU(W1(LayerNorm(a)))) ----
        ln2 = _layer_norm(a).reshape(Bt * T, D)
        hm = _dot_bf16(ln2, w1_ref[...]) + b1_ref[...]
        hm = hm * jax.nn.sigmoid(hm)                     # SiLU (f32 VPU/EUP)
        y = _dot_bf16(hm, w2_ref[...]) + b2_ref[...]
        a = a + y.reshape(Bt, T, D)

    o_ref[...] = a


# ---------------------------------------------------------------------------
# Wrapper: single fused pallas_call, batch grid axis marked "parallel"
# ---------------------------------------------------------------------------
_PARAM_ORDER = ("w_i", "b_i", "w_h", "b_h", "w_out", "b_out",
                "w1", "b1", "w2", "b2")


def rnn_model_forward(x, params, *, batch_tiles=2):
    B, T, D = x.shape
    H = params[0]["w_i"].shape[-1]
    num_blocks = len(params)

    # Up to `batch_tiles` grid points (2 -> one per v7x TensorCore); pick the
    # largest divisor of B so each tile is equally sized.
    nbt = max(1, min(batch_tiles, B))
    while B % nbt:
        nbt -= 1
    Bt = B // nbt

    flat = []
    for blk in params:
        flat.extend(blk[k] for k in _PARAM_ORDER)

    def full_spec(shape):
        return pl.BlockSpec(shape, lambda b, _n=len(shape): (0,) * _n)

    kernel = functools.partial(
        fused_rnn_model_kernel, num_blocks=num_blocks, seq_len=T,
        b_tile=Bt, hidden_size=H, input_size=D)

    return pl.pallas_call(
        kernel,
        out_shape=jax.ShapeDtypeStruct((B, T, D), jnp.float32),
        grid=(nbt,),
        in_specs=[pl.BlockSpec((Bt, T, D), lambda b: (b, 0, 0))]
                 + [full_spec(w.shape) for w in flat],
        out_specs=pl.BlockSpec((Bt, T, D), lambda b: (b, 0, 0)),
        scratch_shapes=[pltpu.VMEM((3, T * Bt, H), jnp.float32),   # gi per gate
                        pltpu.VMEM((T * Bt, H), jnp.float32)],     # h history
        compiler_params=pltpu.CompilerParams(
            dimension_semantics=("parallel",)),
    )(x, *flat)


# ---------------------------------------------------------------------------
# Deterministic parameter construction (shapes from the module's __init__)
# ---------------------------------------------------------------------------
def init_params(key, input_size, hidden_size, num_blocks):
    D, H = input_size, hidden_size
    params = []
    for _ in range(num_blocks):
        keys = jax.random.split(key, 11)
        key = keys[0]
        s_rnn = 1.0 / jnp.sqrt(H)
        s_in = 1.0 / jnp.sqrt(D)
        u = lambda k, shape, s: jax.random.uniform(k, shape, jnp.float32, -s, s)
        params.append(dict(
            w_i=u(keys[1], (3, D, H), s_rnn),    # GRU weight_ih^T, gates [r,z,n]
            w_h=u(keys[2], (3, H, H), s_rnn),    # GRU weight_hh^T
            b_i=u(keys[3], (3, 1, H), s_rnn),
            b_h=u(keys[4], (3, 1, H), s_rnn),
            w_out=u(keys[5], (H, D), s_rnn),     # out_layer: Linear(H, D)
            b_out=u(keys[6], (1, D), s_rnn),
            w1=u(keys[7], (D, H), s_in),         # ResidBlock Linear(D, H)
            b1=u(keys[8], (1, H), s_in),
            w2=u(keys[9], (H, D), s_rnn),        # ResidBlock Linear(H, D)
            b2=u(keys[10], (1, D), s_rnn),
        ))
    return params


# ---------------------------------------------------------------------------
# Pure-JAX f32 reference (mirrors the PyTorch forward exactly) for validation
# ---------------------------------------------------------------------------
def _ref_rnn_layer(x, p):
    B, T, D = x.shape
    H = p["w_h"].shape[-1]
    ln = _layer_norm(x)
    h = jnp.zeros((B, H), jnp.float32)
    hs = []
    for t in range(T):
        xt = ln[:, t, :]
        r = jax.nn.sigmoid(xt @ p["w_i"][0] + p["b_i"][0]
                           + h @ p["w_h"][0] + p["b_h"][0])
        z = jax.nn.sigmoid(xt @ p["w_i"][1] + p["b_i"][1]
                           + h @ p["w_h"][1] + p["b_h"][1])
        n = jnp.tanh(xt @ p["w_i"][2] + p["b_i"][2]
                     + r * (h @ p["w_h"][2] + p["b_h"][2]))
        h = (1.0 - z) * n + z * h
        hs.append(h)
    hcat = jnp.stack(hs, axis=1)
    return x + hcat @ p["w_out"] + p["b_out"]


def _ref_resid_block(x, p):
    ln = _layer_norm(x)
    h = ln @ p["w1"] + p["b1"]
    h = h * jax.nn.sigmoid(h)
    return x + h @ p["w2"] + p["b2"]


def _ref_model(x, params):
    for blk in params:
        x = _ref_rnn_layer(x, blk)
        x = _ref_resid_block(x, blk)
    return x


if __name__ == "__main__":
    B, T, D, H = 2, 8, 32, 32          # batch, seq, input_size, hidden_size
    NUM_BLOCKS = 2

    root = jax.random.PRNGKey(0)
    kx, kp = jax.random.split(root)
    x = jax.random.normal(kx, (B, T, D), jnp.float32)
    params = init_params(kp, D, H, NUM_BLOCKS)

    out = jax.block_until_ready(rnn_model_forward(x, params))
    ref = jax.block_until_ready(_ref_model(x, params))

    assert out.shape == (B, T, D)
    # bf16 MXU operands in the kernel vs. a pure-f32 reference -> tolerance is
    # loosened per the perf-review note (errors of a wrong kernel are >= 0.1).
    err = float(jnp.max(jnp.abs(out - ref)))
    assert err < 5e-2, f"max abs error {err}"
    print("KERNEL_OK")
</pallas_src>

<mosaic_0001>
module attributes {stable_mosaic.version = 11 : i64} {
  func.func @fused_rnn_model_kernel(%arg0: i32, %arg1: memref<1x8x32xf32, #tpu.memory_space<vmem>>, %arg2: memref<3x32x32xf32, #tpu.memory_space<vmem>>, %arg3: memref<3x1x32xf32, #tpu.memory_space<vmem>>, %arg4: memref<3x32x32xf32, #tpu.memory_space<vmem>>, %arg5: memref<3x1x32xf32, #tpu.memory_space<vmem>>, %arg6: memref<32x32xf32, #tpu.memory_space<vmem>>, %arg7: memref<1x32xf32, #tpu.memory_space<vmem>>, %arg8: memref<32x32xf32, #tpu.memory_space<vmem>>, %arg9: memref<1x32xf32, #tpu.memory_space<vmem>>, %arg10: memref<32x32xf32, #tpu.memory_space<vmem>>, %arg11: memref<1x32xf32, #tpu.memory_space<vmem>>, %arg12: memref<3x32x32xf32, #tpu.memory_space<vmem>>, %arg13: memref<3x1x32xf32, #tpu.memory_space<vmem>>, %arg14: memref<3x32x32xf32, #tpu.memory_space<vmem>>, %arg15: memref<3x1x32xf32, #tpu.memory_space<vmem>>, %arg16: memref<32x32xf32, #tpu.memory_space<vmem>>, %arg17: memref<1x32xf32, #tpu.memory_space<vmem>>, %arg18: memref<32x32xf32, #tpu.memory_space<vmem>>, %arg19: memref<1x32xf32, #tpu.memory_space<vmem>>, %arg20: memref<32x32xf32, #tpu.memory_space<vmem>>, %arg21: memref<1x32xf32, #tpu.memory_space<vmem>>, %arg22: memref<1x8x32xf32, #tpu.memory_space<vmem>>, %arg23: memref<3x8x32xf32, #tpu.memory_space<vmem>>, %arg24: memref<8x32xf32, #tpu.memory_space<vmem>>) attributes {dimension_semantics = [#tpu.dimension_semantics<parallel>], iteration_bounds = array<i64: 2>, scalar_prefetch = 0 : i64, scratch_operands = 2 : i64, tpu.core_type = #tpu.core_type<tc>, window_params = [{transform_indices = @transform_0, window_bounds = array<i64: 1, 8, 32>}, {pipeline_mode = #tpu.pipeline_mode<synchronous>, transform_indices = @transform_1, window_bounds = array<i64: 3, 32, 32>}, {pipeline_mode = #tpu.pipeline_mode<synchronous>, transform_indices = @transform_2, window_bounds = array<i64: 3, 1, 32>}, {pipeline_mode = #tpu.pipeline_mode<synchronous>, transform_indices = @transform_3, window_bounds = array<i64: 3, 32, 32>}, {pipeline_mode = #tpu.pipeline_mode<synchronous>, transform_indices = @transform_4, window_bounds = array<i64: 3, 1, 32>}, {pipeline_mode = #tpu.pipeline_mode<synchronous>, transform_indices = @transform_5, window_bounds = array<i64: 32, 32>}, {pipeline_mode = #tpu.pipeline_mode<synchronous>, transform_indices = @transform_6, window_bounds = array<i64: 1, 32>}, {pipeline_mode = #tpu.pipeline_mode<synchronous>, transform_indices = @transform_7, window_bounds = array<i64: 32, 32>}, {pipeline_mode = #tpu.pipeline_mode<synchronous>, transform_indices = @transform_8, window_bounds = array<i64: 1, 32>}, {pipeline_mode = #tpu.pipeline_mode<synchronous>, transform_indices = @transform_9, window_bounds = array<i64: 32, 32>}, {pipeline_mode = #tpu.pipeline_mode<synchronous>, transform_indices = @transform_10, window_bounds = array<i64: 1, 32>}, {pipeline_mode = #tpu.pipeline_mode<synchronous>, transform_indices = @transform_11, window_bounds = array<i64: 3, 32, 32>}, {pipeline_mode = #tpu.pipeline_mode<synchronous>, transform_indices = @transform_12, window_bounds = array<i64: 3, 1, 32>}, {pipeline_mode = #tpu.pipeline_mode<synchronous>, transform_indices = @transform_13, window_bounds = array<i64: 3, 32, 32>}, {pipeline_mode = #tpu.pipeline_mode<synchronous>, transform_indices = @transform_14, window_bounds = array<i64: 3, 1, 32>}, {pipeline_mode = #tpu.pipeline_mode<synchronous>, transform_indices = @transform_15, window_bounds = array<i64: 32, 32>}, {pipeline_mode = #tpu.pipeline_mode<synchronous>, transform_indices = @transform_16, window_bounds = array<i64: 1, 32>}, {pipeline_mode = #tpu.pipeline_mode<synchronous>, transform_indices = @transform_17, window_bounds = array<i64: 32, 32>}, {pipeline_mode = #tpu.pipeline_mode<synchronous>, transform_indices = @transform_18, window_bounds = array<i64: 1, 32>}, {pipeline_mode = #tpu.pipeline_mode<synchronous>, transform_indices = @transform_19, window_bounds = array<i64: 32, 32>}, {pipeline_mode = #tpu.pipeline_mode<synchronous>, transform_indices = @transform_20, window_bounds = array<i64: 1, 32>}, {transform_indices = @transform_21, window_bounds = array<i64: 1, 8, 32>}]} {
    %c0 = arith.constant 0 : index
    %c0_0 = arith.constant 0 : index
    %c0_1 = arith.constant 0 : index
    %0 = vector.load %arg1[%c0, %c0_0, %c0_1] : memref<1x8x32xf32, #tpu.memory_space<vmem>>, vector<1x8x32xf32>
    %cst = arith.constant dense<0.000000e+00> : vector<1x8xf32>
    %1 = vector.multi_reduction <add>, %0, %cst [2] : vector<1x8x32xf32> to vector<1x8xf32>
    %2 = vector.shape_cast %1 : vector<1x8xf32> to vector<1x8x1xf32>
    %cst_2 = arith.constant 3.200000e+01 : f32
    %3 = vector.broadcast %cst_2 : f32 to vector<1x8x1xf32>
    %4 = arith.divf %2, %3 : vector<1x8x1xf32>
    %5 = vector.broadcast %4 : vector<1x8x1xf32> to vector<1x8x32xf32>
    %6 = arith.subf %0, %5 : vector<1x8x32xf32>
    %7 = arith.mulf %6, %6 : vector<1x8x32xf32>
    %cst_3 = arith.constant dense<0.000000e+00> : vector<1x8xf32>
    %8 = vector.multi_reduction <add>, %7, %cst_3 [2] : vector<1x8x32xf32> to vector<1x8xf32>
    %9 = vector.shape_cast %8 : vector<1x8xf32> to vector<1x8x1xf32>
    %cst_4 = arith.constant 3.200000e+01 : f32
    %10 = vector.broadcast %cst_4 : f32 to vector<1x8x1xf32>
    %11 = arith.divf %9, %10 : vector<1x8x1xf32>
    %12 = vector.broadcast %4 : vector<1x8x1xf32> to vector<1x8x32xf32>
    %13 = arith.subf %0, %12 : vector<1x8x32xf32>
    %cst_5 = arith.constant 9.99999974E-6 : f32
    %14 = vector.broadcast %cst_5 : f32 to vector<1x8x1xf32>
    %15 = arith.addf %11, %14 : vector<1x8x1xf32>
    %16 = math.rsqrt %15 : vector<1x8x1xf32>
    %17 = vector.broadcast %16 : vector<1x8x1xf32> to vector<1x8x32xf32>
    %18 = arith.mulf %13, %17 : vector<1x8x32xf32>
    %19 = vector.shape_cast %18 : vector<1x8x32xf32> to vector<8x32xf32>
    %c0_6 = arith.constant 0 : index
    %c0_7 = arith.constant 0 : index
    %c0_8 = arith.constant 0 : index
    %20 = vector.load %arg2[%c0_6, %c0_7, %c0_8] : memref<3x32x32xf32, #tpu.memory_space<vmem>>, vector<1x32x32xf32>
    %21 = vector.shape_cast %20 : vector<1x32x32xf32> to vector<32x32xf32>
    %22 = arith.truncf %19 : vector<8x32xf32> to vector<8x32xbf16>
    %23 = arith.truncf %21 : vector<32x32xf32> to vector<32x32xbf16>
    %cst_9 = arith.constant dense<0.000000e+00> : vector<8x32xf32>
    %24 = tpu.matmul %22, %23, %cst_9 {dimension_numbers = #tpu.dot_dimension_numbers<[1], [0], [0], [1], [0, 0, 1, 1], [], []>} : vector<8x32xbf16>, vector<32x32xbf16>, vector<8x32xf32> -> vector<8x32xf32>
    %c0_10 = arith.constant 0 : index
    %c0_11 = arith.constant 0 : index
    %c0_12 = arith.constant 0 : index
    %25 = vector.load %arg3[%c0_10, %c0_11, %c0_12] : memref<3x1x32xf32, #tpu.memory_space<vmem>>, vector<1x1x32xf32>
    %26 = vector.shape_cast %25 : vector<1x1x32xf32> to vector<1x32xf32>
    %27 = vector.broadcast %26 : vector<1x32xf32> to vector<8x32xf32>
    %28 = arith.addf %24, %27 : vector<8x32xf32>
    %c0_13 = arith.constant 0 : index
    %c0_14 = arith.constant 0 : index
    %c0_15 = arith.constant 0 : index
    %29 = vector.load %arg23[%c0_13, %c0_14, %c0_15] : memref<3x8x32xf32, #tpu.memory_space<vmem>>, vector<1x8x32xf32>
    %30 = vector.shape_cast %29 : vector<1x8x32xf32> to vector<8x32xf32>
    %31 = vector.shape_cast %28 : vector<8x32xf32> to vector<1x8x32xf32>
    tpu.vector_store %arg23[%c0_13, %c0_14, %c0_15], %31 {strides = array<i32>} : memref<3x8x32xf32, #tpu.memory_space<vmem>>, vector<1x8x32xf32>,
    %c1 = arith.constant 1 : index
    %c0_16 = arith.constant 0 : index
    %c0_17 = arith.constant 0 : index
    %32 = vector.load %arg2[%c1, %c0_16, %c0_17] : memref<3x32x32xf32, #tpu.memory_space<vmem>>, vector<1x32x32xf32>
    %33 = vector.shape_cast %32 : vector<1x32x32xf32> to vector<32x32xf32>
    %34 = arith.truncf %19 : vector<8x32xf32> to vector<8x32xbf16>
    %35 = arith.truncf %33 : vector<32x32xf32> to vector<32x32xbf16>
    %cst_18 = arith.constant dense<0.000000e+00> : vector<8x32xf32>
    %36 = tpu.matmul %34, %35, %cst_18 {dimension_numbers = #tpu.dot_dimension_numbers<[1], [0], [0], [1], [0, 0, 1, 1], [], []>} : vector<8x32xbf16>, vector<32x32xbf16>, vector<8x32xf32> -> vector<8x32xf32>
    %c1_19 = arith.constant 1 : index
    %c0_20 = arith.constant 0 : index
    %c0_21 = arith.constant 0 : index
    %37 = vector.load %arg3[%c1_19, %c0_20, %c0_21] : memref<3x1x32xf32, #tpu.memory_space<vmem>>, vector<1x1x32xf32>
    %38 = vector.shape_cast %37 : vector<1x1x32xf32> to vector<1x32xf32>
    %39 = vector.broadcast %38 : vector<1x32xf32> to vector<8x32xf32>
    %40 = arith.addf %36, %39 : vector<8x32xf32>
    %c1_22 = arith.constant 1 : index
    %c0_23 = arith.constant 0 : index
    %c0_24 = arith.constant 0 : index
    %41 = vector.load %arg23[%c1_22, %c0_23, %c0_24] : memref<3x8x32xf32, #tpu.memory_space<vmem>>, vector<1x8x32xf32>
    %42 = vector.shape_cast %41 : vector<1x8x32xf32> to vector<8x32xf32>
    %43 = vector.shape_cast %40 : vector<8x32xf32> to vector<1x8x32xf32>
    tpu.vector_store %arg23[%c1_22, %c0_23, %c0_24], %43 {strides = array<i32>} : memref<3x8x32xf32, #tpu.memory_space<vmem>>, vector<1x8x32xf32>,
    %c2 = arith.constant 2 : index
    %c0_25 = arith.constant 0 : index
    %c0_26 = arith.constant 0 : index
    %44 = vector.load %arg2[%c2, %c0_25, %c0_26] : memref<3x32x32xf32, #tpu.memory_space<vmem>>, vector<1x32x32xf32>
    %45 = vector.shape_cast %44 : vector<1x32x32xf32> to vector<32x32xf32>
    %46 = arith.truncf %19 : vector<8x32xf32> to vector<8x32xbf16>
    %47 = arith.truncf %45 : vector<32x32xf32> to vector<32x32xbf16>
    %cst_27 = arith.constant dense<0.000000e+00> : vector<8x32xf32>
    %48 = tpu.matmul %46, %47, %cst_27 {dimension_numbers = #tpu.dot_dimension_numbers<[1], [0], [0], [1], [0, 0, 1, 1], [], []>} : vector<8x32xbf16>, vector<32x32xbf16>, vector<8x32xf32> -> vector<8x32xf32>
    %c2_28 = arith.constant 2 : index
    %c0_29 = arith.constant 0 : index
    %c0_30 = arith.constant 0 : index
    %49 = vector.load %arg3[%c2_28, %c0_29, %c0_30] : memref<3x1x32xf32, #tpu.memory_space<vmem>>, vector<1x1x32xf32>
    %50 = vector.shape_cast %49 : vector<1x1x32xf32> to vector<1x32xf32>
    %51 = vector.broadcast %50 : vector<1x32xf32> to vector<8x32xf32>
    %52 = arith.addf %48, %51 : vector<8x32xf32>
    %c2_31 = arith.constant 2 : index
    %c0_32 = arith.constant 0 : index
    %c0_33 = arith.constant 0 : index
    %53 = vector.load %arg23[%c2_31, %c0_32, %c0_33] : memref<3x8x32xf32, #tpu.memory_space<vmem>>, vector<1x8x32xf32>
    %54 = vector.shape_cast %53 : vector<1x8x32xf32> to vector<8x32xf32>
    %55 = vector.shape_cast %52 : vector<8x32xf32> to vector<1x8x32xf32>
    tpu.vector_store %arg23[%c2_31, %c0_32, %c0_33], %55 {strides = array<i32>} : memref<3x8x32xf32, #tpu.memory_space<vmem>>, vector<1x8x32xf32>,
    %c0_34 = arith.constant 0 : index
    %c0_35 = arith.constant 0 : index
    %c0_36 = arith.constant 0 : index
    %56 = vector.load %arg4[%c0_34, %c0_35, %c0_36] : memref<3x32x32xf32, #tpu.memory_space<vmem>>, vector<1x32x32xf32>
    %57 = vector.shape_cast %56 : vector<1x32x32xf32> to vector<32x32xf32>
    %58 = arith.truncf %57 : vector<32x32xf32> to vector<32x32xbf16>
    %c1_37 = arith.constant 1 : index
    %c0_38 = arith.constant 0 : index
    %c0_39 = arith.constant 0 : index
    %59 = vector.load %arg4[%c1_37, %c0_38, %c0_39] : memref<3x32x32xf32, #tpu.memory_space<vmem>>, vector<1x32x32xf32>
    %60 = vector.shape_cast %59 : vector<1x32x32xf32> to vector<32x32xf32>
    %61 = arith.truncf %60 : vector<32x32xf32> to vector<32x32xbf16>
    %c2_40 = arith.constant 2 : index
    %c0_41 = arith.constant 0 : index
    %c0_42 = arith.constant 0 : index
    %62 = vector.load %arg4[%c2_40, %c0_41, %c0_42] : memref<3x32x32xf32, #tpu.memory_space<vmem>>, vector<1x32x32xf32>
    %63 = vector.shape_cast %62 : vector<1x32x32xf32> to vector<32x32xf32>
    %64 = arith.truncf %63 : vector<32x32xf32> to vector<32x32xbf16>
    %c0_43 = arith.constant 0 : index
    %c0_44 = arith.constant 0 : index
    %c0_45 = arith.constant 0 : index
    %65 = vector.load %arg5[%c0_43, %c0_44, %c0_45] : memref<3x1x32xf32, #tpu.memory_space<vmem>>, vector<1x1x32xf32>
    %66 = vector.shape_cast %65 : vector<1x1x32xf32> to vector<1x32xf32>
    %c1_46 = arith.constant 1 : index
    %c0_47 = arith.constant 0 : index
    %c0_48 = arith.constant 0 : index
    %67 = vector.load %arg5[%c1_46, %c0_47, %c0_48] : memref<3x1x32xf32, #tpu.memory_space<vmem>>, vector<1x1x32xf32>
    %68 = vector.shape_cast %67 : vector<1x1x32xf32> to vector<1x32xf32>
    %c2_49 = arith.constant 2 : index
    %c0_50 = arith.constant 0 : index
    %c0_51 = arith.constant 0 : index
    %69 = vector.load %arg5[%c2_49, %c0_50, %c0_51] : memref<3x1x32xf32, #tpu.memory_space<vmem>>, vector<1x1x32xf32>
    %70 = vector.shape_cast %69 : vector<1x1x32xf32> to vector<1x32xf32>
    %cst_52 = arith.constant 0.000000e+00 : f32
    %71 = vector.broadcast %cst_52 : f32 to vector<1x32xf32>
    %72 = arith.truncf %71 : vector<1x32xf32> to vector<1x32xbf16>
    %cst_53 = arith.constant dense<0.000000e+00> : vector<1x32xf32>
    %73 = tpu.matmul %72, %58, %cst_53 {dimension_numbers = #tpu.dot_dimension_numbers<[1], [0], [0], [1], [0, 0, 1, 1], [], []>} : vector<1x32xbf16>, vector<32x32xbf16>, vector<1x32xf32> -> vector<1x32xf32>
    %74 = arith.addf %73, %66 : vector<1x32xf32>
    %cst_54 = arith.constant dense<0.000000e+00> : vector<1x32xf32>
    %75 = tpu.matmul %72, %61, %cst_54 {dimension_numbers = #tpu.dot_dimension_numbers<[1], [0], [0], [1], [0, 0, 1, 1], [], []>} : vector<1x32xbf16>, vector<32x32xbf16>, vector<1x32xf32> -> vector<1x32xf32>
    %76 = arith.addf %75, %68 : vector<1x32xf32>
    %cst_55 = arith.constant dense<0.000000e+00> : vector<1x32xf32>
    %77 = tpu.matmul %72, %64, %cst_55 {dimension_numbers = #tpu.dot_dimension_numbers<[1], [0], [0], [1], [0, 0, 1, 1], [], []>} : vector<1x32xbf16>, vector<32x32xbf16>, vector<1x32xf32> -> vector<1x32xf32>
    %78 = arith.addf %77, %70 : vector<1x32xf32>
    %c0_56 = arith.constant 0 : index
    %c0_57 = arith.constant 0 : index
    %c0_58 = arith.constant 0 : index
    %79 = vector.load %arg23[%c0_56, %c0_57, %c0_58] : memref<3x8x32xf32, #tpu.memory_space<vmem>>, vector<1x1x32xf32>
    %80 = vector.shape_cast %79 : vector<1x1x32xf32> to vector<1x32xf32>
    %81 = arith.addf %80, %74 : vector<1x32xf32>
    %82 = arith.negf %81 : vector<1x32xf32>
    %83 = math.exp %82 : vector<1x32xf32>
    %cst_59 = arith.constant 1.000000e+00 : f32
    %84 = vector.broadcast %cst_59 : f32 to vector<1x32xf32>
    %85 = arith.addf %84, %83 : vector<1x32xf32>
    %86 = arith.divf %84, %85 : vector<1x32xf32>
    %c1_60 = arith.constant 1 : index
    %c0_61 = arith.constant 0 : index
    %c0_62 = arith.constant 0 : index
    %87 = vector.load %arg23[%c1_60, %c0_61, %c0_62] : memref<3x8x32xf32, #tpu.memory_space<vmem>>, vector<1x1x32xf32>
    %88 = vector.shape_cast %87 : vector<1x1x32xf32> to vector<1x32xf32>
    %89 = arith.addf %88, %76 : vector<1x32xf32>
    %90 = arith.negf %89 : vector<1x32xf32>
    %91 = math.exp %90 : vector<1x32xf32>
    %cst_63 = arith.constant 1.000000e+00 : f32
    %92 = vector.broadcast %cst_63 : f32 to vector<1x32xf32>
    %93 = arith.addf %92, %91 : vector<1x32xf32>
    %94 = arith.divf %92, %93 : vector<1x32xf32>
    %c2_64 = arith.constant 2 : index
    %c0_65 = arith.constant 0 : index
    %c0_66 = arith.constant 0 : index
    %95 = vector.load %arg23[%c2_64, %c0_65, %c0_66] : memref<3x8x32xf32, #tpu.memory_space<vmem>>, vector<1x1x32xf32>
    %96 = vector.shape_cast %95 : vector<1x1x32xf32> to vector<1x32xf32>
    %97 = arith.mulf %86, %78 : vector<1x32xf32>
    %98 = arith.addf %96, %97 : vector<1x32xf32>
    %99 = math.tanh %98 : vector<1x32xf32>
    %cst_67 = arith.constant 1.000000e+00 : f32
    %100 = vector.broadcast %cst_67 : f32 to vector<1x32xf32>
    %101 = arith.subf %100, %94 : vector<1x32xf32>
    %102 = arith.mulf %101, %99 : vector<1x32xf32>
    %103 = arith.mulf %94, %71 : vector<1x32xf32>
    %104 = arith.addf %102, %103 : vector<1x32xf32>
    %c0_68 = arith.constant 0 : index
    %c0_69 = arith.constant 0 : index
    %105 = vector.load %arg24[%c0_68, %c0_69] : memref<8x32xf32, #tpu.memory_space<vmem>>, vector<1x32xf32>
    tpu.vector_store %arg24[%c0_68, %c0_69], %104 {strides = array<i32>} : memref<8x32xf32, #tpu.memory_space<vmem>>, vector<1x32xf32>,
    %106 = arith.truncf %104 : vector<1x32xf32> to vector<1x32xbf16>
    %cst_70 = arith.constant dense<0.000000e+00> : vector<1x32xf32>
    %107 = tpu.matmul %106, %58, %cst_70 {dimension_numbers = #tpu.dot_dimension_numbers<[1], [0], [0], [1], [0, 0, 1, 1], [], []>} : vector<1x32xbf16>, vector<32x32xbf16>, vector<1x32xf32> -> vector<1x32xf32>
    %108 = arith.addf %107, %66 : vector<1x32xf32>
    %cst_71 = arith.constant dense<0.000000e+00> : vector<1x32xf32>
    %109 = tpu.matmul %106, %61, %cst_71 {dimension_numbers = #tpu.dot_dimension_numbers<[1], [0], [0], [1], [0, 0, 1, 1], [], []>} : vector<1x32xbf16>, vector<32x32xbf16>, vector<1x32xf32> -> vector<1x32xf32>
    %110 = arith.addf %109, %68 : vector<1x32xf32>
    %cst_72 = arith.constant dense<0.000000e+00> : vector<1x32xf32>
    %111 = tpu.matmul %106, %64, %cst_72 {dimension_numbers = #tpu.dot_dimension_numbers<[1], [0], [0], [1], [0, 0, 1, 1], [], []>} : vector<1x32xbf16>, vector<32x32xbf16>, vector<1x32xf32> -> vector<1x32xf32>
    %112 = arith.addf %111, %70 : vector<1x32xf32>
    %c0_73 = arith.constant 0 : index
    %c1_74 = arith.constant 1 : index
    %c0_75 = arith.constant 0 : index
    %113 = vector.load %arg23[%c0_73, %c1_74, %c0_75] : memref<3x8x32xf32, #tpu.memory_space<vmem>>, vector<1x1x32xf32>
    %114 = vector.shape_cast %113 : vector<1x1x32xf32> to vector<1x32xf32>
    %115 = arith.addf %114, %108 : vector<1x32xf32>
    %116 = arith.negf %115 : vector<1x32xf32>
    %117 = math.exp %116 : vector<1x32xf32>
    %cst_76 = arith.constant 1.000000e+00 : f32
    %118 = vector.broadcast %cst_76 : f32 to vector<1x32xf32>
    %119 = arith.addf %118, %117 : vector<1x32xf32>
    %120 = arith.divf %118, %119 : vector<1x32xf32>
    %c1_77 = arith.constant 1 : index
    %c1_78 = arith.constant 1 : index
    %c0_79 = arith.constant 0 : index
    %121 = vector.load %arg23[%c1_77, %c1_78, %c0_79] : memref<3x8x32xf32, #tpu.memory_space<vmem>>, vector<1x1x32xf32>
    %122 = vector.shape_cast %121 : vector<1x1x32xf32> to vector<1x32xf32>
    %123 = arith.addf %122, %110 : vector<1x32xf32>
    %124 = arith.negf %123 : vector<1x32xf32>
    %125 = math.exp %124 : vector<1x32xf32>
    %cst_80 = arith.constant 1.000000e+00 : f32
    %126 = vector.broadcast %cst_80 : f32 to vector<1x32xf32>
    %127 = arith.addf %126, %125 : vector<1x32xf32>
    %128 = arith.divf %126, %127 : vector<1x32xf32>
    %c2_81 = arith.constant 2 : index
    %c1_82 = arith.constant 1 : index
    %c0_83 = arith.constant 0 : index
    %129 = vector.load %arg23[%c2_81, %c1_82, %c0_83] : memref<3x8x32xf32, #tpu.memory_space<vmem>>, vector<1x1x32xf32>
    %130 = vector.shape_cast %129 : vector<1x1x32xf32> to vector<1x32xf32>
    %131 = arith.mulf %120, %112 : vector<1x32xf32>
    %132 = arith.addf %130, %131 : vector<1x32xf32>
    %133 = math.tanh %132 : vector<1x32xf32>
    %cst_84 = arith.constant 1.000000e+00 : f32
    %134 = vector.broadcast %cst_84 : f32 to vector<1x32xf32>
    %135 = arith.subf %134, %128 : vector<1x32xf32>
    %136 = arith.mulf %135, %133 : vector<1x32xf32>
    %137 = arith.mulf %128, %104 : vector<1x32xf32>
    %138 = arith.addf %136, %137 : vector<1x32xf32>
    %c1_85 = arith.constant 1 : index
    %c0_86 = arith.constant 0 : index
    %139 = vector.load %arg24[%c1_85, %c0_86] : memref<8x32xf32, #tpu.memory_space<vmem>>, vector<1x32xf32>
    tpu.vector_store %arg24[%c1_85, %c0_86], %138 {strides = array<i32>} : memref<8x32xf32, #tpu.memory_space<vmem>>, vector<1x32xf32>,
    %140 = arith.truncf %138 : vector<1x32xf32> to vector<1x32xbf16>
    %cst_87 = arith.constant dense<0.000000e+00> : vector<1x32xf32>
    %141 = tpu.matmul %140, %58, %cst_87 {dimension_numbers = #tpu.dot_dimension_numbers<[1], [0], [0], [1], [0, 0, 1, 1], [], []>} : vector<1x32xbf16>, vector<32x32xbf16>, vector<1x32xf32> -> vector<1x32xf32>
    %142 = arith.addf %141, %66 : vector<1x32xf32>
    %cst_88 = arith.constant dense<0.000000e+00> : vector<1x32xf32>
    %143 = tpu.matmul %140, %61, %cst_88 {dimension_numbers = #tpu.dot_dimension_numbers<[1], [0], [0], [1], [0, 0, 1, 1], [], []>} : vector<1x32xbf16>, vector<32x32xbf16>, vector<1x32xf32> -> vector<1x32xf32>
    %144 = arith.addf %143, %68 : vector<1x32xf32>
    %cst_89 = arith.constant dense<0.000000e+00> : vector<1x32xf32>
    %145 = tpu.matmul %140, %64, %cst_89 {dimension_numbers = #tpu.dot_dimension_numbers<[1], [0], [0], [1], [0, 0, 1, 1], [], []>} : vector<1x32xbf16>, vector<32x32xbf16>, vector<1x32xf32> -> vector<1x32xf32>
    %146 = arith.addf %145, %70 : vector<1x32xf32>
    %c0_90 = arith.constant 0 : index
    %c2_91 = arith.constant 2 : index
    %c0_92 = arith.constant 0 : index
    %147 = vector.load %arg23[%c0_90, %c2_91, %c0_92] : memref<3x8x32xf32, #tpu.memory_space<vmem>>, vector<1x1x32xf32>
    %148 = vector.shape_cast %147 : vector<1x1x32xf32> to vector<1x32xf32>
    %149 = arith.addf %148, %142 : vector<1x32xf32>
    %150 = arith.negf %149 : vector<1x32xf32>
    %151 = math.exp %150 : vector<1x32xf32>
    %cst_93 = arith.constant 1.000000e+00 : f32
    %152 = vector.broadcast %cst_93 : f32 to vector<1x32xf32>
    %153 = arith.addf %152, %151 : vector<1x32xf32>
    %154 = arith.divf %152, %153 : vector<1x32xf32>
    %c1_94 = arith.constant 1 : index
    %c2_95 = arith.constant 2 : index
    %c0_96 = arith.constant 0 : index
    %155 = vector.load %arg23[%c1_94, %c2_95, %c0_96] : memref<3x8x32xf32, #tpu.memory_space<vmem>>, vector<1x1x32xf32>
    %156 = vector.shape_cast %155 : vector<1x1x32xf32> to vector<1x32xf32>
    %157 = arith.addf %156, %144 : vector<1x32xf32>
    %158 = arith.negf %157 : vector<1x32xf32>
    %159 = math.exp %158 : vector<1x32xf32>
    %cst_97 = arith.constant 1.000000e+00 : f32
    %160 = vector.broadcast %cst_97 : f32 to vector<1x32xf32>
    %161 = arith.addf %160, %159 : vector<1x32xf32>
    %162 = arith.divf %160, %161 : vector<1x32xf32>
    %c2_98 = arith.constant 2 : index
    %c2_99 = arith.constant 2 : index
    %c0_100 = arith.constant 0 : index
    %163 = vector.load %arg23[%c2_98, %c2_99, %c0_100] : memref<3x8x32xf32, #tpu.memory_space<vmem>>, vector<1x1x32xf32>
    %164 = vector.shape_cast %163 : vector<1x1x32xf32> to vector<1x32xf32>
    %165 = arith.mulf %154, %146 : vector<1x32xf32>
    %166 = arith.addf %164, %165 : vector<1x32xf32>
    %167 = math.tanh %166 : vector<1x32xf32>
    %cst_101 = arith.constant 1.000000e+00 : f32
    %168 = vector.broadcast %cst_101 : f32 to vector<1x32xf32>
    %169 = arith.subf %168, %162 : vector<1x32xf32>
    %170 = arith.mulf %169, %167 : vector<1x32xf32>
    %171 = arith.mulf %162, %138 : vector<1x32xf32>
    %172 = arith.addf %170, %171 : vector<1x32xf32>
    %c2_102 = arith.constant 2 : index
    %c0_103 = arith.constant 0 : index
    %173 = vector.load %arg24[%c2_102, %c0_103] : memref<8x32xf32, #tpu.memory_space<vmem>>, vector<1x32xf32>
    tpu.vector_store %arg24[%c2_102, %c0_103], %172 {strides = array<i32>} : memref<8x32xf32, #tpu.memory_space<vmem>>, vector<1x32xf32>,
    %174 = arith.truncf %172 : vector<1x32xf32> to vector<1x32xbf16>
    %cst_104 = arith.constant dense<0.000000e+00> : vector<1x32xf32>
    %175 = tpu.matmul %174, %58, %cst_104 {dimension_numbers = #tpu.dot_dimension_numbers<[1], [0], [0], [1], [0, 0, 1, 1], [], []>} : vector<1x32xbf16>, vector<32x32xbf16>, vector<1x32xf32> -> vector<1x32xf32>
    %176 = arith.addf %175, %66 : vector<1x32xf32>
    %cst_105 = arith.constant dense<0.000000e+00> : vector<1x32xf32>
    %177 = tpu.matmul %174, %61, %cst_105 {dimension_numbers = #tpu.dot_dimension_numbers<[1], [0], [0], [1], [0, 0, 1, 1], [], []>} : vector<1x32xbf16>, vector<32x32xbf16>, vector<1x32xf32> -> vector<1x32xf32>
    %178 = arith.addf %177, %68 : vector<1x32xf32>
    %cst_106 = arith.constant dense<0.000000e+00> : vector<1x32xf32>
    %179 = tpu.matmul %174, %64, %cst_106 {dimension_numbers = #tpu.dot_dimension_numbers<[1], [0], [0], [1], [0, 0, 1, 1], [], []>} : vector<1x32xbf16>, vector<32x32xbf16>, vector<1x32xf32> -> vector<1x32xf32>
    %180 = arith.addf %179, %70 : vector<1x32xf32>
    %c0_107 = arith.constant 0 : index
    %c3 = arith.constant 3 : index
    %c0_108 = arith.constant 0 : index
    %181 = vector.load %arg23[%c0_107, %c3, %c0_108] : memref<3x8x32xf32, #tpu.memory_space<vmem>>, vector<1x1x32xf32>
    %182 = vector.shape_cast %181 : vector<1x1x32xf32> to vector<1x32xf32>
    %183 = arith.addf %182, %176 : vector<1x32xf32>
    %184 = arith.negf %183 : vector<1x32xf32>
    %185 = math.exp %184 : vector<1x32xf32>
    %cst_109 = arith.constant 1.000000e+00 : f32
    %186 = vector.broadcast %cst_109 : f32 to vector<1x32xf32>
    %187 = arith.addf %186, %185 : vector<1x32xf32>
    %188 = arith.divf %186, %187 : vector<1x32xf32>
    %c1_110 = arith.constant 1 : index
    %c3_111 = arith.constant 3 : index
    %c0_112 = arith.constant 0 : index
    %189 = vector.load %arg23[%c1_110, %c3_111, %c0_112] : memref<3x8x32xf32, #tpu.memory_space<vmem>>, vector<1x1x32xf32>
    %190 = vector.shape_cast %189 : vector<1x1x32xf32> to vector<1x32xf32>
    %191 = arith.addf %190, %178 : vector<1x32xf32>
    %192 = arith.negf %191 : vector<1x32xf32>
    %193 = math.exp %192 : vector<1x32xf32>
    %cst_113 = arith.constant 1.000000e+00 : f32
    %194 = vector.broadcast %cst_113 : f32 to vector<1x32xf32>
    %195 = arith.addf %194, %193 : vector<1x32xf32>
    %196 = arith.divf %194, %195 : vector<1x32xf32>
    %c2_114 = arith.constant 2 : index
    %c3_115 = arith.constant 3 : index
    %c0_116 = arith.constant 0 : index
    %197 = vector.load %arg23[%c2_114, %c3_115, %c0_116] : memref<3x8x32xf32, #tpu.memory_space<vmem>>, vector<1x1x32xf32>
    %198 = vector.shape_cast %197 : vector<1x1x32xf32> to vector<1x32xf32>
    %199 = arith.mulf %188, %180 : vector<1x32xf32>
    %200 = arith.addf %198, %199 : vector<1x32xf32>
    %201 = math.tanh %200 : vector<1x32xf32>
    %cst_117 = arith.constant 1.000000e+00 : f32
    %202 = vector.broadcast %cst_117 : f32 to vector<1x32xf32>
    %203 = arith.subf %202, %196 : vector<1x32xf32>
    %204 = arith.mulf %203, %201 : vector<1x32xf32>
    %205 = arith.mulf %196, %172 : vector<1x32xf32>
    %206 = arith.addf %204, %205 : vector<1x32xf32>
    %c3_118 = arith.constant 3 : index
    %c0_119 = arith.constant 0 : index
    %207 = vector.load %arg24[%c3_118, %c0_119] : memref<8x32xf32, #tpu.memory_space<vmem>>, vector<1x32xf32>
    tpu.vector_store %arg24[%c3_118, %c0_119], %206 {strides = array<i32>} : memref<8x32xf32, #tpu.memory_space<vmem>>, vector<1x32xf32>,
    %208 = arith.truncf %206 : vector<1x32xf32> to vector<1x32xbf16>
    %cst_120 = arith.constant dense<0.000000e+00> : vector<1x32xf32>
    %209 = tpu.matmul %208, %58, %cst_120 {dimension_numbers = #tpu.dot_dimension_numbers<[1], [0], [0], [1], [0, 0, 1, 1], [], []>} : vector<1x32xbf16>, vector<32x32xbf16>, vector<1x32xf32> -> vector<1x32xf32>
    %210 = arith.addf %209, %66 : vector<1x32xf32>
    %cst_121 = arith.constant dense<0.000000e+00> : vector<1x32xf32>
    %211 = tpu.matmul %208, %61, %cst_121 {dimension_numbers = #tpu.dot_dimension_numbers<[1], [0], [0], [1], [0, 0, 1, 1], [], []>} : vector<1x32xbf16>, vector<32x32xbf16>, vector<1x32xf32> -> vector<1x32xf32>
    %212 = arith.addf %211, %68 : vector<1x32xf32>
    %cst_122 = arith.constant dense<0.000000e+00> : vector<1x32xf32>
    %213 = tpu.matmul %208, %64, %cst_122 {dimension_numbers = #tpu.dot_dimension_numbers<[1], [0], [0], [1], [0, 0, 1, 1], [], []>} : vector<1x32xbf16>, vector<32x32xbf16>, vector<1x32xf32> -> vector<1x32xf32>
    %214 = arith.addf %213, %70 : vector<1x32xf32>
    %c0_123 = arith.constant 0 : index
    %c4 = arith.constant 4 : index
    %c0_124 = arith.constant 0 : index
    %215 = vector.load %arg23[%c0_123, %c4, %c0_124] : memref<3x8x32xf32, #tpu.memory_space<vmem>>, vector<1x1x32xf32>
    %216 = vector.shape_cast %215 : vector<1x1x32xf32> to vector<1x32xf32>
    %217 = arith.addf %216, %210 : vector<1x32xf32>
    %218 = arith.negf %217 : vector<1x32xf32>
    %219 = math.exp %218 : vector<1x32xf32>
    %cst_125 = arith.constant 1.000000e+00 : f32
    %220 = vector.broadcast %cst_125 : f32 to vector<1x32xf32>
    %221 = arith.addf %220, %219 : vector<1x32xf32>
    %222 = arith.divf %220, %221 : vector<1x32xf32>
    %c1_126 = arith.constant 1 : index
    %c4_127 = arith.constant 4 : index
    %c0_128 = arith.constant 0 : index
    %223 = vector.load %arg23[%c1_126, %c4_127, %c0_128] : memref<3x8x32xf32, #tpu.memory_space<vmem>>, vector<1x1x32xf32>
    %224 = vector.shape_cast %223 : vector<1x1x32xf32> to vector<1x32xf32>
    %225 = arith.addf %224, %212 : vector<1x32xf32>
    %226 = arith.negf %225 : vector<1x32xf32>
    %227 = math.exp %226 : vector<1x32xf32>
    %cst_129 = arith.constant 1.000000e+00 : f32
    %228 = vector.broadcast %cst_129 : f32 to vector<1x32xf32>
    %229 = arith.addf %228, %227 : vector<1x32xf32>
    %230 = arith.divf %228, %229 : vector<1x32xf32>
    %c2_130 = arith.constant 2 : index
    %c4_131 = arith.constant 4 : index
    %c0_132 = arith.constant 0 : index
    %231 = vector.load %arg23[%c2_130, %c4_131, %c0_132] : memref<3x8x32xf32, #tpu.memory_space<vmem>>, vector<1x1x32xf32>
    %232 = vector.shape_cast %231 : vector<1x1x32xf32> to vector<1x32xf32>
    %233 = arith.mulf %222, %214 : vector<1x32xf32>
    %234 = arith.addf %232, %233 : vector<1x32xf32>
    %235 = math.tanh %234 : vector<1x32xf32>
    %cst_133 = arith.constant 1.000000e+00 : f32
    %236 = vector.broadcast %cst_133 : f32 to vector<1x32xf32>
    %237 = arith.subf %236, %230 : vector<1x32xf32>
    %238 = arith.mulf %237, %235 : vector<1x32xf32>
    %239 = arith.mulf %230, %206 : vector<1x32xf32>
    %240 = arith.addf %238, %239 : vector<1x32xf32>
    %c4_134 = arith.constant 4 : index
    %c0_135 = arith.constant 0 : index
    %241 = vector.load %arg24[%c4_134, %c0_135] : memref<8x32xf32, #tpu.memory_space<vmem>>, vector<1x32xf32>
    tpu.vector_store %arg24[%c4_134, %c0_135], %240 {strides = array<i32>} : memref<8x32xf32, #tpu.memory_space<vmem>>, vector<1x32xf32>,
    %242 = arith.truncf %240 : vector<1x32xf32> to vector<1x32xbf16>
    %cst_136 = arith.constant dense<0.000000e+00> : vector<1x32xf32>
    %243 = tpu.matmul %242, %58, %cst_136 {dimension_numbers = #tpu.dot_dimension_numbers<[1], [0], [0], [1], [0, 0, 1, 1], [], []>} : vector<1x32xbf16>, vector<32x32xbf16>, vector<1x32xf32> -> vector<1x32xf32>
    %244 = arith.addf %243, %66 : vector<1x32xf32>
    %cst_137 = arith.constant dense<0.000000e+00> : vector<1x32xf32>
    %245 = tpu.matmul %242, %61, %cst_137 {dimension_numbers = #tpu.dot_dimension_numbers<[1], [0], [0], [1], [0, 0, 1, 1], [], []>} : vector<1x32xbf16>, vector<32x32xbf16>, vector<1x32xf32> -> vector<1x32xf32>
    %246 = arith.addf %245, %68 : vector<1x32xf32>
    %cst_138 = arith.constant dense<0.000000e+00> : vector<1x32xf32>
    %247 = tpu.matmul %242, %64, %cst_138 {dimension_numbers = #tpu.dot_dimension_numbers<[1], [0], [0], [1], [0, 0, 1, 1], [], []>} : vector<1x32xbf16>, vector<32x32xbf16>, vector<1x32xf32> -> vector<1x32xf32>
    %248 = arith.addf %247, %70 : vector<1x32xf32>
    %c0_139 = arith.constant 0 : index
    %c5 = arith.constant 5 : index
    %c0_140 = arith.constant 0 : index
    %249 = vector.load %arg23[%c0_139, %c5, %c0_140] : memref<3x8x32xf32, #tpu.memory_space<vmem>>, vector<1x1x32xf32>
    %250 = vector.shape_cast %249 : vector<1x1x32xf32> to vector<1x32xf32>
    %251 = arith.addf %250, %244 : vector<1x32xf32>
    %252 = arith.negf %251 : vector<1x32xf32>
    %253 = math.exp %252 : vector<1x32xf32>
    %cst_141 = arith.constant 1.000000e+00 : f32
    %254 = vector.broadcast %cst_141 : f32 to vector<1x32xf32>
    %255 = arith.addf %254, %253 : vector<1x32xf32>
    %256 = arith.divf %254, %255 : vector<1x32xf32>
    %c1_142 = arith.constant 1 : index
    %c5_143 = arith.constant 5 : index
    %c0_144 = arith.constant 0 : index
    %257 = vector.load %arg23[%c1_142, %c5_143, %c0_144] : memref<3x8x32xf32, #tpu.memory_space<vmem>>, vector<1x1x32xf32>
    %258 = vector.shape_cast %257 : vector<1x1x32xf32> to vector<1x32xf32>
    %259 = arith.addf %258, %246 : vector<1x32xf32>
    %260 = arith.negf %259 : vector<1x32xf32>
    %261 = math.exp %260 : vector<1x32xf32>
    %cst_145 = arith.constant 1.000000e+00 : f32
    %262 = vector.broadcast %cst_145 : f32 to vector<1x32xf32>
    %263 = arith.addf %262, %261 : vector<1x32xf32>
    %264 = arith.divf %262, %263 : vector<1x32xf32>
    %c2_146 = arith.constant 2 : index
    %c5_147 = arith.constant 5 : index
    %c0_148 = arith.constant 0 : index
    %265 = vector.load %arg23[%c2_146, %c5_147, %c0_148] : memref<3x8x32xf32, #tpu.memory_space<vmem>>, vector<1x1x32xf32>
    %266 = vector.shape_cast %265 : vector<1x1x32xf32> to vector<1x32xf32>
    %267 = arith.mulf %256, %248 : vector<1x32xf32>
    %268 = arith.addf %266, %267 : vector<1x32xf32>
    %269 = math.tanh %268 : vector<1x32xf32>
    %cst_149 = arith.constant 1.000000e+00 : f32
    %270 = vector.broadcast %cst_149 : f32 to vector<1x32xf32>
    %271 = arith.subf %270, %264 : vector<1x32xf32>
    %272 = arith.mulf %271, %269 : vector<1x32xf32>
    %273 = arith.mulf %264, %240 : vector<1x32xf32>
    %274 = arith.addf %272, %273 : vector<1x32xf32>
    %c5_150 = arith.constant 5 : index
    %c0_151 = arith.constant 0 : index
    %275 = vector.load %arg24[%c5_150, %c0_151] : memref<8x32xf32, #tpu.memory_space<vmem>>, vector<1x32xf32>
    tpu.vector_store %arg24[%c5_150, %c0_151], %274 {strides = array<i32>} : memref<8x32xf32, #tpu.memory_space<vmem>>, vector<1x32xf32>,
    %276 = arith.truncf %274 : vector<1x32xf32> to vector<1x32xbf16>
    %cst_152 = arith.constant dense<0.000000e+00> : vector<1x32xf32>
    %277 = tpu.matmul %276, %58, %cst_152 {dimension_numbers = #tpu.dot_dimension_numbers<[1], [0], [0], [1], [0, 0, 1, 1], [], []>} : vector<1x32xbf16>, vector<32x32xbf16>, vector<1x32xf32> -> vector<1x32xf32>
    %278 = arith.addf %277, %66 : vector<1x32xf32>
    %cst_153 = arith.constant dense<0.000000e+00> : vector<1x32xf32>
    %279 = tpu.matmul %276, %61, %cst_153 {dimension_numbers = #tpu.dot_dimension_numbers<[1], [0], [0], [1], [0, 0, 1, 1], [], []>} : vector<1x32xbf16>, vector<32x32xbf16>, vector<1x32xf32> -> vector<1x32xf32>
    %280 = arith.addf %279, %68 : vector<1x32xf32>
    %cst_154 = arith.constant dense<0.000000e+00> : vector<1x32xf32>
    %281 = tpu.matmul %276, %64, %cst_154 {dimension_numbers = #tpu.dot_dimension_numbers<[1], [0], [0], [1], [0, 0, 1, 1], [], []>} : vector<1x32xbf16>, vector<32x32xbf16>, vector<1x32xf32> -> vector<1x32xf32>
    %282 = arith.addf %281, %70 : vector<1x32xf32>
    %c0_155 = arith.constant 0 : index
    %c6 = arith.constant 6 : index
    %c0_156 = arith.constant 0 : index
    %283 = vector.load %arg23[%c0_155, %c6, %c0_156] : memref<3x8x32xf32, #tpu.memory_space<vmem>>, vector<1x1x32xf32>
    %284 = vector.shape_cast %283 : vector<1x1x32xf32> to vector<1x32xf32>
    %285 = arith.addf %284, %278 : vector<1x32xf32>
    %286 = arith.negf %285 : vector<1x32xf32>
    %287 = math.exp %286 : vector<1x32xf32>
    %cst_157 = arith.constant 1.000000e+00 : f32
    %288 = vector.broadcast %cst_157 : f32 to vector<1x32xf32>
    %289 = arith.addf %288, %287 : vector<1x32xf32>
    %290 = arith.divf %288, %289 : vector<1x32xf32>
    %c1_158 = arith.constant 1 : index
    %c6_159 = arith.constant 6 : index
    %c0_160 = arith.constant 0 : index
    %291 = vector.load %arg23[%c1_158, %c6_159, %c0_160] : memref<3x8x32xf32, #tpu.memory_space<vmem>>, vector<1x1x32xf32>
    %292 = vector.shape_cast %291 : vector<1x1x32xf32> to vector<1x32xf32>
    %293 = arith.addf %292, %280 : vector<1x32xf32>
    %294 = arith.negf %293 : vector<1x32xf32>
    %295 = math.exp %294 : vector<1x32xf32>
    %cst_161 = arith.constant 1.000000e+00 : f32
    %296 = vector.broadcast %cst_161 : f32 to vector<1x32xf32>
    %297 = arith.addf %296, %295 : vector<1x32xf32>
    %298 = arith.divf %296, %297 : vector<1x32xf32>
    %c2_162 = arith.constant 2 : index
    %c6_163 = arith.constant 6 : index
    %c0_164 = arith.constant 0 : index
    %299 = vector.load %arg23[%c2_162, %c6_163, %c0_164] : memref<3x8x32xf32, #tpu.memory_space<vmem>>, vector<1x1x32xf32>
    %300 = vector.shape_cast %299 : vector<1x1x32xf32> to vector<1x32xf32>
    %301 = arith.mulf %290, %282 : vector<1x32xf32>
    %302 = arith.addf %300, %301 : vector<1x32xf32>
    %303 = math.tanh %302 : vector<1x32xf32>
    %cst_165 = arith.constant 1.000000e+00 : f32
    %304 = vector.broadcast %cst_165 : f32 to vector<1x32xf32>
    %305 = arith.subf %304, %298 : vector<1x32xf32>
    %306 = arith.mulf %305, %303 : vector<1x32xf32>
    %307 = arith.mulf %298, %274 : vector<1x32xf32>
    %308 = arith.addf %306, %307 : vector<1x32xf32>
    %c6_166 = arith.constant 6 : index
    %c0_167 = arith.constant 0 : index
    %309 = vector.load %arg24[%c6_166, %c0_167] : memref<8x32xf32, #tpu.memory_space<vmem>>, vector<1x32xf32>
    tpu.vector_store %arg24[%c6_166, %c0_167], %308 {strides = array<i32>} : memref<8x32xf32, #tpu.memory_space<vmem>>, vector<1x32xf32>,
    %310 = arith.truncf %308 : vector<1x32xf32> to vector<1x32xbf16>
    %cst_168 = arith.constant dense<0.000000e+00> : vector<1x32xf32>
    %311 = tpu.matmul %310, %58, %cst_168 {dimension_numbers = #tpu.dot_dimension_numbers<[1], [0], [0], [1], [0, 0, 1, 1], [], []>} : vector<1x32xbf16>, vector<32x32xbf16>, vector<1x32xf32> -> vector<1x32xf32>
    %312 = arith.addf %311, %66 : vector<1x32xf32>
    %cst_169 = arith.constant dense<0.000000e+00> : vector<1x32xf32>
    %313 = tpu.matmul %310, %61, %cst_169 {dimension_numbers = #tpu.dot_dimension_numbers<[1], [0], [0], [1], [0, 0, 1, 1], [], []>} : vector<1x32xbf16>, vector<32x32xbf16>, vector<1x32xf32> -> vector<1x32xf32>
    %314 = arith.addf %313, %68 : vector<1x32xf32>
    %cst_170 = arith.constant dense<0.000000e+00> : vector<1x32xf32>
    %315 = tpu.matmul %310, %64, %cst_170 {dimension_numbers = #tpu.dot_dimension_numbers<[1], [0], [0], [1], [0, 0, 1, 1], [], []>} : vector<1x32xbf16>, vector<32x32xbf16>, vector<1x32xf32> -> vector<1x32xf32>
    %316 = arith.addf %315, %70 : vector<1x32xf32>
    %c0_171 = arith.constant 0 : index
    %c7 = arith.constant 7 : index
    %c0_172 = arith.constant 0 : index
    %317 = vector.load %arg23[%c0_171, %c7, %c0_172] : memref<3x8x32xf32, #tpu.memory_space<vmem>>, vector<1x1x32xf32>
    %318 = vector.shape_cast %317 : vector<1x1x32xf32> to vector<1x32xf32>
    %319 = arith.addf %318, %312 : vector<1x32xf32>
    %320 = arith.negf %319 : vector<1x32xf32>
    %321 = math.exp %320 : vector<1x32xf32>
    %cst_173 = arith.constant 1.000000e+00 : f32
    %322 = vector.broadcast %cst_173 : f32 to vector<1x32xf32>
    %323 = arith.addf %322, %321 : vector<1x32xf32>
    %324 = arith.divf %322, %323 : vector<1x32xf32>
    %c1_174 = arith.constant 1 : index
    %c7_175 = arith.constant 7 : index
    %c0_176 = arith.constant 0 : index
    %325 = vector.load %arg23[%c1_174, %c7_175, %c0_176] : memref<3x8x32xf32, #tpu.memory_space<vmem>>, vector<1x1x32xf32>
    %326 = vector.shape_cast %325 : vector<1x1x32xf32> to vector<1x32xf32>
    %327 = arith.addf %326, %314 : vector<1x32xf32>
    %328 = arith.negf %327 : vector<1x32xf32>
    %329 = math.exp %328 : vector<1x32xf32>
    %cst_177 = arith.constant 1.000000e+00 : f32
    %330 = vector.broadcast %cst_177 : f32 to vector<1x32xf32>
    %331 = arith.addf %330, %329 : vector<1x32xf32>
    %332 = arith.divf %330, %331 : vector<1x32xf32>
    %c2_178 = arith.constant 2 : index
    %c7_179 = arith.constant 7 : index
    %c0_180 = arith.constant 0 : index
    %333 = vector.load %arg23[%c2_178, %c7_179, %c0_180] : memref<3x8x32xf32, #tpu.memory_space<vmem>>, vector<1x1x32xf32>
    %334 = vector.shape_cast %333 : vector<1x1x32xf32> to vector<1x32xf32>
    %335 = arith.mulf %324, %316 : vector<1x32xf32>
    %336 = arith.addf %334, %335 : vector<1x32xf32>
    %337 = math.tanh %336 : vector<1x32xf32>
    %cst_181 = arith.constant 1.000000e+00 : f32
    %338 = vector.broadcast %cst_181 : f32 to vector<1x32xf32>
    %339 = arith.subf %338, %332 : vector<1x32xf32>
    %340 = arith.mulf %339, %337 : vector<1x32xf32>
    %341 = arith.mulf %332, %308 : vector<1x32xf32>
    %342 = arith.addf %340, %341 : vector<1x32xf32>
    %c7_182 = arith.constant 7 : index
    %c0_183 = arith.constant 0 : index
    %343 = vector.load %arg24[%c7_182, %c0_183] : memref<8x32xf32, #tpu.memory_space<vmem>>, vector<1x32xf32>
    tpu.vector_store %arg24[%c7_182, %c0_183], %342 {strides = array<i32>} : memref<8x32xf32, #tpu.memory_space<vmem>>, vector<1x32xf32>,
    %c0_184 = arith.constant 0 : index
    %c0_185 = arith.constant 0 : index
    %344 = vector.load %arg24[%c0_184, %c0_185] : memref<8x32xf32, #tpu.memory_space<vmem>>, vector<8x32xf32>
    %c0_186 = arith.constant 0 : index
    %c0_187 = arith.constant 0 : index
    %345 = vector.load %arg6[%c0_186, %c0_187] : memref<32x32xf32, #tpu.memory_space<vmem>>, vector<32x32xf32>
    %346 = arith.truncf %344 : vector<8x32xf32> to vector<8x32xbf16>
    %347 = arith.truncf %345 : vector<32x32xf32> to vector<32x32xbf16>
    %cst_188 = arith.constant dense<0.000000e+00> : vector<8x32xf32>
    %348 = tpu.matmul %346, %347, %cst_188 {dimension_numbers = #tpu.dot_dimension_numbers<[1], [0], [0], [1], [0, 0, 1, 1], [], []>} : vector<8x32xbf16>, vector<32x32xbf16>, vector<8x32xf32> -> vector<8x32xf32>
    %c0_189 = arith.constant 0 : index
    %c0_190 = arith.constant 0 : index
    %349 = vector.load %arg7[%c0_189, %c0_190] : memref<1x32xf32, #tpu.memory_space<vmem>>, vector<1x32xf32>
    %350 = vector.broadcast %349 : vector<1x32xf32> to vector<8x32xf32>
    %351 = arith.addf %348, %350 : vector<8x32xf32>
    %352 = vector.shape_cast %351 : vector<8x32xf32> to vector<1x8x32xf32>
    %353 = arith.addf %0, %352 : vector<1x8x32xf32>
    %cst_191 = arith.constant dense<0.000000e+00> : vector<1x8xf32>
    %354 = vector.multi_reduction <add>, %353, %cst_191 [2] : vector<1x8x32xf32> to vector<1x8xf32>
    %355 = vector.shape_cast %354 : vector<1x8xf32> to vector<1x8x1xf32>
    %cst_192 = arith.constant 3.200000e+01 : f32
    %356 = vector.broadcast %cst_192 : f32 to vector<1x8x1xf32>
    %357 = arith.divf %355, %356 : vector<1x8x1xf32>
    %358 = vector.broadcast %357 : vector<1x8x1xf32> to vector<1x8x32xf32>
    %359 = arith.subf %353, %358 : vector<1x8x32xf32>
    %360 = arith.mulf %359, %359 : vector<1x8x32xf32>
    %cst_193 = arith.constant dense<0.000000e+00> : vector<1x8xf32>
    %361 = vector.multi_reduction <add>, %360, %cst_193 [2] : vector<1x8x32xf32> to vector<1x8xf32>
    %362 = vector.shape_cast %361 : vector<1x8xf32> to vector<1x8x1xf32>
    %cst_194 = arith.constant 3.200000e+01 : f32
    %363 = vector.broadcast %cst_194 : f32 to vector<1x8x1xf32>
    %364 = arith.divf %362, %363 : vector<1x8x1xf32>
    %365 = vector.broadcast %357 : vector<1x8x1xf32> to vector<1x8x32xf32>
    %366 = arith.subf %353, %365 : vector<1x8x32xf32>
    %cst_195 = arith.constant 9.99999974E-6 : f32
    %367 = vector.broadcast %cst_195 : f32 to vector<1x8x1xf32>
    %368 = arith.addf %364, %367 : vector<1x8x1xf32>
    %369 = math.rsqrt %368 : vector<1x8x1xf32>
    %370 = vector.broadcast %369 : vector<1x8x1xf32> to vector<1x8x32xf32>
    %371 = arith.mulf %366, %370 : vector<1x8x32xf32>
    %372 = vector.shape_cast %371 : vector<1x8x32xf32> to vector<8x32xf32>
    %c0_196 = arith.constant 0 : index
    %c0_197 = arith.constant 0 : index
    %373 = vector.load %arg8[%c0_196, %c0_197] : memref<32x32xf32, #tpu.memory_space<vmem>>, vector<32x32xf32>
    %374 = arith.truncf %372 : vector<8x32xf32> to vector<8x32xbf16>
    %375 = arith.truncf %373 : vector<32x32xf32> to vector<32x32xbf16>
    %cst_198 = arith.constant dense<0.000000e+00> : vector<8x32xf32>
    %376 = tpu.matmul %374, %375, %cst_198 {dimension_numbers = #tpu.dot_dimension_numbers<[1], [0], [0], [1], [0, 0, 1, 1], [], []>} : vector<8x32xbf16>, vector<32x32xbf16>, vector<8x32xf32> -> vector<8x32xf32>
    %c0_199 = arith.constant 0 : index
    %c0_200 = arith.constant 0 : index
    %377 = vector.load %arg9[%c0_199, %c0_200] : memref<1x32xf32, #tpu.memory_space<vmem>>, vector<1x32xf32>
    %378 = vector.broadcast %377 : vector<1x32xf32> to vector<8x32xf32>
    %379 = arith.addf %376, %378 : vector<8x32xf32>
    %380 = arith.negf %379 : vector<8x32xf32>
    %381 = math.exp %380 : vector<8x32xf32>
    %cst_201 = arith.constant 1.000000e+00 : f32
    %382 = vector.broadcast %cst_201 : f32 to vector<8x32xf32>
    %383 = arith.addf %382, %381 : vector<8x32xf32>
    %384 = arith.divf %382, %383 : vector<8x32xf32>
    %385 = arith.mulf %379, %384 : vector<8x32xf32>
    %c0_202 = arith.constant 0 : index
    %c0_203 = arith.constant 0 : index
    %386 = vector.load %arg10[%c0_202, %c0_203] : memref<32x32xf32, #tpu.memory_space<vmem>>, vector<32x32xf32>
    %387 = arith.truncf %385 : vector<8x32xf32> to vector<8x32xbf16>
    %388 = arith.truncf %386 : vector<32x32xf32> to vector<32x32xbf16>
    %cst_204 = arith.constant dense<0.000000e+00> : vector<8x32xf32>
    %389 = tpu.matmul %387, %388, %cst_204 {dimension_numbers = #tpu.dot_dimension_numbers<[1], [0], [0], [1], [0, 0, 1, 1], [], []>} : vector<8x32xbf16>, vector<32x32xbf16>, vector<8x32xf32> -> vector<8x32xf32>
    %c0_205 = arith.constant 0 : index
    %c0_206 = arith.constant 0 : index
    %390 = vector.load %arg11[%c0_205, %c0_206] : memref<1x32xf32, #tpu.memory_space<vmem>>, vector<1x32xf32>
    %391 = vector.broadcast %390 : vector<1x32xf32> to vector<8x32xf32>
    %392 = arith.addf %389, %391 : vector<8x32xf32>
    %393 = vector.shape_cast %392 : vector<8x32xf32> to vector<1x8x32xf32>
    %394 = arith.addf %353, %393 : vector<1x8x32xf32>
    %cst_207 = arith.constant dense<0.000000e+00> : vector<1x8xf32>
    %395 = vector.multi_reduction <add>, %394, %cst_207 [2] : vector<1x8x32xf32> to vector<1x8xf32>
    %396 = vector.shape_cast %395 : vector<1x8xf32> to vector<1x8x1xf32>
    %cst_208 = arith.constant 3.200000e+01 : f32
    %397 = vector.broadcast %cst_208 : f32 to vector<1x8x1xf32>
    %398 = arith.divf %396, %397 : vector<1x8x1xf32>
    %399 = vector.broadcast %398 : vector<1x8x1xf32> to vector<1x8x32xf32>
    %400 = arith.subf %394, %399 : vector<1x8x32xf32>
    %401 = arith.mulf %400, %400 : vector<1x8x32xf32>
    %cst_209 = arith.constant dense<0.000000e+00> : vector<1x8xf32>
    %402 = vector.multi_reduction <add>, %401, %cst_209 [2] : vector<1x8x32xf32> to vector<1x8xf32>
    %403 = vector.shape_cast %402 : vector<1x8xf32> to vector<1x8x1xf32>
    %cst_210 = arith.constant 3.200000e+01 : f32
    %404 = vector.broadcast %cst_210 : f32 to vector<1x8x1xf32>
    %405 = arith.divf %403, %404 : vector<1x8x1xf32>
    %406 = vector.broadcast %398 : vector<1x8x1xf32> to vector<1x8x32xf32>
    %407 = arith.subf %394, %406 : vector<1x8x32xf32>
    %cst_211 = arith.constant 9.99999974E-6 : f32
    %408 = vector.broadcast %cst_211 : f32 to vector<1x8x1xf32>
    %409 = arith.addf %405, %408 : vector<1x8x1xf32>
    %410 = math.rsqrt %409 : vector<1x8x1xf32>
    %411 = vector.broadcast %410 : vector<1x8x1xf32> to vector<1x8x32xf32>
    %412 = arith.mulf %407, %411 : vector<1x8x32xf32>
    %413 = vector.shape_cast %412 : vector<1x8x32xf32> to vector<8x32xf32>
    %c0_212 = arith.constant 0 : index
    %c0_213 = arith.constant 0 : index
    %c0_214 = arith.constant 0 : index
    %414 = vector.load %arg12[%c0_212, %c0_213, %c0_214] : memref<3x32x32xf32, #tpu.memory_space<vmem>>, vector<1x32x32xf32>
    %415 = vector.shape_cast %414 : vector<1x32x32xf32> to vector<32x32xf32>
    %416 = arith.truncf %413 : vector<8x32xf32> to vector<8x32xbf16>
    %417 = arith.truncf %415 : vector<32x32xf32> to vector<32x32xbf16>
    %cst_215 = arith.constant dense<0.000000e+00> : vector<8x32xf32>
    %418 = tpu.matmul %416, %417, %cst_215 {dimension_numbers = #tpu.dot_dimension_numbers<[1], [0], [0], [1], [0, 0, 1, 1], [], []>} : vector<8x32xbf16>, vector<32x32xbf16>, vector<8x32xf32> -> vector<8x32xf32>
    %c0_216 = arith.constant 0 : index
    %c0_217 = arith.constant 0 : index
    %c0_218 = arith.constant 0 : index
    %419 = vector.load %arg13[%c0_216, %c0_217, %c0_218] : memref<3x1x32xf32, #tpu.memory_space<vmem>>, vector<1x1x32xf32>
    %420 = vector.shape_cast %419 : vector<1x1x32xf32> to vector<1x32xf32>
    %421 = vector.broadcast %420 : vector<1x32xf32> to vector<8x32xf32>
    %422 = arith.addf %418, %421 : vector<8x32xf32>
    %c0_219 = arith.constant 0 : index
    %c0_220 = arith.constant 0 : index
    %c0_221 = arith.constant 0 : index
    %423 = vector.load %arg23[%c0_219, %c0_220, %c0_221] : memref<3x8x32xf32, #tpu.memory_space<vmem>>, vector<1x8x32xf32>
    %424 = vector.shape_cast %423 : vector<1x8x32xf32> to vector<8x32xf32>
    %425 = vector.shape_cast %422 : vector<8x32xf32> to vector<1x8x32xf32>
    tpu.vector_store %arg23[%c0_219, %c0_220, %c0_221], %425 {strides = array<i32>} : memref<3x8x32xf32, #tpu.memory_space<vmem>>, vector<1x8x32xf32>,
    %c1_222 = arith.constant 1 : index
    %c0_223 = arith.constant 0 : index
    %c0_224 = arith.constant 0 : index
    %426 = vector.load %arg12[%c1_222, %c0_223, %c0_224] : memref<3x32x32xf32, #tpu.memory_space<vmem>>, vector<1x32x32xf32>
    %427 = vector.shape_cast %426 : vector<1x32x32xf32> to vector<32x32xf32>
    %428 = arith.truncf %413 : vector<8x32xf32> to vector<8x32xbf16>
    %429 = arith.truncf %427 : vector<32x32xf32> to vector<32x32xbf16>
    %cst_225 = arith.constant dense<0.000000e+00> : vector<8x32xf32>
    %430 = tpu.matmul %428, %429, %cst_225 {dimension_numbers = #tpu.dot_dimension_numbers<[1], [0], [0], [1], [0, 0, 1, 1], [], []>} : vector<8x32xbf16>, vector<32x32xbf16>, vector<8x32xf32> -> vector<8x32xf32>
    %c1_226 = arith.constant 1 : index
    %c0_227 = arith.constant 0 : index
    %c0_228 = arith.constant 0 : index
    %431 = vector.load %arg13[%c1_226, %c0_227, %c0_228] : memref<3x1x32xf32, #tpu.memory_space<vmem>>, vector<1x1x32xf32>
    %432 = vector.shape_cast %431 : vector<1x1x32xf32> to vector<1x32xf32>
    %433 = vector.broadcast %432 : vector<1x32xf32> to vector<8x32xf32>
    %434 = arith.addf %430, %433 : vector<8x32xf32>
    %c1_229 = arith.constant 1 : index
    %c0_230 = arith.constant 0 : index
    %c0_231 = arith.constant 0 : index
    %435 = vector.load %arg23[%c1_229, %c0_230, %c0_231] : memref<3x8x32xf32, #tpu.memory_space<vmem>>, vector<1x8x32xf32>
    %436 = vector.shape_cast %435 : vector<1x8x32xf32> to vector<8x32xf32>
    %437 = vector.shape_cast %434 : vector<8x32xf32> to vector<1x8x32xf32>
    tpu.vector_store %arg23[%c1_229, %c0_230, %c0_231], %437 {strides = array<i32>} : memref<3x8x32xf32, #tpu.memory_space<vmem>>, vector<1x8x32xf32>,
    %c2_232 = arith.constant 2 : index
    %c0_233 = arith.constant 0 : index
    %c0_234 = arith.constant 0 : index
    %438 = vector.load %arg12[%c2_232, %c0_233, %c0_234] : memref<3x32x32xf32, #tpu.memory_space<vmem>>, vector<1x32x32xf32>
    %439 = vector.shape_cast %438 : vector<1x32x32xf32> to vector<32x32xf32>
    %440 = arith.truncf %413 : vector<8x32xf32> to vector<8x32xbf16>
    %441 = arith.truncf %439 : vector<32x32xf32> to vector<32x32xbf16>
    %cst_235 = arith.constant dense<0.000000e+00> : vector<8x32xf32>
    %442 = tpu.matmul %440, %441, %cst_235 {dimension_numbers = #tpu.dot_dimension_numbers<[1], [0], [0], [1], [0, 0, 1, 1], [], []>} : vector<8x32xbf16>, vector<32x32xbf16>, vector<8x32xf32> -> vector<8x32xf32>
    %c2_236 = arith.constant 2 : index
    %c0_237 = arith.constant 0 : index
    %c0_238 = arith.constant 0 : index
    %443 = vector.load %arg13[%c2_236, %c0_237, %c0_238] : memref<3x1x32xf32, #tpu.memory_space<vmem>>, vector<1x1x32xf32>
    %444 = vector.shape_cast %443 : vector<1x1x32xf32> to vector<1x32xf32>
    %445 = vector.broadcast %444 : vector<1x32xf32> to vector<8x32xf32>
    %446 = arith.addf %442, %445 : vector<8x32xf32>
    %c2_239 = arith.constant 2 : index
    %c0_240 = arith.constant 0 : index
    %c0_241 = arith.constant 0 : index
    %447 = vector.load %arg23[%c2_239, %c0_240, %c0_241] : memref<3x8x32xf32, #tpu.memory_space<vmem>>, vector<1x8x32xf32>
    %448 = vector.shape_cast %447 : vector<1x8x32xf32> to vector<8x32xf32>
    %449 = vector.shape_cast %446 : vector<8x32xf32> to vector<1x8x32xf32>
    tpu.vector_store %arg23[%c2_239, %c0_240, %c0_241], %449 {strides = array<i32>} : memref<3x8x32xf32, #tpu.memory_space<vmem>>, vector<1x8x32xf32>,
    %c0_242 = arith.constant 0 : index
    %c0_243 = arith.constant 0 : index
    %c0_244 = arith.constant 0 : index
    %450 = vector.load %arg14[%c0_242, %c0_243, %c0_244] : memref<3x32x32xf32, #tpu.memory_space<vmem>>, vector<1x32x32xf32>
    %451 = vector.shape_cast %450 : vector<1x32x32xf32> to vector<32x32xf32>
    %452 = arith.truncf %451 : vector<32x32xf32> to vector<32x32xbf16>
    %c1_245 = arith.constant 1 : index
    %c0_246 = arith.constant 0 : index
    %c0_247 = arith.constant 0 : index
    %453 = vector.load %arg14[%c1_245, %c0_246, %c0_247] : memref<3x32x32xf32, #tpu.memory_space<vmem>>, vector<1x32x32xf32>
    %454 = vector.shape_cast %453 : vector<1x32x32xf32> to vector<32x32xf32>
    %455 = arith.truncf %454 : vector<32x32xf32> to vector<32x32xbf16>
    %c2_248 = arith.constant 2 : index
    %c0_249 = arith.constant 0 : index
    %c0_250 = arith.constant 0 : index
    %456 = vector.load %arg14[%c2_248, %c0_249, %c0_250] : memref<3x32x32xf32, #tpu.memory_space<vmem>>, vector<1x32x32xf32>
    %457 = vector.shape_cast %456 : vector<1x32x32xf32> to vector<32x32xf32>
    %458 = arith.truncf %457 : vector<32x32xf32> to vector<32x32xbf16>
    %c0_251 = arith.constant 0 : index
    %c0_252 = arith.constant 0 : index
    %c0_253 = arith.constant 0 : index
    %459 = vector.load %arg15[%c0_251, %c0_252, %c0_253] : memref<3x1x32xf32, #tpu.memory_space<vmem>>, vector<1x1x32xf32>
    %460 = vector.shape_cast %459 : vector<1x1x32xf32> to vector<1x32xf32>
    %c1_254 = arith.constant 1 : index
    %c0_255 = arith.constant 0 : index
    %c0_256 = arith.constant 0 : index
    %461 = vector.load %arg15[%c1_254, %c0_255, %c0_256] : memref<3x1x32xf32, #tpu.memory_space<vmem>>, vector<1x1x32xf32>
    %462 = vector.shape_cast %461 : vector<1x1x32xf32> to vector<1x32xf32>
    %c2_257 = arith.constant 2 : index
    %c0_258 = arith.constant 0 : index
    %c0_259 = arith.constant 0 : index
    %463 = vector.load %arg15[%c2_257, %c0_258, %c0_259] : memref<3x1x32xf32, #tpu.memory_space<vmem>>, vector<1x1x32xf32>
    %464 = vector.shape_cast %463 : vector<1x1x32xf32> to vector<1x32xf32>
    %cst_260 = arith.constant 0.000000e+00 : f32
    %465 = vector.broadcast %cst_260 : f32 to vector<1x32xf32>
    %466 = arith.truncf %465 : vector<1x32xf32> to vector<1x32xbf16>
    %cst_261 = arith.constant dense<0.000000e+00> : vector<1x32xf32>
    %467 = tpu.matmul %466, %452, %cst_261 {dimension_numbers = #tpu.dot_dimension_numbers<[1], [0], [0], [1], [0, 0, 1, 1], [], []>} : vector<1x32xbf16>, vector<32x32xbf16>, vector<1x32xf32> -> vector<1x32xf32>
    %468 = arith.addf %467, %460 : vector<1x32xf32>
    %cst_262 = arith.constant dense<0.000000e+00> : vector<1x32xf32>
    %469 = tpu.matmul %466, %455, %cst_262 {dimension_numbers = #tpu.dot_dimension_numbers<[1], [0], [0], [1], [0, 0, 1, 1], [], []>} : vector<1x32xbf16>, vector<32x32xbf16>, vector<1x32xf32> -> vector<1x32xf32>
    %470 = arith.addf %469, %462 : vector<1x32xf32>
    %cst_263 = arith.constant dense<0.000000e+00> : vector<1x32xf32>
    %471 = tpu.matmul %466, %458, %cst_263 {dimension_numbers = #tpu.dot_dimension_numbers<[1], [0], [0], [1], [0, 0, 1, 1], [], []>} : vector<1x32xbf16>, vector<32x32xbf16>, vector<1x32xf32> -> vector<1x32xf32>
    %472 = arith.addf %471, %464 : vector<1x32xf32>
    %c0_264 = arith.constant 0 : index
    %c0_265 = arith.constant 0 : index
    %c0_266 = arith.constant 0 : index
    %473 = vector.load %arg23[%c0_264, %c0_265, %c0_266] : memref<3x8x32xf32, #tpu.memory_space<vmem>>, vector<1x1x32xf32>
    %474 = vector.shape_cast %473 : vector<1x1x32xf32> to vector<1x32xf32>
    %475 = arith.addf %474, %468 : vector<1x32xf32>
    %476 = arith.negf %475 : vector<1x32xf32>
    %477 = math.exp %476 : vector<1x32xf32>
    %cst_267 = arith.constant 1.000000e+00 : f32
    %478 = vector.broadcast %cst_267 : f32 to vector<1x32xf32>
    %479 = arith.addf %478, %477 : vector<1x32xf32>
    %480 = arith.divf %478, %479 : vector<1x32xf32>
    %c1_268 = arith.constant 1 : index
    %c0_269 = arith.constant 0 : index
    %c0_270 = arith.constant 0 : index
    %481 = vector.load %arg23[%c1_268, %c0_269, %c0_270] : memref<3x8x32xf32, #tpu.memory_space<vmem>>, vector<1x1x32xf32>
    %482 = vector.shape_cast %481 : vector<1x1x32xf32> to vector<1x32xf32>
    %483 = arith.addf %482, %470 : vector<1x32xf32>
    %484 = arith.negf %483 : vector<1x32xf32>
    %485 = math.exp %484 : vector<1x32xf32>
    %cst_271 = arith.constant 1.000000e+00 : f32
    %486 = vector.broadcast %cst_271 : f32 to vector<1x32xf32>
    %487 = arith.addf %486, %485 : vector<1x32xf32>
    %488 = arith.divf %486, %487 : vector<1x32xf32>
    %c2_272 = arith.constant 2 : index
    %c0_273 = arith.constant 0 : index
    %c0_274 = arith.constant 0 : index
    %489 = vector.load %arg23[%c2_272, %c0_273, %c0_274] : memref<3x8x32xf32, #tpu.memory_space<vmem>>, vector<1x1x32xf32>
    %490 = vector.shape_cast %489 : vector<1x1x32xf32> to vector<1x32xf32>
    %491 = arith.mulf %480, %472 : vector<1x32xf32>
    %492 = arith.addf %490, %491 : vector<1x32xf32>
    %493 = math.tanh %492 : vector<1x32xf32>
    %cst_275 = arith.constant 1.000000e+00 : f32
    %494 = vector.broadcast %cst_275 : f32 to vector<1x32xf32>
    %495 = arith.subf %494, %488 : vector<1x32xf32>
    %496 = arith.mulf %495, %493 : vector<1x32xf32>
    %497 = arith.mulf %488, %465 : vector<1x32xf32>
    %498 = arith.addf %496, %497 : vector<1x32xf32>
    %c0_276 = arith.constant 0 : index
    %c0_277 = arith.constant 0 : index
    %499 = vector.load %arg24[%c0_276, %c0_277] : memref<8x32xf32, #tpu.memory_space<vmem>>, vector<1x32xf32>
    tpu.vector_store %arg24[%c0_276, %c0_277], %498 {strides = array<i32>} : memref<8x32xf32, #tpu.memory_space<vmem>>, vector<1x32xf32>,
    %500 = arith.truncf %498 : vector<1x32xf32> to vector<1x32xbf16>
    %cst_278 = arith.constant dense<0.000000e+00> : vector<1x32xf32>
    %501 = tpu.matmul %500, %452, %cst_278 {dimension_numbers = #tpu.dot_dimension_numbers<[1], [0], [0], [1], [0, 0, 1, 1], [], []>} : vector<1x32xbf16>, vector<32x32xbf16>, vector<1x32xf32> -> vector<1x32xf32>
    %502 = arith.addf %501, %460 : vector<1x32xf32>
    %cst_279 = arith.constant dense<0.000000e+00> : vector<1x32xf32>
    %503 = tpu.matmul %500, %455, %cst_279 {dimension_numbers = #tpu.dot_dimension_numbers<[1], [0], [0], [1], [0, 0, 1, 1], [], []>} : vector<1x32xbf16>, vector<32x32xbf16>, vector<1x32xf32> -> vector<1x32xf32>
    %504 = arith.addf %503, %462 : vector<1x32xf32>
    %cst_280 = arith.constant dense<0.000000e+00> : vector<1x32xf32>
    %505 = tpu.matmul %500, %458, %cst_280 {dimension_numbers = #tpu.dot_dimension_numbers<[1], [0], [0], [1], [0, 0, 1, 1], [], []>} : vector<1x32xbf16>, vector<32x32xbf16>, vector<1x32xf32> -> vector<1x32xf32>
    %506 = arith.addf %505, %464 : vector<1x32xf32>
    %c0_281 = arith.constant 0 : index
    %c1_282 = arith.constant 1 : index
    %c0_283 = arith.constant 0 : index
    %507 = vector.load %arg23[%c0_281, %c1_282, %c0_283] : memref<3x8x32xf32, #tpu.memory_space<vmem>>, vector<1x1x32xf32>
    %508 = vector.shape_cast %507 : vector<1x1x32xf32> to vector<1x32xf32>
    %509 = arith.addf %508, %502 : vector<1x32xf32>
    %510 = arith.negf %509 : vector<1x32xf32>
    %511 = math.exp %510 : vector<1x32xf32>
    %cst_284 = arith.constant 1.000000e+00 : f32
    %512 = vector.broadcast %cst_284 : f32 to vector<1x32xf32>
    %513 = arith.addf %512, %511 : vector<1x32xf32>
    %514 = arith.divf %512, %513 : vector<1x32xf32>
    %c1_285 = arith.constant 1 : index
    %c1_286 = arith.constant 1 : index
    %c0_287 = arith.constant 0 : index
    %515 = vector.load %arg23[%c1_285, %c1_286, %c0_287] : memref<3x8x32xf32, #tpu.memory_space<vmem>>, vector<1x1x32xf32>
    %516 = vector.shape_cast %515 : vector<1x1x32xf32> to vector<1x32xf32>
    %517 = arith.addf %516, %504 : vector<1x32xf32>
    %518 = arith.negf %517 : vector<1x32xf32>
    %519 = math.exp %518 : vector<1x32xf32>
    %cst_288 = arith.constant 1.000000e+00 : f32
    %520 = vector.broadcast %cst_288 : f32 to vector<1x32xf32>
    %521 = arith.addf %520, %519 : vector<1x32xf32>
    %522 = arith.divf %520, %521 : vector<1x32xf32>
    %c2_289 = arith.constant 2 : index
    %c1_290 = arith.constant 1 : index
    %c0_291 = arith.constant 0 : index
    %523 = vector.load %arg23[%c2_289, %c1_290, %c0_291] : memref<3x8x32xf32, #tpu.memory_space<vmem>>, vector<1x1x32xf32>
    %524 = vector.shape_cast %523 : vector<1x1x32xf32> to vector<1x32xf32>
    %525 = arith.mulf %514, %506 : vector<1x32xf32>
    %526 = arith.addf %524, %525 : vector<1x32xf32>
    %527 = math.tanh %526 : vector<1x32xf32>
    %cst_292 = arith.constant 1.000000e+00 : f32
    %528 = vector.broadcast %cst_292 : f32 to vector<1x32xf32>
    %529 = arith.subf %528, %522 : vector<1x32xf32>
    %530 = arith.mulf %529, %527 : vector<1x32xf32>
    %531 = arith.mulf %522, %498 : vector<1x32xf32>
    %532 = arith.addf %530, %531 : vector<1x32xf32>
    %c1_293 = arith.constant 1 : index
    %c0_294 = arith.constant 0 : index
    %533 = vector.load %arg24[%c1_293, %c0_294] : memref<8x32xf32, #tpu.memory_space<vmem>>, vector<1x32xf32>
    tpu.vector_store %arg24[%c1_293, %c0_294], %532 {strides = array<i32>} : memref<8x32xf32, #tpu.memory_space<vmem>>, vector<1x32xf32>,
    %534 = arith.truncf %532 : vector<1x32xf32> to vector<1x32xbf16>
    %cst_295 = arith.constant dense<0.000000e+00> : vector<1x32xf32>
    %535 = tpu.matmul %534, %452, %cst_295 {dimension_numbers = #tpu.dot_dimension_numbers<[1], [0], [0], [1], [0, 0, 1, 1], [], []>} : vector<1x32xbf16>, vector<32x32xbf16>, vector<1x32xf32> -> vector<1x32xf32>
    %536 = arith.addf %535, %460 : vector<1x32xf32>
    %cst_296 = arith.constant dense<0.000000e+00> : vector<1x32xf32>
    %537 = tpu.matmul %534, %455, %cst_296 {dimension_numbers = #tpu.dot_dimension_numbers<[1], [0], [0], [1], [0, 0, 1, 1], [], []>} : vector<1x32xbf16>, vector<32x32xbf16>, vector<1x32xf32> -> vector<1x32xf32>
    %538 = arith.addf %537, %462 : vector<1x32xf32>
    %cst_297 = arith.constant dense<0.000000e+00> : vector<1x32xf32>
    %539 = tpu.matmul %534, %458, %cst_297 {dimension_numbers = #tpu.dot_dimension_numbers<[1], [0], [0], [1], [0, 0, 1, 1], [], []>} : vector<1x32xbf16>, vector<32x32xbf16>, vector<1x32xf32> -> vector<1x32xf32>
    %540 = arith.addf %539, %464 : vector<1x32xf32>
    %c0_298 = arith.constant 0 : index
    %c2_299 = arith.constant 2 : index
    %c0_300 = arith.constant 0 : index
    %541 = vector.load %arg23[%c0_298, %c2_299, %c0_300] : memref<3x8x32xf32, #tpu.memory_space<vmem>>, vector<1x1x32xf32>
    %542 = vector.shape_cast %541 : vector<1x1x32xf32> to vector<1x32xf32>
    %543 = arith.addf %542, %536 : vector<1x32xf32>
    %544 = arith.negf %543 : vector<1x32xf32>
    %545 = math.exp %544 : vector<1x32xf32>
    %cst_301 = arith.constant 1.000000e+00 : f32
    %546 = vector.broadcast %cst_301 : f32 to vector<1x32xf32>
    %547 = arith.addf %546, %545 : vector<1x32xf32>
    %548 = arith.divf %546, %547 : vector<1x32xf32>
    %c1_302 = arith.constant 1 : index
    %c2_303 = arith.constant 2 : index
    %c0_304 = arith.constant 0 : index
    %549 = vector.load %arg23[%c1_302, %c2_303, %c0_304] : memref<3x8x32xf32, #tpu.memory_space<vmem>>, vector<1x1x32xf32>
    %550 = vector.shape_cast %549 : vector<1x1x32xf32> to vector<1x32xf32>
    %551 = arith.addf %550, %538 : vector<1x32xf32>
    %552 = arith.negf %551 : vector<1x32xf32>
    %553 = math.exp %552 : vector<1x32xf32>
    %cst_305 = arith.constant 1.000000e+00 : f32
    %554 = vector.broadcast %cst_305 : f32 to vector<1x32xf32>
    %555 = arith.addf %554, %553 : vector<1x32xf32>
    %556 = arith.divf %554, %555 : vector<1x32xf32>
    %c2_306 = arith.constant 2 : index
    %c2_307 = arith.constant 2 : index
    %c0_308 = arith.constant 0 : index
    %557 = vector.load %arg23[%c2_306, %c2_307, %c0_308] : memref<3x8x32xf32, #tpu.memory_space<vmem>>, vector<1x1x32xf32>
    %558 = vector.shape_cast %557 : vector<1x1x32xf32> to vector<1x32xf32>
    %559 = arith.mulf %548, %540 : vector<1x32xf32>
    %560 = arith.addf %558, %559 : vector<1x32xf32>
    %561 = math.tanh %560 : vector<1x32xf32>
    %cst_309 = arith.constant 1.000000e+00 : f32
    %562 = vector.broadcast %cst_309 : f32 to vector<1x32xf32>
    %563 = arith.subf %562, %556 : vector<1x32xf32>
    %564 = arith.mulf %563, %561 : vector<1x32xf32>
    %565 = arith.mulf %556, %532 : vector<1x32xf32>
    %566 = arith.addf %564, %565 : vector<1x32xf32>
    %c2_310 = arith.constant 2 : index
    %c0_311 = arith.constant 0 : index
    %567 = vector.load %arg24[%c2_310, %c0_311] : memref<8x32xf32, #tpu.memory_space<vmem>>, vector<1x32xf32>
    tpu.vector_store %arg24[%c2_310, %c0_311], %566 {strides = array<i32>} : memref<8x32xf32, #tpu.memory_space<vmem>>, vector<1x32xf32>,
    %568 = arith.truncf %566 : vector<1x32xf32> to vector<1x32xbf16>
    %cst_312 = arith.constant dense<0.000000e+00> : vector<1x32xf32>
    %569 = tpu.matmul %568, %452, %cst_312 {dimension_numbers = #tpu.dot_dimension_numbers<[1], [0], [0], [1], [0, 0, 1, 1], [], []>} : vector<1x32xbf16>, vector<32x32xbf16>, vector<1x32xf32> -> vector<1x32xf32>
    %570 = arith.addf %569, %460 : vector<1x32xf32>
    %cst_313 = arith.constant dense<0.000000e+00> : vector<1x32xf32>
    %571 = tpu.matmul %568, %455, %cst_313 {dimension_numbers = #tpu.dot_dimension_numbers<[1], [0], [0], [1], [0, 0, 1, 1], [], []>} : vector<1x32xbf16>, vector<32x32xbf16>, vector<1x32xf32> -> vector<1x32xf32>
    %572 = arith.addf %571, %462 : vector<1x32xf32>
    %cst_314 = arith.constant dense<0.000000e+00> : vector<1x32xf32>
    %573 = tpu.matmul %568, %458, %cst_314 {dimension_numbers = #tpu.dot_dimension_numbers<[1], [0], [0], [1], [0, 0, 1, 1], [], []>} : vector<1x32xbf16>, vector<32x32xbf16>, vector<1x32xf32> -> vector<1x32xf32>
    %574 = arith.addf %573, %464 : vector<1x32xf32>
    %c0_315 = arith.constant 0 : index
    %c3_316 = arith.constant 3 : index
    %c0_317 = arith.constant 0 : index
    %575 = vector.load %arg23[%c0_315, %c3_316, %c0_317] : memref<3x8x32xf32, #tpu.memory_space<vmem>>, vector<1x1x32xf32>
    %576 = vector.shape_cast %575 : vector<1x1x32xf32> to vector<1x32xf32>
    %577 = arith.addf %576, %570 : vector<1x32xf32>
    %578 = arith.negf %577 : vector<1x32xf32>
    %579 = math.exp %578 : vector<1x32xf32>
    %cst_318 = arith.constant 1.000000e+00 : f32
    %580 = vector.broadcast %cst_318 : f32 to vector<1x32xf32>
    %581 = arith.addf %580, %579 : vector<1x32xf32>
    %582 = arith.divf %580, %581 : vector<1x32xf32>
    %c1_319 = arith.constant 1 : index
    %c3_320 = arith.constant 3 : index
    %c0_321 = arith.constant 0 : index
    %583 = vector.load %arg23[%c1_319, %c3_320, %c0_321] : memref<3x8x32xf32, #tpu.memory_space<vmem>>, vector<1x1x32xf32>
    %584 = vector.shape_cast %583 : vector<1x1x32xf32> to vector<1x32xf32>
    %585 = arith.addf %584, %572 : vector<1x32xf32>
    %586 = arith.negf %585 : vector<1x32xf32>
    %587 = math.exp %586 : vector<1x32xf32>
    %cst_322 = arith.constant 1.000000e+00 : f32
    %588 = vector.broadcast %cst_322 : f32 to vector<1x32xf32>
    %589 = arith.addf %588, %587 : vector<1x32xf32>
    %590 = arith.divf %588, %589 : vector<1x32xf32>
    %c2_323 = arith.constant 2 : index
    %c3_324 = arith.constant 3 : index
    %c0_325 = arith.constant 0 : index
    %591 = vector.load %arg23[%c2_323, %c3_324, %c0_325] : memref<3x8x32xf32, #tpu.memory_space<vmem>>, vector<1x1x32xf32>
    %592 = vector.shape_cast %591 : vector<1x1x32xf32> to vector<1x32xf32>
    %593 = arith.mulf %582, %574 : vector<1x32xf32>
    %594 = arith.addf %592, %593 : vector<1x32xf32>
    %595 = math.tanh %594 : vector<1x32xf32>
    %cst_326 = arith.constant 1.000000e+00 : f32
    %596 = vector.broadcast %cst_326 : f32 to vector<1x32xf32>
    %597 = arith.subf %596, %590 : vector<1x32xf32>
    %598 = arith.mulf %597, %595 : vector<1x32xf32>
    %599 = arith.mulf %590, %566 : vector<1x32xf32>
    %600 = arith.addf %598, %599 : vector<1x32xf32>
    %c3_327 = arith.constant 3 : index
    %c0_328 = arith.constant 0 : index
    %601 = vector.load %arg24[%c3_327, %c0_328] : memref<8x32xf32, #tpu.memory_space<vmem>>, vector<1x32xf32>
    tpu.vector_store %arg24[%c3_327, %c0_328], %600 {strides = array<i32>} : memref<8x32xf32, #tpu.memory_space<vmem>>, vector<1x32xf32>,
    %602 = arith.truncf %600 : vector<1x32xf32> to vector<1x32xbf16>
    %cst_329 = arith.constant dense<0.000000e+00> : vector<1x32xf32>
    %603 = tpu.matmul %602, %452, %cst_329 {dimension_numbers = #tpu.dot_dimension_numbers<[1], [0], [0], [1], [0, 0, 1, 1], [], []>} : vector<1x32xbf16>, vector<32x32xbf16>, vector<1x32xf32> -> vector<1x32xf32>
    %604 = arith.addf %603, %460 : vector<1x32xf32>
    %cst_330 = arith.constant dense<0.000000e+00> : vector<1x32xf32>
    %605 = tpu.matmul %602, %455, %cst_330 {dimension_numbers = #tpu.dot_dimension_numbers<[1], [0], [0], [1], [0, 0, 1, 1], [], []>} : vector<1x32xbf16>, vector<32x32xbf16>, vector<1x32xf32> -> vector<1x32xf32>
    %606 = arith.addf %605, %462 : vector<1x32xf32>
    %cst_331 = arith.constant dense<0.000000e+00> : vector<1x32xf32>
    %607 = tpu.matmul %602, %458, %cst_331 {dimension_numbers = #tpu.dot_dimension_numbers<[1], [0], [0], [1], [0, 0, 1, 1], [], []>} : vector<1x32xbf16>, vector<32x32xbf16>, vector<1x32xf32> -> vector<1x32xf32>
    %608 = arith.addf %607, %464 : vector<1x32xf32>
    %c0_332 = arith.constant 0 : index
    %c4_333 = arith.constant 4 : index
    %c0_334 = arith.constant 0 : index
    %609 = vector.load %arg23[%c0_332, %c4_333, %c0_334] : memref<3x8x32xf32, #tpu.memory_space<vmem>>, vector<1x1x32xf32>
    %610 = vector.shape_cast %609 : vector<1x1x32xf32> to vector<1x32xf32>
    %611 = arith.addf %610, %604 : vector<1x32xf32>
    %612 = arith.negf %611 : vector<1x32xf32>
    %613 = math.exp %612 : vector<1x32xf32>
    %cst_335 = arith.constant 1.000000e+00 : f32
    %614 = vector.broadcast %cst_335 : f32 to vector<1x32xf32>
    %615 = arith.addf %614, %613 : vector<1x32xf32>
    %616 = arith.divf %614, %615 : vector<1x32xf32>
    %c1_336 = arith.constant 1 : index
    %c4_337 = arith.constant 4 : index
    %c0_338 = arith.constant 0 : index
    %617 = vector.load %arg23[%c1_336, %c4_337, %c0_338] : memref<3x8x32xf32, #tpu.memory_space<vmem>>, vector<1x1x32xf32>
    %618 = vector.shape_cast %617 : vector<1x1x32xf32> to vector<1x32xf32>
    %619 = arith.addf %618, %606 : vector<1x32xf32>
    %620 = arith.negf %619 : vector<1x32xf32>
    %621 = math.exp %620 : vector<1x32xf32>
    %cst_339 = arith.constant 1.000000e+00 : f32
    %622 = vector.broadcast %cst_339 : f32 to vector<1x32xf32>
    %623 = arith.addf %622, %621 : vector<1x32xf32>
    %624 = arith.divf %622, %623 : vector<1x32xf32>
    %c2_340 = arith.constant 2 : index
    %c4_341 = arith.constant 4 : index
    %c0_342 = arith.constant 0 : index
    %625 = vector.load %arg23[%c2_340, %c4_341, %c0_342] : memref<3x8x32xf32, #tpu.memory_space<vmem>>, vector<1x1x32xf32>
    %626 = vector.shape_cast %625 : vector<1x1x32xf32> to vector<1x32xf32>
    %627 = arith.mulf %616, %608 : vector<1x32xf32>
    %628 = arith.addf %626, %627 : vector<1x32xf32>
    %629 = math.tanh %628 : vector<1x32xf32>
    %cst_343 = arith.constant 1.000000e+00 : f32
    %630 = vector.broadcast %cst_343 : f32 to vector<1x32xf32>
    %631 = arith.subf %630, %624 : vector<1x32xf32>
    %632 = arith.mulf %631, %629 : vector<1x32xf32>
    %633 = arith.mulf %624, %600 : vector<1x32xf32>
    %634 = arith.addf %632, %633 : vector<1x32xf32>
    %c4_344 = arith.constant 4 : index
    %c0_345 = arith.constant 0 : index
    %635 = vector.load %arg24[%c4_344, %c0_345] : memref<8x32xf32, #tpu.memory_space<vmem>>, vector<1x32xf32>
    tpu.vector_store %arg24[%c4_344, %c0_345], %634 {strides = array<i32>} : memref<8x32xf32, #tpu.memory_space<vmem>>, vector<1x32xf32>,
    %636 = arith.truncf %634 : vector<1x32xf32> to vector<1x32xbf16>
    %cst_346 = arith.constant dense<0.000000e+00> : vector<1x32xf32>
    %637 = tpu.matmul %636, %452, %cst_346 {dimension_numbers = #tpu.dot_dimension_numbers<[1], [0], [0], [1], [0, 0, 1, 1], [], []>} : vector<1x32xbf16>, vector<32x32xbf16>, vector<1x32xf32> -> vector<1x32xf32>
    %638 = arith.addf %637, %460 : vector<1x32xf32>
    %cst_347 = arith.constant dense<0.000000e+00> : vector<1x32xf32>
    %639 = tpu.matmul %636, %455, %cst_347 {dimension_numbers = #tpu.dot_dimension_numbers<[1], [0], [0], [1], [0, 0, 1, 1], [], []>} : vector<1x32xbf16>, vector<32x32xbf16>, vector<1x32xf32> -> vector<1x32xf32>
    %640 = arith.addf %639, %462 : vector<1x32xf32>
    %cst_348 = arith.constant dense<0.000000e+00> : vector<1x32xf32>
    %641 = tpu.matmul %636, %458, %cst_348 {dimension_numbers = #tpu.dot_dimension_numbers<[1], [0], [0], [1], [0, 0, 1, 1], [], []>} : vector<1x32xbf16>, vector<32x32xbf16>, vector<1x32xf32> -> vector<1x32xf32>
    %642 = arith.addf %641, %464 : vector<1x32xf32>
    %c0_349 = arith.constant 0 : index
    %c5_350 = arith.constant 5 : index
    %c0_351 = arith.constant 0 : index
    %643 = vector.load %arg23[%c0_349, %c5_350, %c0_351] : memref<3x8x32xf32, #tpu.memory_space<vmem>>, vector<1x1x32xf32>
    %644 = vector.shape_cast %643 : vector<1x1x32xf32> to vector<1x32xf32>
    %645 = arith.addf %644, %638 : vector<1x32xf32>
    %646 = arith.negf %645 : vector<1x32xf32>
    %647 = math.exp %646 : vector<1x32xf32>
    %cst_352 = arith.constant 1.000000e+00 : f32
    %648 = vector.broadcast %cst_352 : f32 to vector<1x32xf32>
    %649 = arith.addf %648, %647 : vector<1x32xf32>
    %650 = arith.divf %648, %649 : vector<1x32xf32>
    %c1_353 = arith.constant 1 : index
    %c5_354 = arith.constant 5 : index
    %c0_355 = arith.constant 0 : index
    %651 = vector.load %arg23[%c1_353, %c5_354, %c0_355] : memref<3x8x32xf32, #tpu.memory_space<vmem>>, vector<1x1x32xf32>
    %652 = vector.shape_cast %651 : vector<1x1x32xf32> to vector<1x32xf32>
    %653 = arith.addf %652, %640 : vector<1x32xf32>
    %654 = arith.negf %653 : vector<1x32xf32>
    %655 = math.exp %654 : vector<1x32xf32>
    %cst_356 = arith.constant 1.000000e+00 : f32
    %656 = vector.broadcast %cst_356 : f32 to vector<1x32xf32>
    %657 = arith.addf %656, %655 : vector<1x32xf32>
    %658 = arith.divf %656, %657 : vector<1x32xf32>
    %c2_357 = arith.constant 2 : index
    %c5_358 = arith.constant 5 : index
    %c0_359 = arith.constant 0 : index
    %659 = vector.load %arg23[%c2_357, %c5_358, %c0_359] : memref<3x8x32xf32, #tpu.memory_space<vmem>>, vector<1x1x32xf32>
    %660 = vector.shape_cast %659 : vector<1x1x32xf32> to vector<1x32xf32>
    %661 = arith.mulf %650, %642 : vector<1x32xf32>
    %662 = arith.addf %660, %661 : vector<1x32xf32>
    %663 = math.tanh %662 : vector<1x32xf32>
    %cst_360 = arith.constant 1.000000e+00 : f32
    %664 = vector.broadcast %cst_360 : f32 to vector<1x32xf32>
    %665 = arith.subf %664, %658 : vector<1x32xf32>
    %666 = arith.mulf %665, %663 : vector<1x32xf32>
    %667 = arith.mulf %658, %634 : vector<1x32xf32>
    %668 = arith.addf %666, %667 : vector<1x32xf32>
    %c5_361 = arith.constant 5 : index
    %c0_362 = arith.constant 0 : index
    %669 = vector.load %arg24[%c5_361, %c0_362] : memref<8x32xf32, #tpu.memory_space<vmem>>, vector<1x32xf32>
    tpu.vector_store %arg24[%c5_361, %c0_362], %668 {strides = array<i32>} : memref<8x32xf32, #tpu.memory_space<vmem>>, vector<1x32xf32>,
    %670 = arith.truncf %668 : vector<1x32xf32> to vector<1x32xbf16>
    %cst_363 = arith.constant dense<0.000000e+00> : vector<1x32xf32>
    %671 = tpu.matmul %670, %452, %cst_363 {dimension_numbers = #tpu.dot_dimension_numbers<[1], [0], [0], [1], [0, 0, 1, 1], [], []>} : vector<1x32xbf16>, vector<32x32xbf16>, vector<1x32xf32> -> vector<1x32xf32>
    %672 = arith.addf %671, %460 : vector<1x32xf32>
    %cst_364 = arith.constant dense<0.000000e+00> : vector<1x32xf32>
    %673 = tpu.matmul %670, %455, %cst_364 {dimension_numbers = #tpu.dot_dimension_numbers<[1], [0], [0], [1], [0, 0, 1, 1], [], []>} : vector<1x32xbf16>, vector<32x32xbf16>, vector<1x32xf32> -> vector<1x32xf32>
    %674 = arith.addf %673, %462 : vector<1x32xf32>
    %cst_365 = arith.constant dense<0.000000e+00> : vector<1x32xf32>
    %675 = tpu.matmul %670, %458, %cst_365 {dimension_numbers = #tpu.dot_dimension_numbers<[1], [0], [0], [1], [0, 0, 1, 1], [], []>} : vector<1x32xbf16>, vector<32x32xbf16>, vector<1x32xf32> -> vector<1x32xf32>
    %676 = arith.addf %675, %464 : vector<1x32xf32>
    %c0_366 = arith.constant 0 : index
    %c6_367 = arith.constant 6 : index
    %c0_368 = arith.constant 0 : index
    %677 = vector.load %arg23[%c0_366, %c6_367, %c0_368] : memref<3x8x32xf32, #tpu.memory_space<vmem>>, vector<1x1x32xf32>
    %678 = vector.shape_cast %677 : vector<1x1x32xf32> to vector<1x32xf32>
    %679 = arith.addf %678, %672 : vector<1x32xf32>
    %680 = arith.negf %679 : vector<1x32xf32>
    %681 = math.exp %680 : vector<1x32xf32>
    %cst_369 = arith.constant 1.000000e+00 : f32
    %682 = vector.broadcast %cst_369 : f32 to vector<1x32xf32>
    %683 = arith.addf %682, %681 : vector<1x32xf32>
    %684 = arith.divf %682, %683 : vector<1x32xf32>
    %c1_370 = arith.constant 1 : index
    %c6_371 = arith.constant 6 : index
    %c0_372 = arith.constant 0 : index
    %685 = vector.load %arg23[%c1_370, %c6_371, %c0_372] : memref<3x8x32xf32, #tpu.memory_space<vmem>>, vector<1x1x32xf32>
    %686 = vector.shape_cast %685 : vector<1x1x32xf32> to vector<1x32xf32>
    %687 = arith.addf %686, %674 : vector<1x32xf32>
    %688 = arith.negf %687 : vector<1x32xf32>
    %689 = math.exp %688 : vector<1x32xf32>
    %cst_373 = arith.constant 1.000000e+00 : f32
    %690 = vector.broadcast %cst_373 : f32 to vector<1x32xf32>
    %691 = arith.addf %690, %689 : vector<1x32xf32>
    %692 = arith.divf %690, %691 : vector<1x32xf32>
    %c2_374 = arith.constant 2 : index
    %c6_375 = arith.constant 6 : index
    %c0_376 = arith.constant 0 : index
    %693 = vector.load %arg23[%c2_374, %c6_375, %c0_376] : memref<3x8x32xf32, #tpu.memory_space<vmem>>, vector<1x1x32xf32>
    %694 = vector.shape_cast %693 : vector<1x1x32xf32> to vector<1x32xf32>
    %695 = arith.mulf %684, %676 : vector<1x32xf32>
    %696 = arith.addf %694, %695 : vector<1x32xf32>
    %697 = math.tanh %696 : vector<1x32xf32>
    %cst_377 = arith.constant 1.000000e+00 : f32
    %698 = vector.broadcast %cst_377 : f32 to vector<1x32xf32>
    %699 = arith.subf %698, %692 : vector<1x32xf32>
    %700 = arith.mulf %699, %697 : vector<1x32xf32>
    %701 = arith.mulf %692, %668 : vector<1x32xf32>
    %702 = arith.addf %700, %701 : vector<1x32xf32>
    %c6_378 = arith.constant 6 : index
    %c0_379 = arith.constant 0 : index
    %703 = vector.load %arg24[%c6_378, %c0_379] : memref<8x32xf32, #tpu.memory_space<vmem>>, vector<1x32xf32>
    tpu.vector_store %arg24[%c6_378, %c0_379], %702 {strides = array<i32>} : memref<8x32xf32, #tpu.memory_space<vmem>>, vector<1x32xf32>,
    %704 = arith.truncf %702 : vector<1x32xf32> to vector<1x32xbf16>
    %cst_380 = arith.constant dense<0.000000e+00> : vector<1x32xf32>
    %705 = tpu.matmul %704, %452, %cst_380 {dimension_numbers = #tpu.dot_dimension_numbers<[1], [0], [0], [1], [0, 0, 1, 1], [], []>} : vector<1x32xbf16>, vector<32x32xbf16>, vector<1x32xf32> -> vector<1x32xf32>
    %706 = arith.addf %705, %460 : vector<1x32xf32>
    %cst_381 = arith.constant dense<0.000000e+00> : vector<1x32xf32>
    %707 = tpu.matmul %704, %455, %cst_381 {dimension_numbers = #tpu.dot_dimension_numbers<[1], [0], [0], [1], [0, 0, 1, 1], [], []>} : vector<1x32xbf16>, vector<32x32xbf16>, vector<1x32xf32> -> vector<1x32xf32>
    %708 = arith.addf %707, %462 : vector<1x32xf32>
    %cst_382 = arith.constant dense<0.000000e+00> : vector<1x32xf32>
    %709 = tpu.matmul %704, %458, %cst_382 {dimension_numbers = #tpu.dot_dimension_numbers<[1], [0], [0], [1], [0, 0, 1, 1], [], []>} : vector<1x32xbf16>, vector<32x32xbf16>, vector<1x32xf32> -> vector<1x32xf32>
    %710 = arith.addf %709, %464 : vector<1x32xf32>
    %c0_383 = arith.constant 0 : index
    %c7_384 = arith.constant 7 : index
    %c0_385 = arith.constant 0 : index
    %711 = vector.load %arg23[%c0_383, %c7_384, %c0_385] : memref<3x8x32xf32, #tpu.memory_space<vmem>>, vector<1x1x32xf32>
    %712 = vector.shape_cast %711 : vector<1x1x32xf32> to vector<1x32xf32>
    %713 = arith.addf %712, %706 : vector<1x32xf32>
    %714 = arith.negf %713 : vector<1x32xf32>
    %715 = math.exp %714 : vector<1x32xf32>
    %cst_386 = arith.constant 1.000000e+00 : f32
    %716 = vector.broadcast %cst_386 : f32 to vector<1x32xf32>
    %717 = arith.addf %716, %715 : vector<1x32xf32>
    %718 = arith.divf %716, %717 : vector<1x32xf32>
    %c1_387 = arith.constant 1 : index
    %c7_388 = arith.constant 7 : index
    %c0_389 = arith.constant 0 : index
    %719 = vector.load %arg23[%c1_387, %c7_388, %c0_389] : memref<3x8x32xf32, #tpu.memory_space<vmem>>, vector<1x1x32xf32>
    %720 = vector.shape_cast %719 : vector<1x1x32xf32> to vector<1x32xf32>
    %721 = arith.addf %720, %708 : vector<1x32xf32>
    %722 = arith.negf %721 : vector<1x32xf32>
    %723 = math.exp %722 : vector<1x32xf32>
    %cst_390 = arith.constant 1.000000e+00 : f32
    %724 = vector.broadcast %cst_390 : f32 to vector<1x32xf32>
    %725 = arith.addf %724, %723 : vector<1x32xf32>
    %726 = arith.divf %724, %725 : vector<1x32xf32>
    %c2_391 = arith.constant 2 : index
    %c7_392 = arith.constant 7 : index
    %c0_393 = arith.constant 0 : index
    %727 = vector.load %arg23[%c2_391, %c7_392, %c0_393] : memref<3x8x32xf32, #tpu.memory_space<vmem>>, vector<1x1x32xf32>
    %728 = vector.shape_cast %727 : vector<1x1x32xf32> to vector<1x32xf32>
    %729 = arith.mulf %718, %710 : vector<1x32xf32>
    %730 = arith.addf %728, %729 : vector<1x32xf32>
    %731 = math.tanh %730 : vector<1x32xf32>
    %cst_394 = arith.constant 1.000000e+00 : f32
    %732 = vector.broadcast %cst_394 : f32 to vector<1x32xf32>
    %733 = arith.subf %732, %726 : vector<1x32xf32>
    %734 = arith.mulf %733, %731 : vector<1x32xf32>
    %735 = arith.mulf %726, %702 : vector<1x32xf32>
    %736 = arith.addf %734, %735 : vector<1x32xf32>
    %c7_395 = arith.constant 7 : index
    %c0_396 = arith.constant 0 : index
    %737 = vector.load %arg24[%c7_395, %c0_396] : memref<8x32xf32, #tpu.memory_space<vmem>>, vector<1x32xf32>
    tpu.vector_store %arg24[%c7_395, %c0_396], %736 {strides = array<i32>} : memref<8x32xf32, #tpu.memory_space<vmem>>, vector<1x32xf32>,
    %c0_397 = arith.constant 0 : index
    %c0_398 = arith.constant 0 : index
    %738 = vector.load %arg24[%c0_397, %c0_398] : memref<8x32xf32, #tpu.memory_space<vmem>>, vector<8x32xf32>
    %c0_399 = arith.constant 0 : index
    %c0_400 = arith.constant 0 : index
    %739 = vector.load %arg16[%c0_399, %c0_400] : memref<32x32xf32, #tpu.memory_space<vmem>>, vector<32x32xf32>
    %740 = arith.truncf %738 : vector<8x32xf32> to vector<8x32xbf16>
    %741 = arith.truncf %739 : vector<32x32xf32> to vector<32x32xbf16>
    %cst_401 = arith.constant dense<0.000000e+00> : vector<8x32xf32>
    %742 = tpu.matmul %740, %741, %cst_401 {dimension_numbers = #tpu.dot_dimension_numbers<[1], [0], [0], [1], [0, 0, 1, 1], [], []>} : vector<8x32xbf16>, vector<32x32xbf16>, vector<8x32xf32> -> vector<8x32xf32>
    %c0_402 = arith.constant 0 : index
    %c0_403 = arith.constant 0 : index
    %743 = vector.load %arg17[%c0_402, %c0_403] : memref<1x32xf32, #tpu.memory_space<vmem>>, vector<1x32xf32>
    %744 = vector.broadcast %743 : vector<1x32xf32> to vector<8x32xf32>
    %745 = arith.addf %742, %744 : vector<8x32xf32>
    %746 = vector.shape_cast %745 : vector<8x32xf32> to vector<1x8x32xf32>
    %747 = arith.addf %394, %746 : vector<1x8x32xf32>
    %cst_404 = arith.constant dense<0.000000e+00> : vector<1x8xf32>
    %748 = vector.multi_reduction <add>, %747, %cst_404 [2] : vector<1x8x32xf32> to vector<1x8xf32>
    %749 = vector.shape_cast %748 : vector<1x8xf32> to vector<1x8x1xf32>
    %cst_405 = arith.constant 3.200000e+01 : f32
    %750 = vector.broadcast %cst_405 : f32 to vector<1x8x1xf32>
    %751 = arith.divf %749, %750 : vector<1x8x1xf32>
    %752 = vector.broadcast %751 : vector<1x8x1xf32> to vector<1x8x32xf32>
    %753 = arith.subf %747, %752 : vector<1x8x32xf32>
    %754 = arith.mulf %753, %753 : vector<1x8x32xf32>
    %cst_406 = arith.constant dense<0.000000e+00> : vector<1x8xf32>
    %755 = vector.multi_reduction <add>, %754, %cst_406 [2] : vector<1x8x32xf32> to vector<1x8xf32>
    %756 = vector.shape_cast %755 : vector<1x8xf32> to vector<1x8x1xf32>
    %cst_407 = arith.constant 3.200000e+01 : f32
    %757 = vector.broadcast %cst_407 : f32 to vector<1x8x1xf32>
    %758 = arith.divf %756, %757 : vector<1x8x1xf32>
    %759 = vector.broadcast %751 : vector<1x8x1xf32> to vector<1x8x32xf32>
    %760 = arith.subf %747, %759 : vector<1x8x32xf32>
    %cst_408 = arith.constant 9.99999974E-6 : f32
    %761 = vector.broadcast %cst_408 : f32 to vector<1x8x1xf32>
    %762 = arith.addf %758, %761 : vector<1x8x1xf32>
    %763 = math.rsqrt %762 : vector<1x8x1xf32>
    %764 = vector.broadcast %763 : vector<1x8x1xf32> to vector<1x8x32xf32>
    %765 = arith.mulf %760, %764 : vector<1x8x32xf32>
    %766 = vector.shape_cast %765 : vector<1x8x32xf32> to vector<8x32xf32>
    %c0_409 = arith.constant 0 : index
    %c0_410 = arith.constant 0 : index
    %767 = vector.load %arg18[%c0_409, %c0_410] : memref<32x32xf32, #tpu.memory_space<vmem>>, vector<32x32xf32>
    %768 = arith.truncf %766 : vector<8x32xf32> to vector<8x32xbf16>
    %769 = arith.truncf %767 : vector<32x32xf32> to vector<32x32xbf16>
    %cst_411 = arith.constant dense<0.000000e+00> : vector<8x32xf32>
    %770 = tpu.matmul %768, %769, %cst_411 {dimension_numbers = #tpu.dot_dimension_numbers<[1], [0], [0], [1], [0, 0, 1, 1], [], []>} : vector<8x32xbf16>, vector<32x32xbf16>, vector<8x32xf32> -> vector<8x32xf32>
    %c0_412 = arith.constant 0 : index
    %c0_413 = arith.constant 0 : index
    %771 = vector.load %arg19[%c0_412, %c0_413] : memref<1x32xf32, #tpu.memory_space<vmem>>, vector<1x32xf32>
    %772 = vector.broadcast %771 : vector<1x32xf32> to vector<8x32xf32>
    %773 = arith.addf %770, %772 : vector<8x32xf32>
    %774 = arith.negf %773 : vector<8x32xf32>
    %775 = math.exp %774 : vector<8x32xf32>
    %cst_414 = arith.constant 1.000000e+00 : f32
    %776 = vector.broadcast %cst_414 : f32 to vector<8x32xf32>
    %777 = arith.addf %776, %775 : vector<8x32xf32>
    %778 = arith.divf %776, %777 : vector<8x32xf32>
    %779 = arith.mulf %773, %778 : vector<8x32xf32>
    %c0_415 = arith.constant 0 : index
    %c0_416 = arith.constant 0 : index
    %780 = vector.load %arg20[%c0_415, %c0_416] : memref<32x32xf32, #tpu.memory_space<vmem>>, vector<32x32xf32>
    %781 = arith.truncf %779 : vector<8x32xf32> to vector<8x32xbf16>
    %782 = arith.truncf %780 : vector<32x32xf32> to vector<32x32xbf16>
    %cst_417 = arith.constant dense<0.000000e+00> : vector<8x32xf32>
    %783 = tpu.matmul %781, %782, %cst_417 {dimension_numbers = #tpu.dot_dimension_numbers<[1], [0], [0], [1], [0, 0, 1, 1], [], []>} : vector<8x32xbf16>, vector<32x32xbf16>, vector<8x32xf32> -> vector<8x32xf32>
    %c0_418 = arith.constant 0 : index
    %c0_419 = arith.constant 0 : index
    %784 = vector.load %arg21[%c0_418, %c0_419] : memref<1x32xf32, #tpu.memory_space<vmem>>, vector<1x32xf32>
    %785 = vector.broadcast %784 : vector<1x32xf32> to vector<8x32xf32>
    %786 = arith.addf %783, %785 : vector<8x32xf32>
    %787 = vector.shape_cast %786 : vector<8x32xf32> to vector<1x8x32xf32>
    %788 = arith.addf %747, %787 : vector<1x8x32xf32>
    %c0_420 = arith.constant 0 : index
    %c0_421 = arith.constant 0 : index
    %c0_422 = arith.constant 0 : index
    %789 = vector.load %arg22[%c0_420, %c0_421, %c0_422] : memref<1x8x32xf32, #tpu.memory_space<vmem>>, vector<1x8x32xf32>
    tpu.vector_store %arg22[%c0_420, %c0_421, %c0_422], %788 {strides = array<i32>} : memref<1x8x32xf32, #tpu.memory_space<vmem>>, vector<1x8x32xf32>,
    return
  }
  func.func @transform_0(%arg0: i32) -> (i32, i32, i32) {
    %c0_i32 = arith.constant 0 : i32
    %c0_i32_0 = arith.constant 0 : i32
    %c0_i32_1 = arith.constant 0 : i32
    return %arg0, %c0_i32, %c0_i32_0 : i32, i32, i32
  }
  func.func @transform_1(%arg0: i32) -> (i32, i32, i32) {
    %c0_i32 = arith.constant 0 : i32
    %c0_i32_0 = arith.constant 0 : i32
    %c0_i32_1 = arith.constant 0 : i32
    %c0_i32_2 = arith.constant 0 : i32
    return %c0_i32, %c0_i32_0, %c0_i32_1 : i32, i32, i32
  }
  func.func @transform_2(%arg0: i32) -> (i32, i32, i32) {
    %c0_i32 = arith.constant 0 : i32
    %c0_i32_0 = arith.constant 0 : i32
    %c0_i32_1 = arith.constant 0 : i32
    %c0_i32_2 = arith.constant 0 : i32
    return %c0_i32, %c0_i32_0, %c0_i32_1 : i32, i32, i32
  }
  func.func @transform_3(%arg0: i32) -> (i32, i32, i32) {
    %c0_i32 = arith.constant 0 : i32
    %c0_i32_0 = arith.constant 0 : i32
    %c0_i32_1 = arith.constant 0 : i32
    %c0_i32_2 = arith.constant 0 : i32
    return %c0_i32, %c0_i32_0, %c0_i32_1 : i32, i32, i32
  }
  func.func @transform_4(%arg0: i32) -> (i32, i32, i32) {
    %c0_i32 = arith.constant 0 : i32
    %c0_i32_0 = arith.constant 0 : i32
    %c0_i32_1 = arith.constant 0 : i32
    %c0_i32_2 = arith.constant 0 : i32
    return %c0_i32, %c0_i32_0, %c0_i32_1 : i32, i32, i32
  }
  func.func @transform_5(%arg0: i32) -> (i32, i32) {
    %c0_i32 = arith.constant 0 : i32
    %c0_i32_0 = arith.constant 0 : i32
    %c0_i32_1 = arith.constant 0 : i32
    return %c0_i32, %c0_i32_0 : i32, i32
  }
  func.func @transform_6(%arg0: i32) -> (i32, i32) {
    %c0_i32 = arith.constant 0 : i32
    %c0_i32_0 = arith.constant 0 : i32
    %c0_i32_1 = arith.constant 0 : i32
    return %c0_i32, %c0_i32_0 : i32, i32
  }
  func.func @transform_7(%arg0: i32) -> (i32, i32) {
    %c0_i32 = arith.constant 0 : i32
    %c0_i32_0 = arith.constant 0 : i32
    %c0_i32_1 = arith.constant 0 : i32
    return %c0_i32, %c0_i32_0 : i32, i32
  }
  func.func @transform_8(%arg0: i32) -> (i32, i32) {
    %c0_i32 = arith.constant 0 : i32
    %c0_i32_0 = arith.constant 0 : i32
    %c0_i32_1 = arith.constant 0 : i32
    return %c0_i32, %c0_i32_0 : i32, i32
  }
  func.func @transform_9(%arg0: i32) -> (i32, i32) {
    %c0_i32 = arith.constant 0 : i32
    %c0_i32_0 = arith.constant 0 : i32
    %c0_i32_1 = arith.constant 0 : i32
    return %c0_i32, %c0_i32_0 : i32, i32
  }
  func.func @transform_10(%arg0: i32) -> (i32, i32) {
    %c0_i32 = arith.constant 0 : i32
    %c0_i32_0 = arith.constant 0 : i32
    %c0_i32_1 = arith.constant 0 : i32
    return %c0_i32, %c0_i32_0 : i32, i32
  }
  func.func @transform_11(%arg0: i32) -> (i32, i32, i32) {
    %c0_i32 = arith.constant 0 : i32
    %c0_i32_0 = arith.constant 0 : i32
    %c0_i32_1 = arith.constant 0 : i32
    %c0_i32_2 = arith.constant 0 : i32
    return %c0_i32, %c0_i32_0, %c0_i32_1 : i32, i32, i32
  }
  func.func @transform_12(%arg0: i32) -> (i32, i32, i32) {
    %c0_i32 = arith.constant 0 : i32
    %c0_i32_0 = arith.constant 0 : i32
    %c0_i32_1 = arith.constant 0 : i32
    %c0_i32_2 = arith.constant 0 : i32
    return %c0_i32, %c0_i32_0, %c0_i32_1 : i32, i32, i32
  }
  func.func @transform_13(%arg0: i32) -> (i32, i32, i32) {
    %c0_i32 = arith.constant 0 : i32
    %c0_i32_0 = arith.constant 0 : i32
    %c0_i32_1 = arith.constant 0 : i32
    %c0_i32_2 = arith.constant 0 : i32
    return %c0_i32, %c0_i32_0, %c0_i32_1 : i32, i32, i32
  }
  func.func @transform_14(%arg0: i32) -> (i32, i32, i32) {
    %c0_i32 = arith.constant 0 : i32
    %c0_i32_0 = arith.constant 0 : i32
    %c0_i32_1 = arith.constant 0 : i32
    %c0_i32_2 = arith.constant 0 : i32
    return %c0_i32, %c0_i32_0, %c0_i32_1 : i32, i32, i32
  }
  func.func @transform_15(%arg0: i32) -> (i32, i32) {
    %c0_i32 = arith.constant 0 : i32
    %c0_i32_0 = arith.constant 0 : i32
    %c0_i32_1 = arith.constant 0 : i32
    return %c0_i32, %c0_i32_0 : i32, i32
  }
  func.func @transform_16(%arg0: i32) -> (i32, i32) {
    %c0_i32 = arith.constant 0 : i32
    %c0_i32_0 = arith.constant 0 : i32
    %c0_i32_1 = arith.constant 0 : i32
    return %c0_i32, %c0_i32_0 : i32, i32
  }
  func.func @transform_17(%arg0: i32) -> (i32, i32) {
    %c0_i32 = arith.constant 0 : i32
    %c0_i32_0 = arith.constant 0 : i32
    %c0_i32_1 = arith.constant 0 : i32
    return %c0_i32, %c0_i32_0 : i32, i32
  }
  func.func @transform_18(%arg0: i32) -> (i32, i32) {
    %c0_i32 = arith.constant 0 : i32
    %c0_i32_0 = arith.constant 0 : i32
    %c0_i32_1 = arith.constant 0 : i32
    return %c0_i32, %c0_i32_0 : i32, i32
  }
  func.func @transform_19(%arg0: i32) -> (i32, i32) {
    %c0_i32 = arith.constant 0 : i32
    %c0_i32_0 = arith.constant 0 : i32
    %c0_i32_1 = arith.constant 0 : i32
    return %c0_i32, %c0_i32_0 : i32, i32
  }
  func.func @transform_20(%arg0: i32) -> (i32, i32) {
    %c0_i32 = arith.constant 0 : i32
    %c0_i32_0 = arith.constant 0 : i32
    %c0_i32_1 = arith.constant 0 : i32
    return %c0_i32, %c0_i32_0 : i32, i32
  }
  func.func @transform_21(%arg0: i32) -> (i32, i32, i32) {
    %c0_i32 = arith.constant 0 : i32
    %c0_i32_0 = arith.constant 0 : i32
    %c0_i32_1 = arith.constant 0 : i32
    return %arg0, %c0_i32, %c0_i32_0 : i32, i32, i32
  }
}

</mosaic_0001>

<llo_original>
// kernel: tpu_custom_call.1
$region0: #{tpu_custom_call.1}
  #allocation0 [shape = 'u32[]', space=smem, size = 0x4, offset = 0x4, fixed_abs, tag = 'smem constant byte address 0x4 - core index']
  #allocation1 [shape = 'u32[144,128]{1,0:T(1,128)}', space=vmem, size = 0x12000, scoped, tag = 'internal scratch']
  #allocation2 [shape = 'f32[3,8,32]{2,1,0:T(8,128)}', space=vmem, size = 0x3000, scoped, tag = 'scratch operand']
  #allocation3 [shape = 'f32[8,32]{1,0:T(8,128)}', space=vmem, size = 0x1000, scoped, tag = 'scratch operand']
  %s0 = inlined_call_operand.hbm [shape: f32[2,8,32], index: 0, kind: input, shape index: {}]
  %s1 = inlined_call_operand.hbm [shape: f32[3,32,32], index: 1, kind: input, shape index: {}]
  %s2 = inlined_call_operand.hbm [shape: f32[3,1,32], index: 2, kind: input, shape index: {}]
  %s3 = inlined_call_operand.hbm [shape: f32[3,32,32], index: 3, kind: input, shape index: {}]
  %s4 = inlined_call_operand.hbm [shape: f32[3,1,32], index: 4, kind: input, shape index: {}]
  %s5 = inlined_call_operand.hbm [shape: f32[32,32], index: 5, kind: input, shape index: {}]
  %s6 = inlined_call_operand.hbm [shape: f32[1,32], index: 6, kind: input, shape index: {}]
  %s7 = inlined_call_operand.hbm [shape: f32[32,32], index: 7, kind: input, shape index: {}]
  %s8 = inlined_call_operand.hbm [shape: f32[1,32], index: 8, kind: input, shape index: {}]
  %s9 = inlined_call_operand.vmem [shape: f32[32,32], index: 9, kind: input, shape index: {}]
  %s10 = inlined_call_operand.hbm [shape: f32[1,32], index: 10, kind: input, shape index: {}]
  %s11 = inlined_call_operand.hbm [shape: f32[3,32,32], index: 11, kind: input, shape index: {}]
  %s12 = inlined_call_operand.hbm [shape: f32[3,1,32], index: 12, kind: input, shape index: {}]
  %s13 = inlined_call_operand.hbm [shape: f32[3,32,32], index: 13, kind: input, shape index: {}]
  %s14 = inlined_call_operand.hbm [shape: f32[3,1,32], index: 14, kind: input, shape index: {}]
  %s15 = inlined_call_operand.hbm [shape: f32[32,32], index: 15, kind: input, shape index: {}]
  %s16 = inlined_call_operand.hbm [shape: f32[1,32], index: 16, kind: input, shape index: {}]
  %s17 = inlined_call_operand.vmem [shape: f32[32,32], index: 17, kind: input, shape index: {}]
  %s18 = inlined_call_operand.vmem [shape: f32[1,32], index: 18, kind: input, shape index: {}]
  %s19 = inlined_call_operand.hbm [shape: f32[32,32], index: 19, kind: input, shape index: {}]
  %s20 = inlined_call_operand.vmem [shape: f32[1,32], index: 20, kind: input, shape index: {}]
  %s21 = inlined_call_operand.hbm [shape: f32[2,8,32], index: 21, kind: output, shape index: {}]
  %s22 = sld [smem:[#allocation0]]
  $region185: #{tpu_custom_call.1} parent=0
    _
  %s24 = ssub.s32 1, %s22
  %s25 = scalar_select 0, %s24, %s22
  $region1: #{tpu_custom_call.1} parent=0
    #allocation4 [shape = 'u8[8192]{0}', space=vmem, size = 0x2000, scoped, tag = 'input window, operand 0']
    #allocation5 [shape = 's32[2]{0}', space=sflag, size = 0x8, scoped, tag = 'scoped memory for tpu_custom_call.1']
    #allocation6 [shape = 's32[2]{0}', space=sflag, size = 0x8, scoped, tag = 'scoped memory for tpu_custom_call.1']
    #allocation7 [shape = 'u8[49152]{0}', space=vmem, size = 0xc000, scoped, tag = 'input window, operand 1, single buffered']
    #allocation8 [shape = 's32[1]{0}', space=sflag, size = 0x4, scoped, tag = 'scoped memory for tpu_custom_call.1']
    #allocation9 [shape = 'u8[1536]{0}', space=vmem, size = 0x800, scoped, tag = 'input window, operand 2, single buffered']
    #allocation10 [shape = 'u8[49152]{0}', space=vmem, size = 0xc000, scoped, tag = 'input window, operand 3, single buffered']
    #allocation11 [shape = 's32[1]{0}', space=sflag, size = 0x4, scoped, tag = 'scoped memory for tpu_custom_call.1']
    #allocation12 [shape = 'u8[1536]{0}', space=vmem, size = 0x800, scoped, tag = 'input window, operand 4, single buffered']
    #allocation13 [shape = 'u8[16384]{0}', space=vmem, size = 0x4000, scoped, tag = 'input window, operand 5, single buffered']
    #allocation14 [shape = 's32[1]{0}', space=sflag, size = 0x4, scoped, tag = 'scoped memory for tpu_custom_call.1']
    #allocation15 [shape = 'u8[512]{0}', space=vmem, size = 0x400, scoped, tag = 'input window, operand 6, single buffered']
    #allocation16 [shape = 'u8[16384]{0}', space=vmem, size = 0x4000, scoped, tag = 'input window, operand 7, single buffered']
    #allocation17 [shape = 's32[1]{0}', space=sflag, size = 0x4, scoped, tag = 'scoped memory for tpu_custom_call.1']
    #allocation18 [shape = 'u8[512]{0}', space=vmem, size = 0x400, scoped, tag = 'input window, operand 8, single buffered']
    #allocation19 [shape = 'u8[512]{0}', space=vmem, size = 0x400, scoped, tag = 'input window, operand 10, single buffered']
    #allocation20 [shape = 's32[1]{0}', space=sflag, size = 0x4, scoped, tag = 'scoped memory for tpu_custom_call.1']
    #allocation21 [shape = 'u8[49152]{0}', space=vmem, size = 0xc000, scoped, tag = 'input window, operand 11, single buffered']
    #allocation22 [shape = 'u8[1536]{0}', space=vmem, size = 0x800, scoped, tag = 'input window, operand 12, single buffered']
    #allocation23 [shape = 's32[1]{0}', space=sflag, size = 0x4, scoped, tag = 'scoped memory for tpu_custom_call.1']
    #allocation24 [shape = 'u8[49152]{0}', space=vmem, size = 0xc000, scoped, tag = 'input window, operand 13, single buffered']
    #allocation25 [shape = 'u8[1536]{0}', space=vmem, size = 0x800, scoped, tag = 'input window, operand 14, single buffered']
    #allocation26 [shape = 's32[1]{0}', space=sflag, size = 0x4, scoped, tag = 'scoped memory for tpu_custom_call.1']
    #allocation27 [shape = 'u8[16384]{0}', space=vmem, size = 0x4000, scoped, tag = 'input window, operand 15, single buffered']
    #allocation28 [shape = 'u8[512]{0}', space=vmem, size = 0x400, scoped, tag = 'input window, operand 16, single buffered']
    #allocation29 [shape = 's32[1]{0}', space=sflag, size = 0x4, scoped, tag = 'scoped memory for tpu_custom_call.1']
    #allocation30 [shape = 'u8[16384]{0}', space=vmem, size = 0x4000, scoped, tag = 'input window, operand 19, single buffered']
    #allocation31 [shape = 'u8[8192]{0}', space=vmem, size = 0x2000, scoped, tag = 'output window, operand 0']
    %26 = vsyncpa [#allocation5], 0
    %s27 = scalar_lea.sflag [#allocation5], 1
    %28 = vsyncpa %s27, 0
    %29 = vsyncpa [#allocation8], 0
    %30 = vsyncpa [#allocation11], 0
    %31 = vsyncpa [#allocation14], 0
    %32 = vsyncpa [#allocation17], 0
    %33 = vsyncpa [#allocation20], 0
    %34 = vsyncpa [#allocation23], 0
    %35 = vsyncpa [#allocation26], 0
    %36 = vsyncpa [#allocation29], 0
    %37 = vsyncpa [#allocation6], 0
    %s38 = scalar_lea.sflag [#allocation6], 1
    %39 = vsyncpa %s38, 0
    loop: start=0, step=1, limit=4
    $region2: #{tpu_custom_call.1} parent=1 // loop_pre_header
      _
    $region3: #{tpu_custom_call.1} parent=1 // loop_header
      %s41 = sphi 0, %s45
      %p42 = scmp.ge.s32.totalorder %s41, 4
      %s51 = sphi 0, %s53
      %s54 = sphi 0, %s51
      %s55 = sphi 0, %s54
      %s71 = sphi 0, %s55
      %s75 = sphi 0, %s75
      %s77 = sphi 0, %s75
      %s78 = sphi 0, %s77
      %s92 = sphi 0, %s78
      %s96 = sphi 0, %s96
      %s98 = sphi 0, %s96
      %s99 = sphi 0, %s98
      %s113 = sphi 0, %s99
      %s117 = sphi 0, %s117
      %s119 = sphi 0, %s117
      %s120 = sphi 0, %s119
      %s134 = sphi 0, %s120
      %s138 = sphi 0, %s138
      %s140 = sphi 0, %s138
      %s141 = sphi 0, %s140
      %s155 = sphi 0, %s141
      %s159 = sphi 0, %s159
      %s161 = sphi 0, %s159
      %s162 = sphi 0, %s161
      %s176 = sphi 0, %s162
      %s180 = sphi 0, %s180
      %s182 = sphi 0, %s180
      %s183 = sphi 0, %s182
      %s197 = sphi 0, %s183
      %s201 = sphi 0, %s201
      %s203 = sphi 0, %s201
      %s204 = sphi 0, %s203
      %s218 = sphi 0, %s204
      %s222 = sphi 0, %s222
      %s224 = sphi 0, %s222
      %s225 = sphi 0, %s224
      %s239 = sphi 0, %s225
      %s243 = sphi 0, %s243
      %s245 = sphi 0, %s243
      %s246 = sphi 0, %s245
      %s260 = sphi 0, %s246
      %s264 = sphi 0, %s264
      %s266 = sphi 0, %s264
      %s267 = sphi 0, %s266
      %s281 = sphi 0, %s267
      %s285 = sphi 0, %s285
      %s287 = sphi 0, %s285
      %s288 = sphi 0, %s287
      %s302 = sphi 0, %s288
      %s306 = sphi 0, %s306
      %s308 = sphi 0, %s306
      %s309 = sphi 0, %s308
      %s323 = sphi 0, %s309
      %s327 = sphi 0, %s327
      %s329 = sphi 0, %s327
      %s330 = sphi 0, %s329
      %s344 = sphi 0, %s330
      %s348 = sphi 0, %s348
      %s350 = sphi 0, %s348
      %s351 = sphi 0, %s350
      %s365 = sphi 0, %s351
      %s369 = sphi 0, %s369
      %s371 = sphi 0, %s369
      %s372 = sphi 0, %s371
      %s386 = sphi 0, %s372
      %s390 = sphi 0, %s390
      %s392 = sphi 0, %s390
      %s393 = sphi 0, %s392
      %s407 = sphi 0, %s393
      %s411 = sphi 0, %s411
      %s413 = sphi 0, %s411
      %s414 = sphi 0, %s413
      %s428 = sphi 0, %s414
      %s432 = sphi 0, %s432
      %s434 = sphi 0, %s432
      %s435 = sphi 0, %s434
      %s449 = sphi 0, %s435
      %s453 = sphi 0, %s453
      %s455 = sphi 0, %s453
      %s456 = sphi 0, %s455
      %s470 = sphi 0, %s456
      %s474 = sphi 0, %s474
      %s476 = sphi 0, %s474
      %s477 = sphi 0, %s476
      %s491 = sphi 0, %s477
      %s497 = sphi 0, %s499
      %s500 = sphi 0, %s497
      %s501 = sphi 0, %s500
      %s517 = sphi 0, %s501
    $region4: #{tpu_custom_call.1} parent=1 // loop_header_branch
      %44 = sbr.rel (%p42) target = $region8
    $region5: #{tpu_custom_call.1} parent=1 // loop_body
      %s46 = ssub.s32 %s41, 1
      %s47 = ssub.s32 %s41, 2
      %s48 = sadd.s32 %s41, 1
      %s49 = ssub.s32 %s41, %s48
      %p50 = scmp.eq.s32.totalorder %s49, 0
      %s52 = sadd.s32 %s51, 1
      %s53 = scalar_select %p50, %s51, %s52
      %p56 = pneg %p50
      %p57 = scmp.eq.s32.totalorder %s41, 1
      %p58 = por %p56, %p57
      %p59 = scmp.ne.s32.totalorder %s51, %s54
      %p60 = scmp.eq.s32.totalorder %s41, 0
      %p61 = por %p59, %p60
      %p62 = scmp.ne.s32.totalorder %s51, %s54
      %p63 = scmp.eq.s32.totalorder %s46, 1
      %p64 = por %p62, %p63
      %p65 = scmp.ne.s32.totalorder %s54, %s55
      %p66 = scmp.eq.s32.totalorder %s46, 0
      %p67 = por %p65, %p66
      %p68 = scmp.ne.s32.totalorder %s54, %s55
      %p69 = scmp.eq.s32.totalorder %s47, 1
      %p70 = por %p68, %p69
      %p72 = scmp.ne.s32.totalorder %s55, %s71
      %p73 = scmp.eq.s32.totalorder %s47, 0
      %p74 = por %p72, %p73
      %s76 = sadd.s32 %s75, 1
      %p79 = scmp.eq.s32.totalorder %s41, 1
      %p80 = scmp.ne.s32.totalorder %s75, %s77
      %p81 = scmp.eq.s32.totalorder %s41, 0
      %p82 = por %p80, %p81
      %p83 = scmp.ne.s32.totalorder %s75, %s77
      %p84 = scmp.eq.s32.totalorder %s46, 1
      %p85 = por %p83, %p84
      %p86 = scmp.ne.s32.totalorder %s77, %s78
      %p87 = scmp.eq.s32.totalorder %s46, 0
      %p88 = por %p86, %p87
      %p89 = scmp.ne.s32.totalorder %s77, %s78
      %p90 = scmp.eq.s32.totalorder %s47, 1
      %p91 = por %p89, %p90
      %p93 = scmp.ne.s32.totalorder %s78, %s92
      %p94 = scmp.eq.s32.totalorder %s47, 0
      %p95 = por %p93, %p94
      %s97 = sadd.s32 %s96, 1
      %p100 = scmp.eq.s32.totalorder %s41, 1
      %p101 = scmp.ne.s32.totalorder %s96, %s98
      %p102 = scmp.eq.s32.totalorder %s41, 0
      %p103 = por %p101, %p102
      %p104 = scmp.ne.s32.totalorder %s96, %s98
      %p105 = scmp.eq.s32.totalorder %s46, 1
      %p106 = por %p104, %p105
      %p107 = scmp.ne.s32.totalorder %s98, %s99
      %p108 = scmp.eq.s32.totalorder %s46, 0
      %p109 = por %p107, %p108
      %p110 = scmp.ne.s32.totalorder %s98, %s99
      %p111 = scmp.eq.s32.totalorder %s47, 1
      %p112 = por %p110, %p111
      %p114 = scmp.ne.s32.totalorder %s99, %s113
      %p115 = scmp.eq.s32.totalorder %s47, 0
      %p116 = por %p114, %p115
      %s118 = sadd.s32 %s117, 1
      %p121 = scmp.eq.s32.totalorder %s41, 1
      %p122 = scmp.ne.s32.totalorder %s117, %s119
      %p123 = scmp.eq.s32.totalorder %s41, 0
      %p124 = por %p122, %p123
      %p125 = scmp.ne.s32.totalorder %s117, %s119
      %p126 = scmp.eq.s32.totalorder %s46, 1
      %p127 = por %p125, %p126
      %p128 = scmp.ne.s32.totalorder %s119, %s120
      %p129 = scmp.eq.s32.totalorder %s46, 0
      %p130 = por %p128, %p129
      %p131 = scmp.ne.s32.totalorder %s119, %s120
      %p132 = scmp.eq.s32.totalorder %s47, 1
      %p133 = por %p131, %p132
      %p135 = scmp.ne.s32.totalorder %s120, %s134
      %p136 = scmp.eq.s32.totalorder %s47, 0
      %p137 = por %p135, %p136
      %s139 = sadd.s32 %s138, 1
      %p142 = scmp.eq.s32.totalorder %s41, 1
      %p143 = scmp.ne.s32.totalorder %s138, %s140
      %p144 = scmp.eq.s32.totalorder %s41, 0
      %p145 = por %p143, %p144
      %p146 = scmp.ne.s32.totalorder %s138, %s140
      %p147 = scmp.eq.s32.totalorder %s46, 1
      %p148 = por %p146, %p147
      %p149 = scmp.ne.s32.totalorder %s140, %s141
      %p150 = scmp.eq.s32.totalorder %s46, 0
      %p151 = por %p149, %p150
      %p152 = scmp.ne.s32.totalorder %s140, %s141
      %p153 = scmp.eq.s32.totalorder %s47, 1
      %p154 = por %p152, %p153
      %p156 = scmp.ne.s32.totalorder %s141, %s155
      %p157 = scmp.eq.s32.totalorder %s47, 0
      %p158 = por %p156, %p157
      %s160 = sadd.s32 %s159, 1
      %p163 = scmp.eq.s32.totalorder %s41, 1
      %p164 = scmp.ne.s32.totalorder %s159, %s161
      %p165 = scmp.eq.s32.totalorder %s41, 0
      %p166 = por %p164, %p165
      %p167 = scmp.ne.s32.totalorder %s159, %s161
      %p168 = scmp.eq.s32.totalorder %s46, 1
      %p169 = por %p167, %p168
      %p170 = scmp.ne.s32.totalorder %s161, %s162
      %p171 = scmp.eq.s32.totalorder %s46, 0
      %p172 = por %p170, %p171
      %p173 = scmp.ne.s32.totalorder %s161, %s162
      %p174 = scmp.eq.s32.totalorder %s47, 1
      %p175 = por %p173, %p174
      %p177 = scmp.ne.s32.totalorder %s162, %s176
      %p178 = scmp.eq.s32.totalorder %s47, 0
      %p179 = por %p177, %p178
      %s181 = sadd.s32 %s180, 1
      %p184 = scmp.eq.s32.totalorder %s41, 1
      %p185 = scmp.ne.s32.totalorder %s180, %s182
      %p186 = scmp.eq.s32.totalorder %s41, 0
      %p187 = por %p185, %p186
      %p188 = scmp.ne.s32.totalorder %s180, %s182
      %p189 = scmp.eq.s32.totalorder %s46, 1
      %p190 = por %p188, %p189
      %p191 = scmp.ne.s32.totalorder %s182, %s183
      %p192 = scmp.eq.s32.totalorder %s46, 0
      %p193 = por %p191, %p192
      %p194 = scmp.ne.s32.totalorder %s182, %s183
      %p195 = scmp.eq.s32.totalorder %s47, 1
      %p196 = por %p194, %p195
      %p198 = scmp.ne.s32.totalorder %s183, %s197
      %p199 = scmp.eq.s32.totalorder %s47, 0
      %p200 = por %p198, %p199
      %s202 = sadd.s32 %s201, 1
      %p205 = scmp.eq.s32.totalorder %s41, 1
      %p206 = scmp.ne.s32.totalorder %s201, %s203
      %p207 = scmp.eq.s32.totalorder %s41, 0
      %p208 = por %p206, %p207
      %p209 = scmp.ne.s32.totalorder %s201, %s203
      %p210 = scmp.eq.s32.totalorder %s46, 1
      %p211 = por %p209, %p210
      %p212 = scmp.ne.s32.totalorder %s203, %s204
      %p213 = scmp.eq.s32.totalorder %s46, 0
      %p214 = por %p212, %p213
      %p215 = scmp.ne.s32.totalorder %s203, %s204
      %p216 = scmp.eq.s32.totalorder %s47, 1
      %p217 = por %p215, %p216
      %p219 = scmp.ne.s32.totalorder %s204, %s218
      %p220 = scmp.eq.s32.totalorder %s47, 0
      %p221 = por %p219, %p220
      %s223 = sadd.s32 %s222, 1
      %p226 = scmp.eq.s32.totalorder %s41, 1
      %p227 = scmp.ne.s32.totalorder %s222, %s224
      %p228 = scmp.eq.s32.totalorder %s41, 0
      %p229 = por %p227, %p228
      %p230 = scmp.ne.s32.totalorder %s222, %s224
      %p231 = scmp.eq.s32.totalorder %s46, 1
      %p232 = por %p230, %p231
      %p233 = scmp.ne.s32.totalorder %s224, %s225
      %p234 = scmp.eq.s32.totalorder %s46, 0
      %p235 = por %p233, %p234
      %p236 = scmp.ne.s32.totalorder %s224, %s225
      %p237 = scmp.eq.s32.totalorder %s47, 1
      %p238 = por %p236, %p237
      %p240 = scmp.ne.s32.totalorder %s225, %s239
      %p241 = scmp.eq.s32.totalorder %s47, 0
      %p242 = por %p240, %p241
      %s244 = sadd.s32 %s243, 1
      %p247 = scmp.eq.s32.totalorder %s41, 1
      %p248 = scmp.ne.s32.totalorder %s243, %s245
      %p249 = scmp.eq.s32.totalorder %s41, 0
      %p250 = por %p248, %p249
      %p251 = scmp.ne.s32.totalorder %s243, %s245
      %p252 = scmp.eq.s32.totalorder %s46, 1
      %p253 = por %p251, %p252
      %p254 = scmp.ne.s32.totalorder %s245, %s246
      %p255 = scmp.eq.s32.totalorder %s46, 0
      %p256 = por %p254, %p255
      %p257 = scmp.ne.s32.totalorder %s245, %s246
      %p258 = scmp.eq.s32.totalorder %s47, 1
      %p259 = por %p257, %p258
      %p261 = scmp.ne.s32.totalorder %s246, %s260
      %p262 = scmp.eq.s32.totalorder %s47, 0
      %p263 = por %p261, %p262
      %s265 = sadd.s32 %s264, 1
      %p268 = scmp.eq.s32.totalorder %s41, 1
      %p269 = scmp.ne.s32.totalorder %s264, %s266
      %p270 = scmp.eq.s32.totalorder %s41, 0
      %p271 = por %p269, %p270
      %p272 = scmp.ne.s32.totalorder %s264, %s266
      %p273 = scmp.eq.s32.totalorder %s46, 1
      %p274 = por %p272, %p273
      %p275 = scmp.ne.s32.totalorder %s266, %s267
      %p276 = scmp.eq.s32.totalorder %s46, 0
      %p277 = por %p275, %p276
      %p278 = scmp.ne.s32.totalorder %s266, %s267
      %p279 = scmp.eq.s32.totalorder %s47, 1
      %p280 = por %p278, %p279
      %p282 = scmp.ne.s32.totalorder %s267, %s281
      %p283 = scmp.eq.s32.totalorder %s47, 0
      %p284 = por %p282, %p283
      %s286 = sadd.s32 %s285, 1
      %p289 = scmp.eq.s32.totalorder %s41, 1
      %p290 = scmp.ne.s32.totalorder %s285, %s287
      %p291 = scmp.eq.s32.totalorder %s41, 0
      %p292 = por %p290, %p291
      %p293 = scmp.ne.s32.totalorder %s285, %s287
      %p294 = scmp.eq.s32.totalorder %s46, 1
      %p295 = por %p293, %p294
      %p296 = scmp.ne.s32.totalorder %s287, %s288
      %p297 = scmp.eq.s32.totalorder %s46, 0
      %p298 = por %p296, %p297
      %p299 = scmp.ne.s32.totalorder %s287, %s288
      %p300 = scmp.eq.s32.totalorder %s47, 1
      %p301 = por %p299, %p300
      %p303 = scmp.ne.s32.totalorder %s288, %s302
      %p304 = scmp.eq.s32.totalorder %s47, 0
      %p305 = por %p303, %p304
      %s307 = sadd.s32 %s306, 1
      %p310 = scmp.eq.s32.totalorder %s41, 1
      %p311 = scmp.ne.s32.totalorder %s306, %s308
      %p312 = scmp.eq.s32.totalorder %s41, 0
      %p313 = por %p311, %p312
      %p314 = scmp.ne.s32.totalorder %s306, %s308
      %p315 = scmp.eq.s32.totalorder %s46, 1
      %p316 = por %p314, %p315
      %p317 = scmp.ne.s32.totalorder %s308, %s309
      %p318 = scmp.eq.s32.totalorder %s46, 0
      %p319 = por %p317, %p318
      %p320 = scmp.ne.s32.totalorder %s308, %s309
      %p321 = scmp.eq.s32.totalorder %s47, 1
      %p322 = por %p320, %p321
      %p324 = scmp.ne.s32.totalorder %s309, %s323
      %p325 = scmp.eq.s32.totalorder %s47, 0
      %p326 = por %p324, %p325
      %s328 = sadd.s32 %s327, 1
      %p331 = scmp.eq.s32.totalorder %s41, 1
      %p332 = scmp.ne.s32.totalorder %s327, %s329
      %p333 = scmp.eq.s32.totalorder %s41, 0
      %p334 = por %p332, %p333
      %p335 = scmp.ne.s32.totalorder %s327, %s329
      %p336 = scmp.eq.s32.totalorder %s46, 1
      %p337 = por %p335, %p336
      %p338 = scmp.ne.s32.totalorder %s329, %s330
      %p339 = scmp.eq.s32.totalorder %s46, 0
      %p340 = por %p338, %p339
      %p341 = scmp.ne.s32.totalorder %s329, %s330
      %p342 = scmp.eq.s32.totalorder %s47, 1
      %p343 = por %p341, %p342
      %p345 = scmp.ne.s32.totalorder %s330, %s344
      %p346 = scmp.eq.s32.totalorder %s47, 0
      %p347 = por %p345, %p346
      %s349 = sadd.s32 %s348, 1
      %p352 = scmp.eq.s32.totalorder %s41, 1
      %p353 = scmp.ne.s32.totalorder %s348, %s350
      %p354 = scmp.eq.s32.totalorder %s41, 0
      %p355 = por %p353, %p354
      %p356 = scmp.ne.s32.totalorder %s348, %s350
      %p357 = scmp.eq.s32.totalorder %s46, 1
      %p358 = por %p356, %p357
      %p359 = scmp.ne.s32.totalorder %s350, %s351
      %p360 = scmp.eq.s32.totalorder %s46, 0
      %p361 = por %p359, %p360
      %p362 = scmp.ne.s32.totalorder %s350, %s351
      %p363 = scmp.eq.s32.totalorder %s47, 1
      %p364 = por %p362, %p363
      %p366 = scmp.ne.s32.totalorder %s351, %s365
      %p367 = scmp.eq.s32.totalorder %s47, 0
      %p368 = por %p366, %p367
      %s370 = sadd.s32 %s369, 1
      %p373 = scmp.eq.s32.totalorder %s41, 1
      %p374 = scmp.ne.s32.totalorder %s369, %s371
      %p375 = scmp.eq.s32.totalorder %s41, 0
      %p376 = por %p374, %p375
      %p377 = scmp.ne.s32.totalorder %s369, %s371
      %p378 = scmp.eq.s32.totalorder %s46, 1
      %p379 = por %p377, %p378
      %p380 = scmp.ne.s32.totalorder %s371, %s372
      %p381 = scmp.eq.s32.totalorder %s46, 0
      %p382 = por %p380, %p381
      %p383 = scmp.ne.s32.totalorder %s371, %s372
      %p384 = scmp.eq.s32.totalorder %s47, 1
      %p385 = por %p383, %p384
      %p387 = scmp.ne.s32.totalorder %s372, %s386
      %p388 = scmp.eq.s32.totalorder %s47, 0
      %p389 = por %p387, %p388
      %s391 = sadd.s32 %s390, 1
      %p394 = scmp.eq.s32.totalorder %s41, 1
      %p395 = scmp.ne.s32.totalorder %s390, %s392
      %p396 = scmp.eq.s32.totalorder %s41, 0
      %p397 = por %p395, %p396
      %p398 = scmp.ne.s32.totalorder %s390, %s392
      %p399 = scmp.eq.s32.totalorder %s46, 1
      %p400 = por %p398, %p399
      %p401 = scmp.ne.s32.totalorder %s392, %s393
      %p402 = scmp.eq.s32.totalorder %s46, 0
      %p403 = por %p401, %p402
      %p404 = scmp.ne.s32.totalorder %s392, %s393
      %p405 = scmp.eq.s32.totalorder %s47, 1
      %p406 = por %p404, %p405
      %p408 = scmp.ne.s32.totalorder %s393, %s407
      %p409 = scmp.eq.s32.totalorder %s47, 0
      %p410 = por %p408, %p409
      %s412 = sadd.s32 %s411, 1
      %p415 = scmp.eq.s32.totalorder %s41, 1
      %p416 = scmp.ne.s32.totalorder %s411, %s413
      %p417 = scmp.eq.s32.totalorder %s41, 0
      %p418 = por %p416, %p417
      %p419 = scmp.ne.s32.totalorder %s411, %s413
      %p420 = scmp.eq.s32.totalorder %s46, 1
      %p421 = por %p419, %p420
      %p422 = scmp.ne.s32.totalorder %s413, %s414
      %p423 = scmp.eq.s32.totalorder %s46, 0
      %p424 = por %p422, %p423
      %p425 = scmp.ne.s32.totalorder %s413, %s414
      %p426 = scmp.eq.s32.totalorder %s47, 1
      %p427 = por %p425, %p426
      %p429 = scmp.ne.s32.totalorder %s414, %s428
      %p430 = scmp.eq.s32.totalorder %s47, 0
      %p431 = por %p429, %p430
      %s433 = sadd.s32 %s432, 1
      %p436 = scmp.eq.s32.totalorder %s41, 1
      %p437 = scmp.ne.s32.totalorder %s432, %s434
      %p438 = scmp.eq.s32.totalorder %s41, 0
      %p439 = por %p437, %p438
      %p440 = scmp.ne.s32.totalorder %s432, %s434
      %p441 = scmp.eq.s32.totalorder %s46, 1
      %p442 = por %p440, %p441
      %p443 = scmp.ne.s32.totalorder %s434, %s435
      %p444 = scmp.eq.s32.totalorder %s46, 0
      %p445 = por %p443, %p444
      %p446 = scmp.ne.s32.totalorder %s434, %s435
      %p447 = scmp.eq.s32.totalorder %s47, 1
      %p448 = por %p446, %p447
      %p450 = scmp.ne.s32.totalorder %s435, %s449
      %p451 = scmp.eq.s32.totalorder %s47, 0
      %p452 = por %p450, %p451
      %s454 = sadd.s32 %s453, 1
      %p457 = scmp.eq.s32.totalorder %s41, 1
      %p458 = scmp.ne.s32.totalorder %s453, %s455
      %p459 = scmp.eq.s32.totalorder %s41, 0
      %p460 = por %p458, %p459
      %p461 = scmp.ne.s32.totalorder %s453, %s455
      %p462 = scmp.eq.s32.totalorder %s46, 1
      %p463 = por %p461, %p462
      %p464 = scmp.ne.s32.totalorder %s455, %s456
      %p465 = scmp.eq.s32.totalorder %s46, 0
      %p466 = por %p464, %p465
      %p467 = scmp.ne.s32.totalorder %s455, %s456
      %p468 = scmp.eq.s32.totalorder %s47, 1
      %p469 = por %p467, %p468
      %p471 = scmp.ne.s32.totalorder %s456, %s470
      %p472 = scmp.eq.s32.totalorder %s47, 0
      %p473 = por %p471, %p472
      %s475 = sadd.s32 %s474, 1
      %p478 = scmp.eq.s32.totalorder %s41, 1
      %p479 = scmp.ne.s32.totalorder %s474, %s476
      %p480 = scmp.eq.s32.totalorder %s41, 0
      %p481 = por %p479, %p480
      %p482 = scmp.ne.s32.totalorder %s474, %s476
      %p483 = scmp.eq.s32.totalorder %s46, 1
      %p484 = por %p482, %p483
      %p485 = scmp.ne.s32.totalorder %s476, %s477
      %p486 = scmp.eq.s32.totalorder %s46, 0
      %p487 = por %p485, %p486
      %p488 = scmp.ne.s32.totalorder %s476, %s477
      %p489 = scmp.eq.s32.totalorder %s47, 1
      %p490 = por %p488, %p489
      %p492 = scmp.ne.s32.totalorder %s477, %s491
      %p493 = scmp.eq.s32.totalorder %s47, 0
      %p494 = por %p492, %p493
      %s495 = ssub.s32 %s41, %s48
      %p496 = scmp.eq.s32.totalorder %s495, 0
      %s498 = sadd.s32 %s497, 1
      %s499 = scalar_select %p496, %s497, %s498
      %p502 = pneg %p496
      %p503 = scmp.eq.s32.totalorder %s41, 1
      %p504 = por %p502, %p503
      %p505 = scmp.ne.s32.totalorder %s497, %s500
      %p506 = scmp.eq.s32.totalorder %s41, 0
      %p507 = por %p505, %p506
      %p508 = scmp.ne.s32.totalorder %s497, %s500
      %p509 = scmp.eq.s32.totalorder %s46, 1
      %p510 = por %p508, %p509
      %p511 = scmp.ne.s32.totalorder %s500, %s501
      %p512 = scmp.eq.s32.totalorder %s46, 0
      %p513 = por %p511, %p512
      %p514 = scmp.ne.s32.totalorder %s500, %s501
      %p515 = scmp.eq.s32.totalorder %s47, 1
      %p516 = por %p514, %p515
      %p518 = scmp.ne.s32.totalorder %s501, %s517
      %p519 = scmp.eq.s32.totalorder %s47, 0
      %p520 = por %p518, %p519
      %p521 = scmp.le.s32.totalorder 1, %s41
      %p522 = scmp.lt.s32.totalorder %s41, 3
      %p523 = pnand %p521, %p522
      %p524 = pneg %p523
      // Predicated region
      $region9: #{tpu_custom_call.1} parent=5 // pred_check
        _
      $region10: #{tpu_custom_call.1} parent=5 // pred_check_branch
        %526 = sbr.rel (%p523) target = $region12
      $region11: #{tpu_custom_call.1} parent=5 // pred_region
        %s527 = ssub.s32 %s41, 1
        // Predicated region
        $region13: #{tpu_custom_call.1} parent=11 // pred_check
          %p528 = pneg %p88
        $region14: #{tpu_custom_call.1} parent=11 // pred_check_branch
          %530 = sbr.rel (%p528) target = $region16
        $region15: #{tpu_custom_call.1} parent=11 // pred_region
          %s532 = ssub.s32 1536, 1536
          %533 = vsyncadd [#allocation8], %s532
          %s534 = sshll.u32 [#allocation7], 4
          %s535 = int_to_ptr.vmem [resolvable:$true] %s534
          %540 = dma.hbm_to_vmem [thread:$0]  %s1, 1536, %s535, [#allocation8], 128, 128, 8
        $region16: #{tpu_custom_call.1} parent=11 // pred_fallthru
          _
        // Predicated region
        $region17: #{tpu_custom_call.1} parent=11 // pred_check
          %p541 = pneg %p109
        $region18: #{tpu_custom_call.1} parent=11 // pred_check_branch
          %543 = sbr.rel (%p541) target = $region20
        $region19: #{tpu_custom_call.1} parent=11 // pred_region
          %s545 = ssub.s32 48, 48
          %546 = vsyncadd [#allocation8], %s545
          %s547 = sshll.u32 [#allocation9], 4
          %s548 = int_to_ptr.vmem [resolvable:$true] %s547
          %553 = dma.hbm_to_vmem [thread:$0]  %s2, 48, %s548, [#allocation8], 16, 16, 1
        $region20: #{tpu_custom_call.1} parent=11 // pred_fallthru
          _
        // Predicated region
        $region21: #{tpu_custom_call.1} parent=11 // pred_check
          %p554 = pneg %p130
        $region22: #{tpu_custom_call.1} parent=11 // pred_check_branch
          %556 = sbr.rel (%p554) target = $region24
        $region23: #{tpu_custom_call.1} parent=11 // pred_region
          %s558 = ssub.s32 1536, 1536
          %559 = vsyncadd [#allocation11], %s558
          %s560 = sshll.u32 [#allocation10], 4
          %s561 = int_to_ptr.vmem [resolvable:$true] %s560
          %566 = dma.hbm_to_vmem [thread:$0]  %s3, 1536, %s561, [#allocation11], 128, 128, 8
        $region24: #{tpu_custom_call.1} parent=11 // pred_fallthru
          _
        // Predicated region
        $region25: #{tpu_custom_call.1} parent=11 // pred_check
          %p567 = pneg %p151
        $region26: #{tpu_custom_call.1} parent=11 // pred_check_branch
          %569 = sbr.rel (%p567) target = $region28
        $region27: #{tpu_custom_call.1} parent=11 // pred_region
          %s571 = ssub.s32 48, 48
          %572 = vsyncadd [#allocation11], %s571
          %s573 = sshll.u32 [#allocation12], 4
          %s574 = int_to_ptr.vmem [resolvable:$true] %s573
          %579 = dma.hbm_to_vmem [thread:$0]  %s4, 48, %s574, [#allocation11], 16, 16, 1
        $region28: #{tpu_custom_call.1} parent=11 // pred_fallthru
          _
        // Predicated region
        $region29: #{tpu_custom_call.1} parent=11 // pred_check
          %p580 = pneg %p172
        $region30: #{tpu_custom_call.1} parent=11 // pred_check_branch
          %582 = sbr.rel (%p580) target = $region32
        $region31: #{tpu_custom_call.1} parent=11 // pred_region
          %s584 = ssub.s32 512, 512
          %585 = vsyncadd [#allocation14], %s584
          %s586 = sshll.u32 [#allocation13], 4
          %s587 = int_to_ptr.vmem [resolvable:$true] %s586
          %592 = dma.hbm_to_vmem [thread:$0]  %s5, 512, %s587, [#allocation14], 128, 128, 8
        $region32: #{tpu_custom_call.1} parent=11 // pred_fallthru
          _
        // Predicated region
        $region33: #{tpu_custom_call.1} parent=11 // pred_check
          %p593 = pneg %p193
        $region34: #{tpu_custom_call.1} parent=11 // pred_check_branch
          %595 = sbr.rel (%p593) target = $region36
        $region35: #{tpu_custom_call.1} parent=11 // pred_region
          %s597 = ssub.s32 16, 16
          %598 = vsyncadd [#allocation14], %s597
          %s600 = sshll.u32 [#allocation15], 4
          %s601 = int_to_ptr.vmem [resolvable:$true] %s600
          %603 = dma.hbm_to_vmem [thread:$0]  %s6, 16, %s601, [#allocation14]
        $region36: #{tpu_custom_call.1} parent=11 // pred_fallthru
          _
        // Predicated region
        $region37: #{tpu_custom_call.1} parent=11 // pred_check
          %p604 = pneg %p214
        $region38: #{tpu_custom_call.1} parent=11 // pred_check_branch
          %606 = sbr.rel (%p604) target = $region40
        $region39: #{tpu_custom_call.1} parent=11 // pred_region
          %s608 = ssub.s32 512, 512
          %609 = vsyncadd [#allocation17], %s608
          %s610 = sshll.u32 [#allocation16], 4
          %s611 = int_to_ptr.vmem [resolvable:$true] %s610
          %616 = dma.hbm_to_vmem [thread:$0]  %s7, 512, %s611, [#allocation17], 128, 128, 8
        $region40: #{tpu_custom_call.1} parent=11 // pred_fallthru
          _
        // Predicated region
        $region41: #{tpu_custom_call.1} parent=11 // pred_check
          %p617 = pneg %p235
        $region42: #{tpu_custom_call.1} parent=11 // pred_check_branch
          %619 = sbr.rel (%p617) target = $region44
        $region43: #{tpu_custom_call.1} parent=11 // pred_region
          %s621 = ssub.s32 16, 16
          %622 = vsyncadd [#allocation17], %s621
          %s624 = sshll.u32 [#allocation18], 4
          %s625 = int_to_ptr.vmem [resolvable:$true] %s624
          %627 = dma.hbm_to_vmem [thread:$0]  %s8, 16, %s625, [#allocation17]
        $region44: #{tpu_custom_call.1} parent=11 // pred_fallthru
          _
        // Predicated region
        $region45: #{tpu_custom_call.1} parent=11 // pred_check
          %p628 = pneg %p256
        $region46: #{tpu_custom_call.1} parent=11 // pred_check_branch
          %630 = sbr.rel (%p628) target = $region48
        $region47: #{tpu_custom_call.1} parent=11 // pred_region
          _
        $region48: #{tpu_custom_call.1} parent=11 // pred_fallthru
          _
        // Predicated region
        $region49: #{tpu_custom_call.1} parent=11 // pred_check
          %p631 = pneg %p277
        $region50: #{tpu_custom_call.1} parent=11 // pred_check_branch
          %633 = sbr.rel (%p631) target = $region52
        $region51: #{tpu_custom_call.1} parent=11 // pred_region
          %s635 = ssub.s32 16, 16
          %636 = vsyncadd [#allocation20], %s635
          %s638 = sshll.u32 [#allocation19], 4
          %s639 = int_to_ptr.vmem [resolvable:$true] %s638
          %641 = dma.hbm_to_vmem [thread:$0]  %s10, 16, %s639, [#allocation20]
        $region52: #{tpu_custom_call.1} parent=11 // pred_fallthru
          _
        // Predicated region
        $region53: #{tpu_custom_call.1} parent=11 // pred_check
          %p642 = pneg %p298
        $region54: #{tpu_custom_call.1} parent=11 // pred_check_branch
          %644 = sbr.rel (%p642) target = $region56
        $region55: #{tpu_custom_call.1} parent=11 // pred_region
          %s646 = ssub.s32 1536, 1536
          %647 = vsyncadd [#allocation20], %s646
          %s648 = sshll.u32 [#allocation21], 4
          %s649 = int_to_ptr.vmem [resolvable:$true] %s648
          %654 = dma.hbm_to_vmem [thread:$0]  %s11, 1536, %s649, [#allocation20], 128, 128, 8
        $region56: #{tpu_custom_call.1} parent=11 // pred_fallthru
          _
        // Predicated region
        $region57: #{tpu_custom_call.1} parent=11 // pred_check
          %p655 = pneg %p319
        $region58: #{tpu_custom_call.1} parent=11 // pred_check_branch
          %657 = sbr.rel (%p655) target = $region60
        $region59: #{tpu_custom_call.1} parent=11 // pred_region
          %s659 = ssub.s32 48, 48
          %660 = vsyncadd [#allocation23], %s659
          %s661 = sshll.u32 [#allocation22], 4
          %s662 = int_to_ptr.vmem [resolvable:$true] %s661
          %667 = dma.hbm_to_vmem [thread:$0]  %s12, 48, %s662, [#allocation23], 16, 16, 1
        $region60: #{tpu_custom_call.1} parent=11 // pred_fallthru
          _
        // Predicated region
        $region61: #{tpu_custom_call.1} parent=11 // pred_check
          %p668 = pneg %p340
        $region62: #{tpu_custom_call.1} parent=11 // pred_check_branch
          %670 = sbr.rel (%p668) target = $region64
        $region63: #{tpu_custom_call.1} parent=11 // pred_region
          %s672 = ssub.s32 1536, 1536
          %673 = vsyncadd [#allocation23], %s672
          %s674 = sshll.u32 [#allocation24], 4
          %s675 = int_to_ptr.vmem [resolvable:$true] %s674
          %680 = dma.hbm_to_vmem [thread:$0]  %s13, 1536, %s675, [#allocation23], 128, 128, 8
        $region64: #{tpu_custom_call.1} parent=11 // pred_fallthru
          _
        // Predicated region
        $region65: #{tpu_custom_call.1} parent=11 // pred_check
          %p681 = pneg %p361
        $region66: #{tpu_custom_call.1} parent=11 // pred_check_branch
          %683 = sbr.rel (%p681) target = $region68
        $region67: #{tpu_custom_call.1} parent=11 // pred_region
          %s685 = ssub.s32 48, 48
          %686 = vsyncadd [#allocation26], %s685
          %s687 = sshll.u32 [#allocation25], 4
          %s688 = int_to_ptr.vmem [resolvable:$true] %s687
          %693 = dma.hbm_to_vmem [thread:$0]  %s14, 48, %s688, [#allocation26], 16, 16, 1
        $region68: #{tpu_custom_call.1} parent=11 // pred_fallthru
          _
        // Predicated region
        $region69: #{tpu_custom_call.1} parent=11 // pred_check
          %p694 = pneg %p382
        $region70: #{tpu_custom_call.1} parent=11 // pred_check_branch
          %696 = sbr.rel (%p694) target = $region72
        $region71: #{tpu_custom_call.1} parent=11 // pred_region
          %s698 = ssub.s32 512, 512
          %699 = vsyncadd [#allocation26], %s698
          %s700 = sshll.u32 [#allocation27], 4
          %s701 = int_to_ptr.vmem [resolvable:$true] %s700
          %706 = dma.hbm_to_vmem [thread:$0]  %s15, 512, %s701, [#allocation26], 128, 128, 8
        $region72: #{tpu_custom_call.1} parent=11 // pred_fallthru
          _
        // Predicated region
        $region73: #{tpu_custom_call.1} parent=11 // pred_check
          %p707 = pneg %p403
        $region74: #{tpu_custom_call.1} parent=11 // pred_check_branch
          %709 = sbr.rel (%p707) target = $region76
        $region75: #{tpu_custom_call.1} parent=11 // pred_region
          %s711 = ssub.s32 16, 16
          %712 = vsyncadd [#allocation29], %s711
          %s714 = sshll.u32 [#allocation28], 4
          %s715 = int_to_ptr.vmem [resolvable:$true] %s714
          %717 = dma.hbm_to_vmem [thread:$0]  %s16, 16, %s715, [#allocation29]
        $region76: #{tpu_custom_call.1} parent=11 // pred_fallthru
          _
        // Predicated region
        $region77: #{tpu_custom_call.1} parent=11 // pred_check
          %p718 = pneg %p424
        $region78: #{tpu_custom_call.1} parent=11 // pred_check_branch
          %720 = sbr.rel (%p718) target = $region80
        $region79: #{tpu_custom_call.1} parent=11 // pred_region
          _
        $region80: #{tpu_custom_call.1} parent=11 // pred_fallthru
          _
        // Predicated region
        $region81: #{tpu_custom_call.1} parent=11 // pred_check
          %p721 = pneg %p445
        $region82: #{tpu_custom_call.1} parent=11 // pred_check_branch
          %723 = sbr.rel (%p721) target = $region84
        $region83: #{tpu_custom_call.1} parent=11 // pred_region
          _
        $region84: #{tpu_custom_call.1} parent=11 // pred_fallthru
          _
        // Predicated region
        $region85: #{tpu_custom_call.1} parent=11 // pred_check
          %p724 = pneg %p466
        $region86: #{tpu_custom_call.1} parent=11 // pred_check_branch
          %726 = sbr.rel (%p724) target = $region88
        $region87: #{tpu_custom_call.1} parent=11 // pred_region
          %s728 = ssub.s32 512, 512
          %729 = vsyncadd [#allocation29], %s728
          %s730 = sshll.u32 [#allocation30], 4
          %s731 = int_to_ptr.vmem [resolvable:$true] %s730
          %736 = dma.hbm_to_vmem [thread:$0]  %s19, 512, %s731, [#allocation29], 128, 128, 8
        $region88: #{tpu_custom_call.1} parent=11 // pred_fallthru
          _
        // Predicated region
        $region89: #{tpu_custom_call.1} parent=11 // pred_check
          %p737 = pneg %p487
        $region90: #{tpu_custom_call.1} parent=11 // pred_check_branch
          %739 = sbr.rel (%p737) target = $region92
        $region91: #{tpu_custom_call.1} parent=11 // pred_region
          _
        $region92: #{tpu_custom_call.1} parent=11 // pred_fallthru
          _
      $region12: #{tpu_custom_call.1} parent=5 // pred_fallthru
        _
      %p740 = scmp.lt.s32.totalorder %s41, 2
      // Predicated region
      $region93: #{tpu_custom_call.1} parent=5 // pred_check
        %p741 = pneg %p740
      $region94: #{tpu_custom_call.1} parent=5 // pred_check_branch
        %743 = sbr.rel (%p741) target = $region96
      $region95: #{tpu_custom_call.1} parent=5 // pred_region
        // Predicated region
        $region97: #{tpu_custom_call.1} parent=95 // pred_check
          %p744 = pneg %p61
        $region98: #{tpu_custom_call.1} parent=95 // pred_check_branch
          %746 = sbr.rel (%p744) target = $region100
        $region99: #{tpu_custom_call.1} parent=95 // pred_region
          %s747 = sand.u32 %s51, 1
          %s748 = scalar_lea.sflag [#allocation5], %s747
          %s749 = sand.u32 %s51, 1
          %s750 = smul.addr %s749, 8
          %s751 = scalar_lea.vmem [#allocation4], %s750
          %s753 = ssub.s32 128, 128
          %754 = vsyncadd %s748, %s753
          %s755 = smul.addr %s41, 128
          %s756 = scalar_lea.hbm %s0, %s755
          %s758 = sshll.u32 %s751, 4
          %s759 = int_to_ptr.vmem [resolvable:$true] %s758
          %761 = dma.hbm_to_vmem [thread:$0]  %s756, 128, %s759, %s748
        $region100: #{tpu_custom_call.1} parent=95 // pred_fallthru
          _
      $region96: #{tpu_custom_call.1} parent=5 // pred_fallthru
        _
      %p762 = scmp.le.s32.totalorder 1, %s41
      %p763 = scmp.lt.s32.totalorder %s41, 3
      %p764 = pnand %p762, %p763
      %p765 = pneg %p764
      // Predicated region
      $region101: #{tpu_custom_call.1} parent=5 // pred_check
        _
      $region102: #{tpu_custom_call.1} parent=5 // pred_check_branch
        %767 = sbr.rel (%p764) target = $region104
      $region103: #{tpu_custom_call.1} parent=5 // pred_region
        %s768 = ssub.s32 %s41, 1
        %s769 = sand.u32 %s54, 1
        %s770 = scalar_lea.sflag [#allocation5], %s769
        %s771 = sand.u32 %s54, 1
        %s772 = smul.addr %s771, 8
        %s773 = scalar_lea.vmem [#allocation4], %s772
        // Predicated region
        $region105: #{tpu_custom_call.1} parent=103 // pred_check
          %p774 = pneg %p67
        $region106: #{tpu_custom_call.1} parent=103 // pred_check_branch
          %776 = sbr.rel (%p774) target = $region108
        $region107: #{tpu_custom_call.1} parent=103 // pred_region
          %777 = dma.done %s770, 128
        $region108: #{tpu_custom_call.1} parent=103 // pred_fallthru
          _
        // Predicated region
        $region109: #{tpu_custom_call.1} parent=103 // pred_check
          %p778 = pneg %p88
        $region110: #{tpu_custom_call.1} parent=103 // pred_check_branch
          %780 = sbr.rel (%p778) target = $region112
        $region111: #{tpu_custom_call.1} parent=103 // pred_region
          %781 = dma.done [#allocation8], 1536
        $region112: #{tpu_custom_call.1} parent=103 // pred_fallthru
          _
        // Predicated region
        $region113: #{tpu_custom_call.1} parent=103 // pred_check
          %p782 = pneg %p109
        $region114: #{tpu_custom_call.1} parent=103 // pred_check_branch
          %784 = sbr.rel (%p782) target = $region116
        $region115: #{tpu_custom_call.1} parent=103 // pred_region
          %785 = dma.done [#allocation8], 48
        $region116: #{tpu_custom_call.1} parent=103 // pred_fallthru
          _
        // Predicated region
        $region117: #{tpu_custom_call.1} parent=103 // pred_check
          %p786 = pneg %p130
        $region118: #{tpu_custom_call.1} parent=103 // pred_check_branch
          %788 = sbr.rel (%p786) target = $region120
        $region119: #{tpu_custom_call.1} parent=103 // pred_region
          %789 = dma.done [#allocation11], 1536
        $region120: #{tpu_custom_call.1} parent=103 // pred_fallthru
          _
        // Predicated region
        $region121: #{tpu_custom_call.1} parent=103 // pred_check
          %p790 = pneg %p151
        $region122: #{tpu_custom_call.1} parent=103 // pred_check_branch
          %792 = sbr.rel (%p790) target = $region124
        $region123: #{tpu_custom_call.1} parent=103 // pred_region
          %793 = dma.done [#allocation11], 48
        $region124: #{tpu_custom_call.1} parent=103 // pred_fallthru
          _
        // Predicated region
        $region125: #{tpu_custom_call.1} parent=103 // pred_check
          %p794 = pneg %p172
        $region126: #{tpu_custom_call.1} parent=103 // pred_check_branch
          %796 = sbr.rel (%p794) target = $region128
        $region127: #{tpu_custom_call.1} parent=103 // pred_region
          %797 = dma.done [#allocation14], 512
        $region128: #{tpu_custom_call.1} parent=103 // pred_fallthru
          _
        // Predicated region
        $region129: #{tpu_custom_call.1} parent=103 // pred_check
          %p798 = pneg %p193
        $region130: #{tpu_custom_call.1} parent=103 // pred_check_branch
          %800 = sbr.rel (%p798) target = $region132
        $region131: #{tpu_custom_call.1} parent=103 // pred_region
          %801 = dma.done [#allocation14], 16
        $region132: #{tpu_custom_call.1} parent=103 // pred_fallthru
          _
        // Predicated region
        $region133: #{tpu_custom_call.1} parent=103 // pred_check
          %p802 = pneg %p214
        $region134: #{tpu_custom_call.1} parent=103 // pred_check_branch
          %804 = sbr.rel (%p802) target = $region136
        $region135: #{tpu_custom_call.1} parent=103 // pred_region
          %805 = dma.done [#allocation17], 512
        $region136: #{tpu_custom_call.1} parent=103 // pred_fallthru
          _
        // Predicated region
        $region137: #{tpu_custom_call.1} parent=103 // pred_check
          %p806 = pneg %p235
        $region138: #{tpu_custom_call.1} parent=103 // pred_check_branch
          %808 = sbr.rel (%p806) target = $region140
        $region139: #{tpu_custom_call.1} parent=103 // pred_region
          %809 = dma.done [#allocation17], 16
        $region140: #{tpu_custom_call.1} parent=103 // pred_fallthru
          _
        // Predicated region
        $region141: #{tpu_custom_call.1} parent=103 // pred_check
          %p810 = pneg %p277
        $region142: #{tpu_custom_call.1} parent=103 // pred_check_branch
          %812 = sbr.rel (%p810) target = $region144
        $region143: #{tpu_custom_call.1} parent=103 // pred_region
          %813 = dma.done [#allocation20], 16
        $region144: #{tpu_custom_call.1} parent=103 // pred_fallthru
          _
        // Predicated region
        $region145: #{tpu_custom_call.1} parent=103 // pred_check
          %p814 = pneg %p298
        $region146: #{tpu_custom_call.1} parent=103 // pred_check_branch
          %816 = sbr.rel (%p814) target = $region148
        $region147: #{tpu_custom_call.1} parent=103 // pred_region
          %817 = dma.done [#allocation20], 1536
        $region148: #{tpu_custom_call.1} parent=103 // pred_fallthru
          _
        // Predicated region
        $region149: #{tpu_custom_call.1} parent=103 // pred_check
          %p818 = pneg %p319
        $region150: #{tpu_custom_call.1} parent=103 // pred_check_branch
          %820 = sbr.rel (%p818) target = $region152
        $region151: #{tpu_custom_call.1} parent=103 // pred_region
          %821 = dma.done [#allocation23], 48
        $region152: #{tpu_custom_call.1} parent=103 // pred_fallthru
          _
        // Predicated region
        $region153: #{tpu_custom_call.1} parent=103 // pred_check
          %p822 = pneg %p340
        $region154: #{tpu_custom_call.1} parent=103 // pred_check_branch
          %824 = sbr.rel (%p822) target = $region156
        $region155: #{tpu_custom_call.1} parent=103 // pred_region
          %825 = dma.done [#allocation23], 1536
        $region156: #{tpu_custom_call.1} parent=103 // pred_fallthru
          _
        // Predicated region
        $region157: #{tpu_custom_call.1} parent=103 // pred_check
          %p826 = pneg %p361
        $region158: #{tpu_custom_call.1} parent=103 // pred_check_branch
          %828 = sbr.rel (%p826) target = $region160
        $region159: #{tpu_custom_call.1} parent=103 // pred_region
          %829 = dma.done [#allocation26], 48
        $region160: #{tpu_custom_call.1} parent=103 // pred_fallthru
          _
        // Predicated region
        $region161: #{tpu_custom_call.1} parent=103 // pred_check
          %p830 = pneg %p382
        $region162: #{tpu_custom_call.1} parent=103 // pred_check_branch
          %832 = sbr.rel (%p830) target = $region164
        $region163: #{tpu_custom_call.1} parent=103 // pred_region
          %833 = dma.done [#allocation26], 512
        $region164: #{tpu_custom_call.1} parent=103 // pred_fallthru
          _
        // Predicated region
        $region165: #{tpu_custom_call.1} parent=103 // pred_check
          %p834 = pneg %p403
        $region166: #{tpu_custom_call.1} parent=103 // pred_check_branch
          %836 = sbr.rel (%p834) target = $region168
        $region167: #{tpu_custom_call.1} parent=103 // pred_region
          %837 = dma.done [#allocation29], 16
        $region168: #{tpu_custom_call.1} parent=103 // pred_fallthru
          _
        // Predicated region
        $region169: #{tpu_custom_call.1} parent=103 // pred_check
          %p838 = pneg %p466
        $region170: #{tpu_custom_call.1} parent=103 // pred_check_branch
          %840 = sbr.rel (%p838) target = $region172
        $region171: #{tpu_custom_call.1} parent=103 // pred_region
          %841 = dma.done [#allocation29], 512
        $region172: #{tpu_custom_call.1} parent=103 // pred_fallthru
          _
        %s842 = sand.u32 %s54, 1
        %s843 = scalar_lea.sflag [#allocation5], %s842
        %s844 = sand.u32 %s54, 1
        %s845 = smul.addr %s844, 8
        %s846 = scalar_lea.vmem [#allocation4], %s845
        %p847 = pneg %p67
        %p848 = pneg %p64
        %p849 = pneg %p88
        %p850 = pneg %p85
        %p851 = pneg %p109
        %p852 = pneg %p106
        %p853 = pneg %p130
        %p854 = pneg %p127
        %p855 = pneg %p151
        %p856 = pneg %p148
        %p857 = pneg %p172
        %p858 = pneg %p169
        %p859 = pneg %p193
        %p860 = pneg %p190
        %p861 = pneg %p214
        %p862 = pneg %p211
        %p863 = pneg %p235
        %p864 = pneg %p232
        %p865 = pneg %p256
        %p866 = pneg %p253
        %p867 = pneg %p277
        %p868 = pneg %p274
        %p869 = pneg %p298
        %p870 = pneg %p295
        %p871 = pneg %p319
        %p872 = pneg %p316
        %p873 = pneg %p340
        %p874 = pneg %p337
        %p875 = pneg %p361
        %p876 = pneg %p358
        %p877 = pneg %p382
        %p878 = pneg %p379
        %p879 = pneg %p403
        %p880 = pneg %p400
        %p881 = pneg %p424
        %p882 = pneg %p421
        %p883 = pneg %p445
        %p884 = pneg %p442
        %p885 = pneg %p466
        %p886 = pneg %p463
        %p887 = pneg %p487
        %p888 = pneg %p484
        %p889 = pneg %p513
        %p890 = pneg %p510
        %s891 = sand.u32 %s500, 1
        %s892 = scalar_lea.sflag [#allocation6], %s891
        %s893 = sand.u32 %s500, 1
        %s894 = smul.addr %s893, 8
        %s895 = scalar_lea.vmem [#allocation31], %s894
        %v897 = vld [vmem:[%s773] sm:$0xff]
        %vm898 = vcmask 261120
        %v899 = vsel %vm898, %v897, 0.0
        %900 = vadd.xlane.f32.xlu0 %v899
        %v901 = vpop.xlane.xlu0 %900
        %v902 = vrcp.pop 32.0
        %v903 = vmul.f32 %v901, %v902
        %v904 = vsub.f32 %v897, %v903
        %v905 = vmul.f32 %v904, %v904
        %v906 = vsel %vm898, %v905, 0.0
        %907 = vadd.xlane.f32.xlu0 %v906
        %v908 = vpop.xlane.xlu0 %907
        %v909 = vmul.f32 %v908, %v902
        %v910 = vadd.f32 %v909, 1e-05
        %v911 = vrsqrt.pop %v910
        %v912 = vmul.f32 %v904, %v911
        %v913 = vld [vmem:[#allocation7] sm:$0xff]
        %v914 = vld [vmem:[#allocation7 + $0x8] sm:$0xff]
        %v915 = vld [vmem:[#allocation7 + $0x10] sm:$0xff]
        %v916 = vld [vmem:[#allocation7 + $0x18] sm:$0xff]
        %v917 = vpack.c.bf16 %v912, %v912
        %v918 = vpack.c.bf16 %v914, %v913
        %v919 = vpack.c.bf16 %v916, %v915
        %v920 = vld [vmem:[#allocation9] sm:$0x1]
        %v922 = vlaneseq
        %v923 = vshrl.u32 %v922, 7
        %v924 = vsub.s32 0, %v923
        %v925 = vrot.slane %v920, %v924
        %v928 = vsel %vm898, %v917, 0
        %930 = vmatprep.subr.bf16.mxu0 0
        %931 = vmatpush1.bf16.msra.mxu0 %v918
        %932 = vmatprep.subr.bf16.mxu0 0
        %933 = vmatpush1.bf16.msra.mxu0 %v919
        %934 = vmatprep.subr.bf16.mxu0 0
        %935 = vmatpush1.bf16.msra.mxu0 0
        %936 = vmatprep.subr.bf16.mxu0 0
        %937 = vmatpush1.bf16.msra.mxu0 0
        %938 = vmatprep.subr.bf16.mxu0 0
        %939 = vmatpush1.bf16.msra.mxu0 0
        %940 = vmatprep.subr.bf16.mxu0 0
        %941 = vmatpush1.bf16.msra.mxu0 0
        %942 = vmatprep.subr.bf16.mxu0 0
        %943 = vmatpush1.bf16.msra.mxu0 0
        %944 = vmatprep.subr.bf16.mxu0 0
        %945 = vmatpush1.bf16.msra.mxu0 0
        %946 = vmatprep.subr.bf16.mxu0 0
        %947 = vmatpush1.bf16.msra.mxu0 0
        %948 = vmatprep.subr.bf16.mxu0 0
        %949 = vmatpush1.bf16.msra.mxu0 0
        %950 = vmatprep.subr.bf16.mxu0 0
        %951 = vmatpush1.bf16.msra.mxu0 0
        %952 = vmatprep.subr.bf16.mxu0 0
        %953 = vmatpush1.bf16.msra.mxu0 0
        %954 = vmatprep.subr.bf16.mxu0 0
        %955 = vmatpush1.bf16.msra.mxu0 0
        %956 = vmatprep.subr.bf16.mxu0 0
        %957 = vmatpush1.bf16.msra.mxu0 0
        %958 = vmatprep.subr.bf16.mxu0 0
        %959 = vmatpush1.bf16.msra.mxu0 0
        %960 = vmatprep.subr.bf16.mxu0 0
        %961 = vmatpush1.bf16.msra.mxu0 0
        %962 = vmatprep.mubr.bf16.mxu0 0
        %963 = vmatmul.mubr.bf16.gmra.mrb[0].mxu0 %v928
        %v964 = vpop.f32.mrb[0].mxu0
        %v965 = vadd.f32 %v925, %v964
        %v966 = vpop.f32.mrb[0].mxu0
        %v967 = vpop.f32.mrb[0].mxu0
        %v968 = vpop.f32.mrb[0].mxu0
        %969 = vdwg.mxu0
        %970 = vst.msk [vmem:[#allocation2] sm:$0xff] %vm898, %v965
        %s971 = scalar_lea.vmem [#allocation7], 32
        %v972 = vld [vmem:[%s971] sm:$0xff]
        %v973 = vld [vmem:[%s971 + $0x8] sm:$0xff]
        %v974 = vld [vmem:[%s971 + $0x10] sm:$0xff]
        %v975 = vld [vmem:[%s971 + $0x18] sm:$0xff]
        %v976 = vpack.c.bf16 %v973, %v972
        %v977 = vpack.c.bf16 %v975, %v974
        %s978 = scalar_lea.vmem [#allocation9], 1
        %v979 = vld [vmem:[%s978] sm:$0x1]
        %v981 = vlaneseq
        %v982 = vshrl.u32 %v981, 7
        %v983 = vsub.s32 0, %v982
        %v984 = vrot.slane %v979, %v983
        %986 = vmatprep.subr.bf16.mxu0 0
        %987 = vmatpush1.bf16.msra.mxu0 %v976
        %988 = vmatprep.subr.bf16.mxu0 0
        %989 = vmatpush1.bf16.msra.mxu0 %v977
        %990 = vmatprep.subr.bf16.mxu0 0
        %991 = vmatpush1.bf16.msra.mxu0 0
        %992 = vmatprep.subr.bf16.mxu0 0
        %993 = vmatpush1.bf16.msra.mxu0 0
        %994 = vmatprep.subr.bf16.mxu0 0
        %995 = vmatpush1.bf16.msra.mxu0 0
        %996 = vmatprep.subr.bf16.mxu0 0
        %997 = vmatpush1.bf16.msra.mxu0 0
        %998 = vmatprep.subr.bf16.mxu0 0
        %999 = vmatpush1.bf16.msra.mxu0 0
        %1000 = vmatprep.subr.bf16.mxu0 0
        %1001 = vmatpush1.bf16.msra.mxu0 0
        %1002 = vmatprep.subr.bf16.mxu0 0
        %1003 = vmatpush1.bf16.msra.mxu0 0
        %1004 = vmatprep.subr.bf16.mxu0 0
        %1005 = vmatpush1.bf16.msra.mxu0 0
        %1006 = vmatprep.subr.bf16.mxu0 0
        %1007 = vmatpush1.bf16.msra.mxu0 0
        %1008 = vmatprep.subr.bf16.mxu0 0
        %1009 = vmatpush1.bf16.msra.mxu0 0
        %1010 = vmatprep.subr.bf16.mxu0 0
        %1011 = vmatpush1.bf16.msra.mxu0 0
        %1012 = vmatprep.subr.bf16.mxu0 0
        %1013 = vmatpush1.bf16.msra.mxu0 0
        %1014 = vmatprep.subr.bf16.mxu0 0
        %1015 = vmatpush1.bf16.msra.mxu0 0
        %1016 = vmatprep.subr.bf16.mxu0 0
        %1017 = vmatpush1.bf16.msra.mxu0 0
        %1018 = vmatprep.mubr.bf16.mxu0 0
        %1019 = vmatmul.mubr.bf16.gmra.mrb[0].mxu0 %v928
        %v1020 = vpop.f32.mrb[0].mxu0
        %v1021 = vadd.f32 %v984, %v1020
        %v1022 = vpop.f32.mrb[0].mxu0
        %v1023 = vpop.f32.mrb[0].mxu0
        %v1024 = vpop.f32.mrb[0].mxu0
        %1025 = vdwg.mxu0
        %s1026 = scalar_lea.vmem [#allocation2], 8
        %1027 = vst.msk [vmem:[%s1026] sm:$0xff] %vm898, %v1021
        %s1028 = scalar_lea.vmem [#allocation7], 64
        %v1029 = vld [vmem:[%s1028] sm:$0xff]
        %v1030 = vld [vmem:[%s1028 + $0x8] sm:$0xff]
        %v1031 = vld [vmem:[%s1028 + $0x10] sm:$0xff]
        %v1032 = vld [vmem:[%s1028 + $0x18] sm:$0xff]
        %v1033 = vpack.c.bf16 %v1030, %v1029
        %v1034 = vpack.c.bf16 %v1032, %v1031
        %s1035 = scalar_lea.vmem [#allocation9], 2
        %v1036 = vld [vmem:[%s1035] sm:$0x1]
        %v1038 = vlaneseq
        %v1039 = vshrl.u32 %v1038, 7
        %v1040 = vsub.s32 0, %v1039
        %v1041 = vrot.slane %v1036, %v1040
        %1043 = vmatprep.subr.bf16.mxu0 0
        %1044 = vmatpush1.bf16.msra.mxu0 %v1033
        %1045 = vmatprep.subr.bf16.mxu0 0
        %1046 = vmatpush1.bf16.msra.mxu0 %v1034
        %1047 = vmatprep.subr.bf16.mxu0 0
        %1048 = vmatpush1.bf16.msra.mxu0 0
        %1049 = vmatprep.subr.bf16.mxu0 0
        %1050 = vmatpush1.bf16.msra.mxu0 0
        %1051 = vmatprep.subr.bf16.mxu0 0
        %1052 = vmatpush1.bf16.msra.mxu0 0
        %1053 = vmatprep.subr.bf16.mxu0 0
        %1054 = vmatpush1.bf16.msra.mxu0 0
        %1055 = vmatprep.subr.bf16.mxu0 0
        %1056 = vmatpush1.bf16.msra.mxu0 0
        %1057 = vmatprep.subr.bf16.mxu0 0
        %1058 = vmatpush1.bf16.msra.mxu0 0
        %1059 = vmatprep.subr.bf16.mxu0 0
        %1060 = vmatpush1.bf16.msra.mxu0 0
        %1061 = vmatprep.subr.bf16.mxu0 0
        %1062 = vmatpush1.bf16.msra.mxu0 0
        %1063 = vmatprep.subr.bf16.mxu0 0
        %1064 = vmatpush1.bf16.msra.mxu0 0
        %1065 = vmatprep.subr.bf16.mxu0 0
        %1066 = vmatpush1.bf16.msra.mxu0 0
        %1067 = vmatprep.subr.bf16.mxu0 0
        %1068 = vmatpush1.bf16.msra.mxu0 0
        %1069 = vmatprep.subr.bf16.mxu0 0
        %1070 = vmatpush1.bf16.msra.mxu0 0
        %1071 = vmatprep.subr.bf16.mxu0 0
        %1072 = vmatpush1.bf16.msra.mxu0 0
        %1073 = vmatprep.subr.bf16.mxu0 0
        %1074 = vmatpush1.bf16.msra.mxu0 0
        %1075 = vmatprep.mubr.bf16.mxu0 0
        %1076 = vmatmul.mubr.bf16.gmra.mrb[0].mxu0 %v928
        %v1077 = vpop.f32.mrb[0].mxu0
        %v1078 = vadd.f32 %v1041, %v1077
        %v1079 = vpop.f32.mrb[0].mxu0
        %v1080 = vpop.f32.mrb[0].mxu0
        %v1081 = vpop.f32.mrb[0].mxu0
        %1082 = vdwg.mxu0
        %s1083 = scalar_lea.vmem [#allocation2], 16
        %1084 = vst.msk [vmem:[%s1083] sm:$0xff] %vm898, %v1078
        %v1085 = vld [vmem:[#allocation10] sm:$0xff]
        %v1086 = vld [vmem:[#allocation10 + $0x8] sm:$0xff]
        %v1087 = vld [vmem:[#allocation10 + $0x10] sm:$0xff]
        %v1088 = vld [vmem:[#allocation10 + $0x18] sm:$0xff]
        %v1089 = vpack.c.bf16 %v1086, %v1085
        %v1090 = vpack.c.bf16 %v1088, %v1087
        %s1091 = scalar_lea.vmem [#allocation10], 32
        %v1092 = vld [vmem:[%s1091] sm:$0xff]
        %v1093 = vld [vmem:[%s1091 + $0x8] sm:$0xff]
        %v1094 = vld [vmem:[%s1091 + $0x10] sm:$0xff]
        %v1095 = vld [vmem:[%s1091 + $0x18] sm:$0xff]
        %v1096 = vpack.c.bf16 %v1093, %v1092
        %v1097 = vpack.c.bf16 %v1095, %v1094
        %s1098 = scalar_lea.vmem [#allocation10], 64
        %v1099 = vld [vmem:[%s1098] sm:$0xff]
        %v1100 = vld [vmem:[%s1098 + $0x8] sm:$0xff]
        %v1101 = vld [vmem:[%s1098 + $0x10] sm:$0xff]
        %v1102 = vld [vmem:[%s1098 + $0x18] sm:$0xff]
        %v1103 = vpack.c.bf16 %v1100, %v1099
        %v1104 = vpack.c.bf16 %v1102, %v1101
        %v1105 = vld [vmem:[#allocation12] sm:$0x1]
        %s1106 = scalar_lea.vmem [#allocation12], 1
        %v1107 = vld [vmem:[%s1106] sm:$0x1]
        %s1108 = scalar_lea.vmem [#allocation12], 2
        %v1109 = vld [vmem:[%s1108] sm:$0x1]
        %v1111 = vsel %vm898, 0, 0
        %1113 = vmatprep.subr.bf16.mxu0 0
        %1114 = vmatpush1.bf16.msra.mxu0 %v1089
        %1115 = vmatprep.subr.bf16.mxu0 0
        %1116 = vmatpush1.bf16.msra.mxu0 %v1090
        %1117 = vmatprep.subr.bf16.mxu0 0
        %1118 = vmatpush1.bf16.msra.mxu0 0
        %1119 = vmatprep.subr.bf16.mxu0 0
        %1120 = vmatpush1.bf16.msra.mxu0 0
        %1121 = vmatprep.subr.bf16.mxu0 0
        %1122 = vmatpush1.bf16.msra.mxu0 0
        %1123 = vmatprep.subr.bf16.mxu0 0
        %1124 = vmatpush1.bf16.msra.mxu0 0
        %1125 = vmatprep.subr.bf16.mxu0 0
        %1126 = vmatpush1.bf16.msra.mxu0 0
        %1127 = vmatprep.subr.bf16.mxu0 0
        %1128 = vmatpush1.bf16.msra.mxu0 0
        %1129 = vmatprep.subr.bf16.mxu0 0
        %1130 = vmatpush1.bf16.msra.mxu0 0
        %1131 = vmatprep.subr.bf16.mxu0 0
        %1132 = vmatpush1.bf16.msra.mxu0 0
        %1133 = vmatprep.subr.bf16.mxu0 0
        %1134 = vmatpush1.bf16.msra.mxu0 0
        %1135 = vmatprep.subr.bf16.mxu0 0
        %1136 = vmatpush1.bf16.msra.mxu0 0
        %1137 = vmatprep.subr.bf16.mxu0 0
        %1138 = vmatpush1.bf16.msra.mxu0 0
        %1139 = vmatprep.subr.bf16.mxu0 0
        %1140 = vmatpush1.bf16.msra.mxu0 0
        %1141 = vmatprep.subr.bf16.mxu0 0
        %1142 = vmatpush1.bf16.msra.mxu0 0
        %1143 = vmatprep.subr.bf16.mxu0 0
        %1144 = vmatpush1.bf16.msra.mxu0 0
        %1145 = vmatprep.mubr.bf16.mxu0 0
        %1146 = vmatmul.mubr.bf16.gmra.mrb[0].mxu0 %v1111
        %v1147 = vpop.f32.mrb[0].mxu0
        %v1148 = vadd.f32 %v1105, %v1147
        %v1149 = vpop.f32.mrb[0].mxu0
        %v1150 = vpop.f32.mrb[0].mxu0
        %v1151 = vpop.f32.mrb[0].mxu0
        %1152 = vdwg.mxu0
        %1153 = vmatprep.subr.bf16.mxu0 0
        %1154 = vmatpush1.bf16.msra.mxu0 %v1096
        %1155 = vmatprep.subr.bf16.mxu0 0
        %1156 = vmatpush1.bf16.msra.mxu0 %v1097
        %1157 = vmatprep.subr.bf16.mxu0 0
        %1158 = vmatpush1.bf16.msra.mxu0 0
        %1159 = vmatprep.subr.bf16.mxu0 0
        %1160 = vmatpush1.bf16.msra.mxu0 0
        %1161 = vmatprep.subr.bf16.mxu0 0
        %1162 = vmatpush1.bf16.msra.mxu0 0
        %1163 = vmatprep.subr.bf16.mxu0 0
        %1164 = vmatpush1.bf16.msra.mxu0 0
        %1165 = vmatprep.subr.bf16.mxu0 0
        %1166 = vmatpush1.bf16.msra.mxu0 0
        %1167 = vmatprep.subr.bf16.mxu0 0
        %1168 = vmatpush1.bf16.msra.mxu0 0
        %1169 = vmatprep.subr.bf16.mxu0 0
        %1170 = vmatpush1.bf16.msra.mxu0 0
        %1171 = vmatprep.subr.bf16.mxu0 0
        %1172 = vmatpush1.bf16.msra.mxu0 0
        %1173 = vmatprep.subr.bf16.mxu0 0
        %1174 = vmatpush1.bf16.msra.mxu0 0
        %1175 = vmatprep.subr.bf16.mxu0 0
        %1176 = vmatpush1.bf16.msra.mxu0 0
        %1177 = vmatprep.subr.bf16.mxu0 0
        %1178 = vmatpush1.bf16.msra.mxu0 0
        %1179 = vmatprep.subr.bf16.mxu0 0
        %1180 = vmatpush1.bf16.msra.mxu0 0
        %1181 = vmatprep.subr.bf16.mxu0 0
        %1182 = vmatpush1.bf16.msra.mxu0 0
        %1183 = vmatprep.subr.bf16.mxu0 0
        %1184 = vmatpush1.bf16.msra.mxu0 0
        %1185 = vmatprep.mubr.bf16.mxu0 0
        %1186 = vmatmul.mubr.bf16.gmra.mrb[0].mxu0 %v1111
        %v1187 = vpop.f32.mrb[0].mxu0
        %v1188 = vadd.f32 %v1107, %v1187
        %v1189 = vpop.f32.mrb[0].mxu0
        %v1190 = vpop.f32.mrb[0].mxu0
        %v1191 = vpop.f32.mrb[0].mxu0
        %1192 = vdwg.mxu0
        %1193 = vmatprep.subr.bf16.mxu0 0
        %1194 = vmatpush1.bf16.msra.mxu0 %v1103
        %1195 = vmatprep.subr.bf16.mxu0 0
        %1196 = vmatpush1.bf16.msra.mxu0 %v1104
        %1197 = vmatprep.subr.bf16.mxu0 0
        %1198 = vmatpush1.bf16.msra.mxu0 0
        %1199 = vmatprep.subr.bf16.mxu0 0
        %1200 = vmatpush1.bf16.msra.mxu0 0
        %1201 = vmatprep.subr.bf16.mxu0 0
        %1202 = vmatpush1.bf16.msra.mxu0 0
        %1203 = vmatprep.subr.bf16.mxu0 0
        %1204 = vmatpush1.bf16.msra.mxu0 0
        %1205 = vmatprep.subr.bf16.mxu0 0
        %1206 = vmatpush1.bf16.msra.mxu0 0
        %1207 = vmatprep.subr.bf16.mxu0 0
        %1208 = vmatpush1.bf16.msra.mxu0 0
        %1209 = vmatprep.subr.bf16.mxu0 0
        %1210 = vmatpush1.bf16.msra.mxu0 0
        %1211 = vmatprep.subr.bf16.mxu0 0
        %1212 = vmatpush1.bf16.msra.mxu0 0
        %1213 = vmatprep.subr.bf16.mxu0 0
        %1214 = vmatpush1.bf16.msra.mxu0 0
        %1215 = vmatprep.subr.bf16.mxu0 0
        %1216 = vmatpush1.bf16.msra.mxu0 0
        %1217 = vmatprep.subr.bf16.mxu0 0
        %1218 = vmatpush1.bf16.msra.mxu0 0
        %1219 = vmatprep.subr.bf16.mxu0 0
        %1220 = vmatpush1.bf16.msra.mxu0 0
        %1221 = vmatprep.subr.bf16.mxu0 0
        %1222 = vmatpush1.bf16.msra.mxu0 0
        %1223 = vmatprep.subr.bf16.mxu0 0
        %1224 = vmatpush1.bf16.msra.mxu0 0
        %1225 = vmatprep.mubr.bf16.mxu0 0
        %1226 = vmatmul.mubr.bf16.gmra.mrb[0].mxu0 %v1111
        %v1227 = vpop.f32.mrb[0].mxu0
        %v1228 = vadd.f32 %v1109, %v1227
        %v1229 = vpop.f32.mrb[0].mxu0
        %v1230 = vpop.f32.mrb[0].mxu0
        %v1231 = vpop.f32.mrb[0].mxu0
        %1232 = vdwg.mxu0
        %v1233 = vld [vmem:[#allocation2] sm:$0x1]
        %v1234 = vadd.f32 %v1233, %v1148
        %v1235 = vxor.u32 %v1234, 2147483648
        %v1236 = vmul.f32 %v1235, 1.442695
        %v1237 = vpow.pop %v1236
        %v1238 = vadd.f32 %v1237, 1.0
        %v1239 = vrcp.pop %v1238
        %v1240 = vmul.f32 1.0, %v1239
        %v1241 = vld [vmem:[%s1026] sm:$0x1]
        %v1242 = vadd.f32 %v1241, %v1188
        %v1243 = vxor.u32 %v1242, 2147483648
        %v1244 = vmul.f32 %v1243, 1.442695
        %v1245 = vpow.pop %v1244
        %v1246 = vadd.f32 %v1245, 1.0
        %v1247 = vrcp.pop %v1246
        %v1248 = vmul.f32 1.0, %v1247
        %v1249 = vld [vmem:[%s1083] sm:$0x1]
        %v1250 = vmul.f32 %v1240, %v1228
        %v1251 = vadd.f32 %v1249, %v1250
        %v1252 = vtanh.pop %v1251
        %v1253 = vsub.f32 1.0, %v1248
        %v1254 = vmul.f32 %v1253, %v1252
        %v1255 = vmul.f32 %v1248, 0.0
        %v1256 = vadd.f32 %v1254, %v1255
        %vm1257 = vcmask 253952
        %1258 = vst.msk [vmem:[#allocation3] sm:$0x1] %vm1257, %v1256
        %v1259 = vpack.c.bf16 %v1256, %v1256
        %v1261 = vsel %vm898, %v1259, 0
        %1263 = vmatprep.subr.bf16.mxu0 0
        %1264 = vmatpush1.bf16.msra.mxu0 %v1089
        %1265 = vmatprep.subr.bf16.mxu0 0
        %1266 = vmatpush1.bf16.msra.mxu0 %v1090
        %1267 = vmatprep.subr.bf16.mxu0 0
        %1268 = vmatpush1.bf16.msra.mxu0 0
        %1269 = vmatprep.subr.bf16.mxu0 0
        %1270 = vmatpush1.bf16.msra.mxu0 0
        %1271 = vmatprep.subr.bf16.mxu0 0
        %1272 = vmatpush1.bf16.msra.mxu0 0
        %1273 = vmatprep.subr.bf16.mxu0 0
        %1274 = vmatpush1.bf16.msra.mxu0 0
        %1275 = vmatprep.subr.bf16.mxu0 0
        %1276 = vmatpush1.bf16.msra.mxu0 0
        %1277 = vmatprep.subr.bf16.mxu0 0
        %1278 = vmatpush1.bf16.msra.mxu0 0
        %1279 = vmatprep.subr.bf16.mxu0 0
        %1280 = vmatpush1.bf16.msra.mxu0 0
        %1281 = vmatprep.subr.bf16.mxu0 0
        %1282 = vmatpush1.bf16.msra.mxu0 0
        %1283 = vmatprep.subr.bf16.mxu0 0
        %1284 = vmatpush1.bf16.msra.mxu0 0
        %1285 = vmatprep.subr.bf16.mxu0 0
        %1286 = vmatpush1.bf16.msra.mxu0 0
        %1287 = vmatprep.subr.bf16.mxu0 0
        %1288 = vmatpush1.bf16.msra.mxu0 0
        %1289 = vmatprep.subr.bf16.mxu0 0
        %1290 = vmatpush1.bf16.msra.mxu0 0
        %1291 = vmatprep.subr.bf16.mxu0 0
        %1292 = vmatpush1.bf16.msra.mxu0 0
        %1293 = vmatprep.subr.bf16.mxu0 0
        %1294 = vmatpush1.bf16.msra.mxu0 0
        %1295 = vmatprep.mubr.bf16.mxu0 0
        %1296 = vmatmul.mubr.bf16.gmra.mrb[0].mxu0 %v1261
        %v1297 = vpop.f32.mrb[0].mxu0
        %v1298 = vadd.f32 %v1105, %v1297
        %v1299 = vpop.f32.mrb[0].mxu0
        %v1300 = vpop.f32.mrb[0].mxu0
        %v1301 = vpop.f32.mrb[0].mxu0
        %1302 = vdwg.mxu0
        %1303 = vmatprep.subr.bf16.mxu0 0
        %1304 = vmatpush1.bf16.msra.mxu0 %v1096
        %1305 = vmatprep.subr.bf16.mxu0 0
        %1306 = vmatpush1.bf16.msra.mxu0 %v1097
        %1307 = vmatprep.subr.bf16.mxu0 0
        %1308 = vmatpush1.bf16.msra.mxu0 0
        %1309 = vmatprep.subr.bf16.mxu0 0
        %1310 = vmatpush1.bf16.msra.mxu0 0
        %1311 = vmatprep.subr.bf16.mxu0 0
        %1312 = vmatpush1.bf16.msra.mxu0 0
        %1313 = vmatprep.subr.bf16.mxu0 0
        %1314 = vmatpush1.bf16.msra.mxu0 0
        %1315 = vmatprep.subr.bf16.mxu0 0
        %1316 = vmatpush1.bf16.msra.mxu0 0
        %1317 = vmatprep.subr.bf16.mxu0 0
        %1318 = vmatpush1.bf16.msra.mxu0 0
        %1319 = vmatprep.subr.bf16.mxu0 0
        %1320 = vmatpush1.bf16.msra.mxu0 0
        %1321 = vmatprep.subr.bf16.mxu0 0
        %1322 = vmatpush1.bf16.msra.mxu0 0
        %1323 = vmatprep.subr.bf16.mxu0 0
        %1324 = vmatpush1.bf16.msra.mxu0 0
        %1325 = vmatprep.subr.bf16.mxu0 0
        %1326 = vmatpush1.bf16.msra.mxu0 0
        %1327 = vmatprep.subr.bf16.mxu0 0
        %1328 = vmatpush1.bf16.msra.mxu0 0
        %1329 = vmatprep.subr.bf16.mxu0 0
        %1330 = vmatpush1.bf16.msra.mxu0 0
        %1331 = vmatprep.subr.bf16.mxu0 0
        %1332 = vmatpush1.bf16.msra.mxu0 0
        %1333 = vmatprep.subr.bf16.mxu0 0
        %1334 = vmatpush1.bf16.msra.mxu0 0
        %1335 = vmatprep.mubr.bf16.mxu0 0
        %1336 = vmatmul.mubr.bf16.gmra.mrb[0].mxu0 %v1261
        %v1337 = vpop.f32.mrb[0].mxu0
        %v1338 = vadd.f32 %v1107, %v1337
        %v1339 = vpop.f32.mrb[0].mxu0
        %v1340 = vpop.f32.mrb[0].mxu0
        %v1341 = vpop.f32.mrb[0].mxu0
        %1342 = vdwg.mxu0
        %1343 = vmatprep.subr.bf16.mxu0 0
        %1344 = vmatpush1.bf16.msra.mxu0 %v1103
        %1345 = vmatprep.subr.bf16.mxu0 0
        %1346 = vmatpush1.bf16.msra.mxu0 %v1104
        %1347 = vmatprep.subr.bf16.mxu0 0
        %1348 = vmatpush1.bf16.msra.mxu0 0
        %1349 = vmatprep.subr.bf16.mxu0 0
        %1350 = vmatpush1.bf16.msra.mxu0 0
        %1351 = vmatprep.subr.bf16.mxu0 0
        %1352 = vmatpush1.bf16.msra.mxu0 0
        %1353 = vmatprep.subr.bf16.mxu0 0
        %1354 = vmatpush1.bf16.msra.mxu0 0
        %1355 = vmatprep.subr.bf16.mxu0 0
        %1356 = vmatpush1.bf16.msra.mxu0 0
        %1357 = vmatprep.subr.bf16.mxu0 0
        %1358 = vmatpush1.bf16.msra.mxu0 0
        %1359 = vmatprep.subr.bf16.mxu0 0
        %1360 = vmatpush1.bf16.msra.mxu0 0
        %1361 = vmatprep.subr.bf16.mxu0 0
        %1362 = vmatpush1.bf16.msra.mxu0 0
        %1363 = vmatprep.subr.bf16.mxu0 0
        %1364 = vmatpush1.bf16.msra.mxu0 0
        %1365 = vmatprep.subr.bf16.mxu0 0
        %1366 = vmatpush1.bf16.msra.mxu0 0
        %1367 = vmatprep.subr.bf16.mxu0 0
        %1368 = vmatpush1.bf16.msra.mxu0 0
        %1369 = vmatprep.subr.bf16.mxu0 0
        %1370 = vmatpush1.bf16.msra.mxu0 0
        %1371 = vmatprep.subr.bf16.mxu0 0
        %1372 = vmatpush1.bf16.msra.mxu0 0
        %1373 = vmatprep.subr.bf16.mxu0 0
        %1374 = vmatpush1.bf16.msra.mxu0 0
        %1375 = vmatprep.mubr.bf16.mxu0 0
        %1376 = vmatmul.mubr.bf16.gmra.mrb[0].mxu0 %v1261
        %v1377 = vpop.f32.mrb[0].mxu0
        %v1378 = vadd.f32 %v1109, %v1377
        %v1379 = vpop.f32.mrb[0].mxu0
        %v1380 = vpop.f32.mrb[0].mxu0
        %v1381 = vpop.f32.mrb[0].mxu0
        %1382 = vdwg.mxu0
        %v1383 = vld [vmem:[#allocation2 + $0x1] sm:$0x1]
        %v1384 = vadd.f32 %v1383, %v1298
        %v1385 = vxor.u32 %v1384, 2147483648
        %v1386 = vmul.f32 %v1385, 1.442695
        %v1387 = vpow.pop %v1386
        %v1388 = vadd.f32 %v1387, 1.0
        %v1389 = vrcp.pop %v1388
        %v1390 = vmul.f32 1.0, %v1389
        %v1391 = vld [vmem:[%s1026 + $0x1] sm:$0x1]
        %v1392 = vadd.f32 %v1391, %v1338
        %v1393 = vxor.u32 %v1392, 2147483648
        %v1394 = vmul.f32 %v1393, 1.442695
        %v1395 = vpow.pop %v1394
        %v1396 = vadd.f32 %v1395, 1.0
        %v1397 = vrcp.pop %v1396
        %v1398 = vmul.f32 1.0, %v1397
        %v1399 = vld [vmem:[%s1083 + $0x1] sm:$0x1]
        %v1400 = vmul.f32 %v1390, %v1378
        %v1401 = vadd.f32 %v1399, %v1400
        %v1402 = vtanh.pop %v1401
        %v1403 = vsub.f32 1.0, %v1398
        %v1404 = vmul.f32 %v1403, %v1402
        %v1405 = vmul.f32 %v1398, %v1256
        %v1406 = vadd.f32 %v1404, %v1405
        %1407 = vst.msk [vmem:[#allocation3 + $0x1] sm:$0x1] %vm1257, %v1406
        %v1408 = vpack.c.bf16 %v1406, %v1406
        %v1410 = vsel %vm898, %v1408, 0
        %1412 = vmatprep.subr.bf16.mxu0 0
        %1413 = vmatpush1.bf16.msra.mxu0 %v1089
        %1414 = vmatprep.subr.bf16.mxu0 0
        %1415 = vmatpush1.bf16.msra.mxu0 %v1090
        %1416 = vmatprep.subr.bf16.mxu0 0
        %1417 = vmatpush1.bf16.msra.mxu0 0
        %1418 = vmatprep.subr.bf16.mxu0 0
        %1419 = vmatpush1.bf16.msra.mxu0 0
        %1420 = vmatprep.subr.bf16.mxu0 0
        %1421 = vmatpush1.bf16.msra.mxu0 0
        %1422 = vmatprep.subr.bf16.mxu0 0
        %1423 = vmatpush1.bf16.msra.mxu0 0
        %1424 = vmatprep.subr.bf16.mxu0 0
        %1425 = vmatpush1.bf16.msra.mxu0 0
        %1426 = vmatprep.subr.bf16.mxu0 0
        %1427 = vmatpush1.bf16.msra.mxu0 0
        %1428 = vmatprep.subr.bf16.mxu0 0
        %1429 = vmatpush1.bf16.msra.mxu0 0
        %1430 = vmatprep.subr.bf16.mxu0 0
        %1431 = vmatpush1.bf16.msra.mxu0 0
        %1432 = vmatprep.subr.bf16.mxu0 0
        %1433 = vmatpush1.bf16.msra.mxu0 0
        %1434 = vmatprep.subr.bf16.mxu0 0
        %1435 = vmatpush1.bf16.msra.mxu0 0
        %1436 = vmatprep.subr.bf16.mxu0 0
        %1437 = vmatpush1.bf16.msra.mxu0 0
        %1438 = vmatprep.subr.bf16.mxu0 0
        %1439 = vmatpush1.bf16.msra.mxu0 0
        %1440 = vmatprep.subr.bf16.mxu0 0
        %1441 = vmatpush1.bf16.msra.mxu0 0
        %1442 = vmatprep.subr.bf16.mxu0 0
        %1443 = vmatpush1.bf16.msra.mxu0 0
        %1444 = vmatprep.mubr.bf16.mxu0 0
        %1445 = vmatmul.mubr.bf16.gmra.mrb[0].mxu0 %v1410
        %v1446 = vpop.f32.mrb[0].mxu0
        %v1447 = vadd.f32 %v1105, %v1446
        %v1448 = vpop.f32.mrb[0].mxu0
        %v1449 = vpop.f32.mrb[0].mxu0
        %v1450 = vpop.f32.mrb[0].mxu0
        %1451 = vdwg.mxu0
        %1452 = vmatprep.subr.bf16.mxu0 0
        %1453 = vmatpush1.bf16.msra.mxu0 %v1096
        %1454 = vmatprep.subr.bf16.mxu0 0
        %1455 = vmatpush1.bf16.msra.mxu0 %v1097
        %1456 = vmatprep.subr.bf16.mxu0 0
        %1457 = vmatpush1.bf16.msra.mxu0 0
        %1458 = vmatprep.subr.bf16.mxu0 0
        %1459 = vmatpush1.bf16.msra.mxu0 0
        %1460 = vmatprep.subr.bf16.mxu0 0
        %1461 = vmatpush1.bf16.msra.mxu0 0
        %1462 = vmatprep.subr.bf16.mxu0 0
        %1463 = vmatpush1.bf16.msra.mxu0 0
        %1464 = vmatprep.subr.bf16.mxu0 0
        %1465 = vmatpush1.bf16.msra.mxu0 0
        %1466 = vmatprep.subr.bf16.mxu0 0
        %1467 = vmatpush1.bf16.msra.mxu0 0
        %1468 = vmatprep.subr.bf16.mxu0 0
        %1469 = vmatpush1.bf16.msra.mxu0 0
        %1470 = vmatprep.subr.bf16.mxu0 0
        %1471 = vmatpush1.bf16.msra.mxu0 0
        %1472 = vmatprep.subr.bf16.mxu0 0
        %1473 = vmatpush1.bf16.msra.mxu0 0
        %1474 = vmatprep.subr.bf16.mxu0 0
        %1475 = vmatpush1.bf16.msra.mxu0 0
        %1476 = vmatprep.subr.bf16.mxu0 0
        %1477 = vmatpush1.bf16.msra.mxu0 0
        %1478 = vmatprep.subr.bf16.mxu0 0
        %1479 = vmatpush1.bf16.msra.mxu0 0
        %1480 = vmatprep.subr.bf16.mxu0 0
        %1481 = vmatpush1.bf16.msra.mxu0 0
        %1482 = vmatprep.subr.bf16.mxu0 0
        %1483 = vmatpush1.bf16.msra.mxu0 0
        %1484 = vmatprep.mubr.bf16.mxu0 0
        %1485 = vmatmul.mubr.bf16.gmra.mrb[0].mxu0 %v1410
        %v1486 = vpop.f32.mrb[0].mxu0
        %v1487 = vadd.f32 %v1107, %v1486
        %v1488 = vpop.f32.mrb[0].mxu0
        %v1489 = vpop.f32.mrb[0].mxu0
        %v1490 = vpop.f32.mrb[0].mxu0
        %1491 = vdwg.mxu0
        %1492 = vmatprep.subr.bf16.mxu0 0
        %1493 = vmatpush1.bf16.msra.mxu0 %v1103
        %1494 = vmatprep.subr.bf16.mxu0 0
        %1495 = vmatpush1.bf16.msra.mxu0 %v1104
        %1496 = vmatprep.subr.bf16.mxu0 0
        %1497 = vmatpush1.bf16.msra.mxu0 0
        %1498 = vmatprep.subr.bf16.mxu0 0
        %1499 = vmatpush1.bf16.msra.mxu0 0
        %1500 = vmatprep.subr.bf16.mxu0 0
        %1501 = vmatpush1.bf16.msra.mxu0 0
        %1502 = vmatprep.subr.bf16.mxu0 0
        %1503 = vmatpush1.bf16.msra.mxu0 0
        %1504 = vmatprep.subr.bf16.mxu0 0
        %1505 = vmatpush1.bf16.msra.mxu0 0
        %1506 = vmatprep.subr.bf16.mxu0 0
        %1507 = vmatpush1.bf16.msra.mxu0 0
        %1508 = vmatprep.subr.bf16.mxu0 0
        %1509 = vmatpush1.bf16.msra.mxu0 0
        %1510 = vmatprep.subr.bf16.mxu0 0
        %1511 = vmatpush1.bf16.msra.mxu0 0
        %1512 = vmatprep.subr.bf16.mxu0 0
        %1513 = vmatpush1.bf16.msra.mxu0 0
        %1514 = vmatprep.subr.bf16.mxu0 0
        %1515 = vmatpush1.bf16.msra.mxu0 0
        %1516 = vmatprep.subr.bf16.mxu0 0
        %1517 = vmatpush1.bf16.msra.mxu0 0
        %1518 = vmatprep.subr.bf16.mxu0 0
        %1519 = vmatpush1.bf16.msra.mxu0 0
        %1520 = vmatprep.subr.bf16.mxu0 0
        %1521 = vmatpush1.bf16.msra.mxu0 0
        %1522 = vmatprep.subr.bf16.mxu0 0
        %1523 = vmatpush1.bf16.msra.mxu0 0
        %1524 = vmatprep.mubr.bf16.mxu0 0
        %1525 = vmatmul.mubr.bf16.gmra.mrb[0].mxu0 %v1410
        %v1526 = vpop.f32.mrb[0].mxu0
        %v1527 = vadd.f32 %v1109, %v1526
        %v1528 = vpop.f32.mrb[0].mxu0
        %v1529 = vpop.f32.mrb[0].mxu0
        %v1530 = vpop.f32.mrb[0].mxu0
        %1531 = vdwg.mxu0
        %v1532 = vld [vmem:[#allocation2 + $0x2] sm:$0x1]
        %v1533 = vadd.f32 %v1532, %v1447
        %v1534 = vxor.u32 %v1533, 2147483648
        %v1535 = vmul.f32 %v1534, 1.442695
        %v1536 = vpow.pop %v1535
        %v1537 = vadd.f32 %v1536, 1.0
        %v1538 = vrcp.pop %v1537
        %v1539 = vmul.f32 1.0, %v1538
        %v1540 = vld [vmem:[%s1026 + $0x2] sm:$0x1]
        %v1541 = vadd.f32 %v1540, %v1487
        %v1542 = vxor.u32 %v1541, 2147483648
        %v1543 = vmul.f32 %v1542, 1.442695
        %v1544 = vpow.pop %v1543
        %v1545 = vadd.f32 %v1544, 1.0
        %v1546 = vrcp.pop %v1545
        %v1547 = vmul.f32 1.0, %v1546
        %v1548 = vld [vmem:[%s1083 + $0x2] sm:$0x1]
        %v1549 = vmul.f32 %v1539, %v1527
        %v1550 = vadd.f32 %v1548, %v1549
        %v1551 = vtanh.pop %v1550
        %v1552 = vsub.f32 1.0, %v1547
        %v1553 = vmul.f32 %v1552, %v1551
        %v1554 = vmul.f32 %v1547, %v1406
        %v1555 = vadd.f32 %v1553, %v1554
        %1556 = vst.msk [vmem:[#allocation3 + $0x2] sm:$0x1] %vm1257, %v1555
        %v1557 = vpack.c.bf16 %v1555, %v1555
        %v1559 = vsel %vm898, %v1557, 0
        %1561 = vmatprep.subr.bf16.mxu0 0
        %1562 = vmatpush1.bf16.msra.mxu0 %v1089
        %1563 = vmatprep.subr.bf16.mxu0 0
        %1564 = vmatpush1.bf16.msra.mxu0 %v1090
        %1565 = vmatprep.subr.bf16.mxu0 0
        %1566 = vmatpush1.bf16.msra.mxu0 0
        %1567 = vmatprep.subr.bf16.mxu0 0
        %1568 = vmatpush1.bf16.msra.mxu0 0
        %1569 = vmatprep.subr.bf16.mxu0 0
        %1570 = vmatpush1.bf16.msra.mxu0 0
        %1571 = vmatprep.subr.bf16.mxu0 0
        %1572 = vmatpush1.bf16.msra.mxu0 0
        %1573 = vmatprep.subr.bf16.mxu0 0
        %1574 = vmatpush1.bf16.msra.mxu0 0
        %1575 = vmatprep.subr.bf16.mxu0 0
        %1576 = vmatpush1.bf16.msra.mxu0 0
        %1577 = vmatprep.subr.bf16.mxu0 0
        %1578 = vmatpush1.bf16.msra.mxu0 0
        %1579 = vmatprep.subr.bf16.mxu0 0
        %1580 = vmatpush1.bf16.msra.mxu0 0
        %1581 = vmatprep.subr.bf16.mxu0 0
        %1582 = vmatpush1.bf16.msra.mxu0 0
        %1583 = vmatprep.subr.bf16.mxu0 0
        %1584 = vmatpush1.bf16.msra.mxu0 0
        %1585 = vmatprep.subr.bf16.mxu0 0
        %1586 = vmatpush1.bf16.msra.mxu0 0
        %1587 = vmatprep.subr.bf16.mxu0 0
        %1588 = vmatpush1.bf16.msra.mxu0 0
        %1589 = vmatprep.subr.bf16.mxu0 0
        %1590 = vmatpush1.bf16.msra.mxu0 0
        %1591 = vmatprep.subr.bf16.mxu0 0
        %1592 = vmatpush1.bf16.msra.mxu0 0
        %1593 = vmatprep.mubr.bf16.mxu0 0
        %1594 = vmatmul.mubr.bf16.gmra.mrb[0].mxu0 %v1559
        %v1595 = vpop.f32.mrb[0].mxu0
        %v1596 = vadd.f32 %v1105, %v1595
        %v1597 = vpop.f32.mrb[0].mxu0
        %v1598 = vpop.f32.mrb[0].mxu0
        %v1599 = vpop.f32.mrb[0].mxu0
        %1600 = vdwg.mxu0
        %1601 = vmatprep.subr.bf16.mxu0 0
        %1602 = vmatpush1.bf16.msra.mxu0 %v1096
        %1603 = vmatprep.subr.bf16.mxu0 0
        %1604 = vmatpush1.bf16.msra.mxu0 %v1097
        %1605 = vmatprep.subr.bf16.mxu0 0
        %1606 = vmatpush1.bf16.msra.mxu0 0
        %1607 = vmatprep.subr.bf16.mxu0 0
        %1608 = vmatpush1.bf16.msra.mxu0 0
        %1609 = vmatprep.subr.bf16.mxu0 0
        %1610 = vmatpush1.bf16.msra.mxu0 0
        %1611 = vmatprep.subr.bf16.mxu0 0
        %1612 = vmatpush1.bf16.msra.mxu0 0
        %1613 = vmatprep.subr.bf16.mxu0 0
        %1614 = vmatpush1.bf16.msra.mxu0 0
        %1615 = vmatprep.subr.bf16.mxu0 0
        %1616 = vmatpush1.bf16.msra.mxu0 0
        %1617 = vmatprep.subr.bf16.mxu0 0
        %1618 = vmatpush1.bf16.msra.mxu0 0
        %1619 = vmatprep.subr.bf16.mxu0 0
        %1620 = vmatpush1.bf16.msra.mxu0 0
        %1621 = vmatprep.subr.bf16.mxu0 0
        %1622 = vmatpush1.bf16.msra.mxu0 0
        %1623 = vmatprep.subr.bf16.mxu0 0
        %1624 = vmatpush1.bf16.msra.mxu0 0
        %1625 = vmatprep.subr.bf16.mxu0 0
        %1626 = vmatpush1.bf16.msra.mxu0 0
        %1627 = vmatprep.subr.bf16.mxu0 0
        %1628 = vmatpush1.bf16.msra.mxu0 0
        %1629 = vmatprep.subr.bf16.mxu0 0
        %1630 = vmatpush1.bf16.msra.mxu0 0
        %1631 = vmatprep.subr.bf16.mxu0 0
        %1632 = vmatpush1.bf16.msra.mxu0 0
        %1633 = vmatprep.mubr.bf16.mxu0 0
        %1634 = vmatmul.mubr.bf16.gmra.mrb[0].mxu0 %v1559
        %v1635 = vpop.f32.mrb[0].mxu0
        %v1636 = vadd.f32 %v1107, %v1635
        %v1637 = vpop.f32.mrb[0].mxu0
        %v1638 = vpop.f32.mrb[0].mxu0
        %v1639 = vpop.f32.mrb[0].mxu0
        %1640 = vdwg.mxu0
        %1641 = vmatprep.subr.bf16.mxu0 0
        %1642 = vmatpush1.bf16.msra.mxu0 %v1103
        %1643 = vmatprep.subr.bf16.mxu0 0
        %1644 = vmatpush1.bf16.msra.mxu0 %v1104
        %1645 = vmatprep.subr.bf16.mxu0 0
        %1646 = vmatpush1.bf16.msra.mxu0 0
        %1647 = vmatprep.subr.bf16.mxu0 0
        %1648 = vmatpush1.bf16.msra.mxu0 0
        %1649 = vmatprep.subr.bf16.mxu0 0
        %1650 = vmatpush1.bf16.msra.mxu0 0
        %1651 = vmatprep.subr.bf16.mxu0 0
        %1652 = vmatpush1.bf16.msra.mxu0 0
        %1653 = vmatprep.subr.bf16.mxu0 0
        %1654 = vmatpush1.bf16.msra.mxu0 0
        %1655 = vmatprep.subr.bf16.mxu0 0
        %1656 = vmatpush1.bf16.msra.mxu0 0
        %1657 = vmatprep.subr.bf16.mxu0 0
        %1658 = vmatpush1.bf16.msra.mxu0 0
        %1659 = vmatprep.subr.bf16.mxu0 0
        %1660 = vmatpush1.bf16.msra.mxu0 0
        %1661 = vmatprep.subr.bf16.mxu0 0
        %1662 = vmatpush1.bf16.msra.mxu0 0
        %1663 = vmatprep.subr.bf16.mxu0 0
        %1664 = vmatpush1.bf16.msra.mxu0 0
        %1665 = vmatprep.subr.bf16.mxu0 0
        %1666 = vmatpush1.bf16.msra.mxu0 0
        %1667 = vmatprep.subr.bf16.mxu0 0
        %1668 = vmatpush1.bf16.msra.mxu0 0
        %1669 = vmatprep.subr.bf16.mxu0 0
        %1670 = vmatpush1.bf16.msra.mxu0 0
        %1671 = vmatprep.subr.bf16.mxu0 0
        %1672 = vmatpush1.bf16.msra.mxu0 0
        %1673 = vmatprep.mubr.bf16.mxu0 0
        %1674 = vmatmul.mubr.bf16.gmra.mrb[0].mxu0 %v1559
        %v1675 = vpop.f32.mrb[0].mxu0
        %v1676 = vadd.f32 %v1109, %v1675
        %v1677 = vpop.f32.mrb[0].mxu0
        %v1678 = vpop.f32.mrb[0].mxu0
        %v1679 = vpop.f32.mrb[0].mxu0
        %1680 = vdwg.mxu0
        %v1681 = vld [vmem:[#allocation2 + $0x3] sm:$0x1]
        %v1682 = vadd.f32 %v1681, %v1596
        %v1683 = vxor.u32 %v1682, 2147483648
        %v1684 = vmul.f32 %v1683, 1.442695
        %v1685 = vpow.pop %v1684
        %v1686 = vadd.f32 %v1685, 1.0
        %v1687 = vrcp.pop %v1686
        %v1688 = vmul.f32 1.0, %v1687
        %v1689 = vld [vmem:[%s1026 + $0x3] sm:$0x1]
        %v1690 = vadd.f32 %v1689, %v1636
        %v1691 = vxor.u32 %v1690, 2147483648
        %v1692 = vmul.f32 %v1691, 1.442695
        %v1693 = vpow.pop %v1692
        %v1694 = vadd.f32 %v1693, 1.0
        %v1695 = vrcp.pop %v1694
        %v1696 = vmul.f32 1.0, %v1695
        %v1697 = vld [vmem:[%s1083 + $0x3] sm:$0x1]
        %v1698 = vmul.f32 %v1688, %v1676
        %v1699 = vadd.f32 %v1697, %v1698
        %v1700 = vtanh.pop %v1699
        %v1701 = vsub.f32 1.0, %v1696
        %v1702 = vmul.f32 %v1701, %v1700
        %v1703 = vmul.f32 %v1696, %v1555
        %v1704 = vadd.f32 %v1702, %v1703
        %1705 = vst.msk [vmem:[#allocation3 + $0x3] sm:$0x1] %vm1257, %v1704
        %v1706 = vpack.c.bf16 %v1704, %v1704
        %v1708 = vsel %vm898, %v1706, 0
        %1710 = vmatprep.subr.bf16.mxu0 0
        %1711 = vmatpush1.bf16.msra.mxu0 %v1089
        %1712 = vmatprep.subr.bf16.mxu0 0
        %1713 = vmatpush1.bf16.msra.mxu0 %v1090
        %1714 = vmatprep.subr.bf16.mxu0 0
        %1715 = vmatpush1.bf16.msra.mxu0 0
        %1716 = vmatprep.subr.bf16.mxu0 0
        %1717 = vmatpush1.bf16.msra.mxu0 0
        %1718 = vmatprep.subr.bf16.mxu0 0
        %1719 = vmatpush1.bf16.msra.mxu0 0
        %1720 = vmatprep.subr.bf16.mxu0 0
        %1721 = vmatpush1.bf16.msra.mxu0 0
        %1722 = vmatprep.subr.bf16.mxu0 0
        %1723 = vmatpush1.bf16.msra.mxu0 0
        %1724 = vmatprep.subr.bf16.mxu0 0
        %1725 = vmatpush1.bf16.msra.mxu0 0
        %1726 = vmatprep.subr.bf16.mxu0 0
        %1727 = vmatpush1.bf16.msra.mxu0 0
        %1728 = vmatprep.subr.bf16.mxu0 0
        %1729 = vmatpush1.bf16.msra.mxu0 0
        %1730 = vmatprep.subr.bf16.mxu0 0
        %1731 = vmatpush1.bf16.msra.mxu0 0
        %1732 = vmatprep.subr.bf16.mxu0 0
        %1733 = vmatpush1.bf16.msra.mxu0 0
        %1734 = vmatprep.subr.bf16.mxu0 0
        %1735 = vmatpush1.bf16.msra.mxu0 0
        %1736 = vmatprep.subr.bf16.mxu0 0
        %1737 = vmatpush1.bf16.msra.mxu0 0
        %1738 = vmatprep.subr.bf16.mxu0 0
        %1739 = vmatpush1.bf16.msra.mxu0 0
        %1740 = vmatprep.subr.bf16.mxu0 0
        %1741 = vmatpush1.bf16.msra.mxu0 0
        %1742 = vmatprep.mubr.bf16.mxu0 0
        %1743 = vmatmul.mubr.bf16.gmra.mrb[0].mxu0 %v1708
        %v1744 = vpop.f32.mrb[0].mxu0
        %v1745 = vadd.f32 %v1105, %v1744
        %v1746 = vpop.f32.mrb[0].mxu0
        %v1747 = vpop.f32.mrb[0].mxu0
        %v1748 = vpop.f32.mrb[0].mxu0
        %1749 = vdwg.mxu0
        %1750 = vmatprep.subr.bf16.mxu0 0
        %1751 = vmatpush1.bf16.msra.mxu0 %v1096
        %1752 = vmatprep.subr.bf16.mxu0 0
        %1753 = vmatpush1.bf16.msra.mxu0 %v1097
        %1754 = vmatprep.subr.bf16.mxu0 0
        %1755 = vmatpush1.bf16.msra.mxu0 0
        %1756 = vmatprep.subr.bf16.mxu0 0
        %1757 = vmatpush1.bf16.msra.mxu0 0
        %1758 = vmatprep.subr.bf16.mxu0 0
        %1759 = vmatpush1.bf16.msra.mxu0 0
        %1760 = vmatprep.subr.bf16.mxu0 0
        %1761 = vmatpush1.bf16.msra.mxu0 0
        %1762 = vmatprep.subr.bf16.mxu0 0
        %1763 = vmatpush1.bf16.msra.mxu0 0
        %1764 = vmatprep.subr.bf16.mxu0 0
        %1765 = vmatpush1.bf16.msra.mxu0 0
        %1766 = vmatprep.subr.bf16.mxu0 0
        %1767 = vmatpush1.bf16.msra.mxu0 0
        %1768 = vmatprep.subr.bf16.mxu0 0
        %1769 = vmatpush1.bf16.msra.mxu0 0
        %1770 = vmatprep.subr.bf16.mxu0 0
        %1771 = vmatpush1.bf16.msra.mxu0 0
        %1772 = vmatprep.subr.bf16.mxu0 0
        %1773 = vmatpush1.bf16.msra.mxu0 0
        %1774 = vmatprep.subr.bf16.mxu0 0
        %1775 = vmatpush1.bf16.msra.mxu0 0
        %1776 = vmatprep.subr.bf16.mxu0 0
        %1777 = vmatpush1.bf16.msra.mxu0 0
        %1778 = vmatprep.subr.bf16.mxu0 0
        %1779 = vmatpush1.bf16.msra.mxu0 0
        %1780 = vmatprep.subr.bf16.mxu0 0
        %1781 = vmatpush1.bf16.msra.mxu0 0
        %1782 = vmatprep.mubr.bf16.mxu0 0
        %1783 = vmatmul.mubr.bf16.gmra.mrb[0].mxu0 %v1708
        %v1784 = vpop.f32.mrb[0].mxu0
        %v1785 = vadd.f32 %v1107, %v1784
        %v1786 = vpop.f32.mrb[0].mxu0
        %v1787 = vpop.f32.mrb[0].mxu0
        %v1788 = vpop.f32.mrb[0].mxu0
        %1789 = vdwg.mxu0
        %1790 = vmatprep.subr.bf16.mxu0 0
        %1791 = vmatpush1.bf16.msra.mxu0 %v1103
        %1792 = vmatprep.subr.bf16.mxu0 0
        %1793 = vmatpush1.bf16.msra.mxu0 %v1104
        %1794 = vmatprep.subr.bf16.mxu0 0
        %1795 = vmatpush1.bf16.msra.mxu0 0
        %1796 = vmatprep.subr.bf16.mxu0 0
        %1797 = vmatpush1.bf16.msra.mxu0 0
        %1798 = vmatprep.subr.bf16.mxu0 0
        %1799 = vmatpush1.bf16.msra.mxu0 0
        %1800 = vmatprep.subr.bf16.mxu0 0
        %1801 = vmatpush1.bf16.msra.mxu0 0
        %1802 = vmatprep.subr.bf16.mxu0 0
        %1803 = vmatpush1.bf16.msra.mxu0 0
        %1804 = vmatprep.subr.bf16.mxu0 0
        %1805 = vmatpush1.bf16.msra.mxu0 0
        %1806 = vmatprep.subr.bf16.mxu0 0
        %1807 = vmatpush1.bf16.msra.mxu0 0
        %1808 = vmatprep.subr.bf16.mxu0 0
        %1809 = vmatpush1.bf16.msra.mxu0 0
        %1810 = vmatprep.subr.bf16.mxu0 0
        %1811 = vmatpush1.bf16.msra.mxu0 0
        %1812 = vmatprep.subr.bf16.mxu0 0
        %1813 = vmatpush1.bf16.msra.mxu0 0
        %1814 = vmatprep.subr.bf16.mxu0 0
        %1815 = vmatpush1.bf16.msra.mxu0 0
        %1816 = vmatprep.subr.bf16.mxu0 0
        %1817 = vmatpush1.bf16.msra.mxu0 0
        %1818 = vmatprep.subr.bf16.mxu0 0
        %1819 = vmatpush1.bf16.msra.mxu0 0
        %1820 = vmatprep.subr.bf16.mxu0 0
        %1821 = vmatpush1.bf16.msra.mxu0 0
        %1822 = vmatprep.mubr.bf16.mxu0 0
        %1823 = vmatmul.mubr.bf16.gmra.mrb[0].mxu0 %v1708
        %v1824 = vpop.f32.mrb[0].mxu0
        %v1825 = vadd.f32 %v1109, %v1824
        %v1826 = vpop.f32.mrb[0].mxu0
        %v1827 = vpop.f32.mrb[0].mxu0
        %v1828 = vpop.f32.mrb[0].mxu0
        %1829 = vdwg.mxu0
        %v1830 = vld [vmem:[#allocation2 + $0x4] sm:$0x1]
        %v1831 = vadd.f32 %v1830, %v1745
        %v1832 = vxor.u32 %v1831, 2147483648
        %v1833 = vmul.f32 %v1832, 1.442695
        %v1834 = vpow.pop %v1833
        %v1835 = vadd.f32 %v1834, 1.0
        %v1836 = vrcp.pop %v1835
        %v1837 = vmul.f32 1.0, %v1836
        %v1838 = vld [vmem:[%s1026 + $0x4] sm:$0x1]
        %v1839 = vadd.f32 %v1838, %v1785
        %v1840 = vxor.u32 %v1839, 2147483648
        %v1841 = vmul.f32 %v1840, 1.442695
        %v1842 = vpow.pop %v1841
        %v1843 = vadd.f32 %v1842, 1.0
        %v1844 = vrcp.pop %v1843
        %v1845 = vmul.f32 1.0, %v1844
        %v1846 = vld [vmem:[%s1083 + $0x4] sm:$0x1]
        %v1847 = vmul.f32 %v1837, %v1825
        %v1848 = vadd.f32 %v1846, %v1847
        %v1849 = vtanh.pop %v1848
        %v1850 = vsub.f32 1.0, %v1845
        %v1851 = vmul.f32 %v1850, %v1849
        %v1852 = vmul.f32 %v1845, %v1704
        %v1853 = vadd.f32 %v1851, %v1852
        %1854 = vst.msk [vmem:[#allocation3 + $0x4] sm:$0x1] %vm1257, %v1853
        %v1855 = vpack.c.bf16 %v1853, %v1853
        %v1857 = vsel %vm898, %v1855, 0
        %1859 = vmatprep.subr.bf16.mxu0 0
        %1860 = vmatpush1.bf16.msra.mxu0 %v1089
        %1861 = vmatprep.subr.bf16.mxu0 0
        %1862 = vmatpush1.bf16.msra.mxu0 %v1090
        %1863 = vmatprep.subr.bf16.mxu0 0
        %1864 = vmatpush1.bf16.msra.mxu0 0
        %1865 = vmatprep.subr.bf16.mxu0 0
        %1866 = vmatpush1.bf16.msra.mxu0 0
        %1867 = vmatprep.subr.bf16.mxu0 0
        %1868 = vmatpush1.bf16.msra.mxu0 0
        %1869 = vmatprep.subr.bf16.mxu0 0
        %1870 = vmatpush1.bf16.msra.mxu0 0
        %1871 = vmatprep.subr.bf16.mxu0 0
        %1872 = vmatpush1.bf16.msra.mxu0 0
        %1873 = vmatprep.subr.bf16.mxu0 0
        %1874 = vmatpush1.bf16.msra.mxu0 0
        %1875 = vmatprep.subr.bf16.mxu0 0
        %1876 = vmatpush1.bf16.msra.mxu0 0
        %1877 = vmatprep.subr.bf16.mxu0 0
        %1878 = vmatpush1.bf16.msra.mxu0 0
        %1879 = vmatprep.subr.bf16.mxu0 0
        %1880 = vmatpush1.bf16.msra.mxu0 0
        %1881 = vmatprep.subr.bf16.mxu0 0
        %1882 = vmatpush1.bf16.msra.mxu0 0
        %1883 = vmatprep.subr.bf16.mxu0 0
        %1884 = vmatpush1.bf16.msra.mxu0 0
        %1885 = vmatprep.subr.bf16.mxu0 0
        %1886 = vmatpush1.bf16.msra.mxu0 0
        %1887 = vmatprep.subr.bf16.mxu0 0
        %1888 = vmatpush1.bf16.msra.mxu0 0
        %1889 = vmatprep.subr.bf16.mxu0 0
        %1890 = vmatpush1.bf16.msra.mxu0 0
        %1891 = vmatprep.mubr.bf16.mxu0 0
        %1892 = vmatmul.mubr.bf16.gmra.mrb[0].mxu0 %v1857
        %v1893 = vpop.f32.mrb[0].mxu0
        %v1894 = vadd.f32 %v1105, %v1893
        %v1895 = vpop.f32.mrb[0].mxu0
        %v1896 = vpop.f32.mrb[0].mxu0
        %v1897 = vpop.f32.mrb[0].mxu0
        %1898 = vdwg.mxu0
        %1899 = vmatprep.subr.bf16.mxu0 0
        %1900 = vmatpush1.bf16.msra.mxu0 %v1096
        %1901 = vmatprep.subr.bf16.mxu0 0
        %1902 = vmatpush1.bf16.msra.mxu0 %v1097
        %1903 = vmatprep.subr.bf16.mxu0 0
        %1904 = vmatpush1.bf16.msra.mxu0 0
        %1905 = vmatprep.subr.bf16.mxu0 0
        %1906 = vmatpush1.bf16.msra.mxu0 0
        %1907 = vmatprep.subr.bf16.mxu0 0
        %1908 = vmatpush1.bf16.msra.mxu0 0
        %1909 = vmatprep.subr.bf16.mxu0 0
        %1910 = vmatpush1.bf16.msra.mxu0 0
        %1911 = vmatprep.subr.bf16.mxu0 0
        %1912 = vmatpush1.bf16.msra.mxu0 0
        %1913 = vmatprep.subr.bf16.mxu0 0
        %1914 = vmatpush1.bf16.msra.mxu0 0
        %1915 = vmatprep.subr.bf16.mxu0 0
        %1916 = vmatpush1.bf16.msra.mxu0 0
        %1917 = vmatprep.subr.bf16.mxu0 0
        %1918 = vmatpush1.bf16.msra.mxu0 0
        %1919 = vmatprep.subr.bf16.mxu0 0
        %1920 = vmatpush1.bf16.msra.mxu0 0
        %1921 = vmatprep.subr.bf16.mxu0 0
        %1922 = vmatpush1.bf16.msra.mxu0 0
        %1923 = vmatprep.subr.bf16.mxu0 0
        %1924 = vmatpush1.bf16.msra.mxu0 0
        %1925 = vmatprep.subr.bf16.mxu0 0
        %1926 = vmatpush1.bf16.msra.mxu0 0
        %1927 = vmatprep.subr.bf16.mxu0 0
        %1928 = vmatpush1.bf16.msra.mxu0 0
        %1929 = vmatprep.subr.bf16.mxu0 0
        %1930 = vmatpush1.bf16.msra.mxu0 0
        %1931 = vmatprep.mubr.bf16.mxu0 0
        %1932 = vmatmul.mubr.bf16.gmra.mrb[0].mxu0 %v1857
        %v1933 = vpop.f32.mrb[0].mxu0
        %v1934 = vadd.f32 %v1107, %v1933
        %v1935 = vpop.f32.mrb[0].mxu0
        %v1936 = vpop.f32.mrb[0].mxu0
        %v1937 = vpop.f32.mrb[0].mxu0
        %1938 = vdwg.mxu0
        %1939 = vmatprep.subr.bf16.mxu0 0
        %1940 = vmatpush1.bf16.msra.mxu0 %v1103
        %1941 = vmatprep.subr.bf16.mxu0 0
        %1942 = vmatpush1.bf16.msra.mxu0 %v1104
        %1943 = vmatprep.subr.bf16.mxu0 0
        %1944 = vmatpush1.bf16.msra.mxu0 0
        %1945 = vmatprep.subr.bf16.mxu0 0
        %1946 = vmatpush1.bf16.msra.mxu0 0
        %1947 = vmatprep.subr.bf16.mxu0 0
        %1948 = vmatpush1.bf16.msra.mxu0 0
        %1949 = vmatprep.subr.bf16.mxu0 0
        %1950 = vmatpush1.bf16.msra.mxu0 0
        %1951 = vmatprep.subr.bf16.mxu0 0
        %1952 = vmatpush1.bf16.msra.mxu0 0
        %1953 = vmatprep.subr.bf16.mxu0 0
        %1954 = vmatpush1.bf16.msra.mxu0 0
        %1955 = vmatprep.subr.bf16.mxu0 0
        %1956 = vmatpush1.bf16.msra.mxu0 0
        %1957 = vmatprep.subr.bf16.mxu0 0
        %1958 = vmatpush1.bf16.msra.mxu0 0
        %1959 = vmatprep.subr.bf16.mxu0 0
        %1960 = vmatpush1.bf16.msra.mxu0 0
        %1961 = vmatprep.subr.bf16.mxu0 0
        %1962 = vmatpush1.bf16.msra.mxu0 0
        %1963 = vmatprep.subr.bf16.mxu0 0
        %1964 = vmatpush1.bf16.msra.mxu0 0
        %1965 = vmatprep.subr.bf16.mxu0 0
        %1966 = vmatpush1.bf16.msra.mxu0 0
        %1967 = vmatprep.subr.bf16.mxu0 0
        %1968 = vmatpush1.bf16.msra.mxu0 0
        %1969 = vmatprep.subr.bf16.mxu0 0
        %1970 = vmatpush1.bf16.msra.mxu0 0
        %1971 = vmatprep.mubr.bf16.mxu0 0
        %1972 = vmatmul.mubr.bf16.gmra.mrb[0].mxu0 %v1857
        %v1973 = vpop.f32.mrb[0].mxu0
        %v1974 = vadd.f32 %v1109, %v1973
        %v1975 = vpop.f32.mrb[0].mxu0
        %v1976 = vpop.f32.mrb[0].mxu0
        %v1977 = vpop.f32.mrb[0].mxu0
        %1978 = vdwg.mxu0
        %v1979 = vld [vmem:[#allocation2 + $0x5] sm:$0x1]
        %v1980 = vadd.f32 %v1979, %v1894
        %v1981 = vxor.u32 %v1980, 2147483648
        %v1982 = vmul.f32 %v1981, 1.442695
        %v1983 = vpow.pop %v1982
        %v1984 = vadd.f32 %v1983, 1.0
        %v1985 = vrcp.pop %v1984
        %v1986 = vmul.f32 1.0, %v1985
        %v1987 = vld [vmem:[%s1026 + $0x5] sm:$0x1]
        %v1988 = vadd.f32 %v1987, %v1934
        %v1989 = vxor.u32 %v1988, 2147483648
        %v1990 = vmul.f32 %v1989, 1.442695
        %v1991 = vpow.pop %v1990
        %v1992 = vadd.f32 %v1991, 1.0
        %v1993 = vrcp.pop %v1992
        %v1994 = vmul.f32 1.0, %v1993
        %v1995 = vld [vmem:[%s1083 + $0x5] sm:$0x1]
        %v1996 = vmul.f32 %v1986, %v1974
        %v1997 = vadd.f32 %v1995, %v1996
        %v1998 = vtanh.pop %v1997
        %v1999 = vsub.f32 1.0, %v1994
        %v2000 = vmul.f32 %v1999, %v1998
        %v2001 = vmul.f32 %v1994, %v1853
        %v2002 = vadd.f32 %v2000, %v2001
        %2003 = vst.msk [vmem:[#allocation3 + $0x5] sm:$0x1] %vm1257, %v2002
        %v2004 = vpack.c.bf16 %v2002, %v2002
        %v2006 = vsel %vm898, %v2004, 0
        %2008 = vmatprep.subr.bf16.mxu0 0
        %2009 = vmatpush1.bf16.msra.mxu0 %v1089
        %2010 = vmatprep.subr.bf16.mxu0 0
        %2011 = vmatpush1.bf16.msra.mxu0 %v1090
        %2012 = vmatprep.subr.bf16.mxu0 0
        %2013 = vmatpush1.bf16.msra.mxu0 0
        %2014 = vmatprep.subr.bf16.mxu0 0
        %2015 = vmatpush1.bf16.msra.mxu0 0
        %2016 = vmatprep.subr.bf16.mxu0 0
        %2017 = vmatpush1.bf16.msra.mxu0 0
        %2018 = vmatprep.subr.bf16.mxu0 0
        %2019 = vmatpush1.bf16.msra.mxu0 0
        %2020 = vmatprep.subr.bf16.mxu0 0
        %2021 = vmatpush1.bf16.msra.mxu0 0
        %2022 = vmatprep.subr.bf16.mxu0 0
        %2023 = vmatpush1.bf16.msra.mxu0 0
        %2024 = vmatprep.subr.bf16.mxu0 0
        %2025 = vmatpush1.bf16.msra.mxu0 0
        %2026 = vmatprep.subr.bf16.mxu0 0
        %2027 = vmatpush1.bf16.msra.mxu0 0
        %2028 = vmatprep.subr.bf16.mxu0 0
        %2029 = vmatpush1.bf16.msra.mxu0 0
        %2030 = vmatprep.subr.bf16.mxu0 0
        %2031 = vmatpush1.bf16.msra.mxu0 0
        %2032 = vmatprep.subr.bf16.mxu0 0
        %2033 = vmatpush1.bf16.msra.mxu0 0
        %2034 = vmatprep.subr.bf16.mxu0 0
        %2035 = vmatpush1.bf16.msra.mxu0 0
        %2036 = vmatprep.subr.bf16.mxu0 0
        %2037 = vmatpush1.bf16.msra.mxu0 0
        %2038 = vmatprep.subr.bf16.mxu0 0
        %2039 = vmatpush1.bf16.msra.mxu0 0
        %2040 = vmatprep.mubr.bf16.mxu0 0
        %2041 = vmatmul.mubr.bf16.gmra.mrb[0].mxu0 %v2006
        %v2042 = vpop.f32.mrb[0].mxu0
        %v2043 = vadd.f32 %v1105, %v2042
        %v2044 = vpop.f32.mrb[0].mxu0
        %v2045 = vpop.f32.mrb[0].mxu0
        %v2046 = vpop.f32.mrb[0].mxu0
        %2047 = vdwg.mxu0
        %2048 = vmatprep.subr.bf16.mxu0 0
        %2049 = vmatpush1.bf16.msra.mxu0 %v1096
        %2050 = vmatprep.subr.bf16.mxu0 0
        %2051 = vmatpush1.bf16.msra.mxu0 %v1097
        %2052 = vmatprep.subr.bf16.mxu0 0
        %2053 = vmatpush1.bf16.msra.mxu0 0
        %2054 = vmatprep.subr.bf16.mxu0 0
        %2055 = vmatpush1.bf16.msra.mxu0 0
        %2056 = vmatprep.subr.bf16.mxu0 0
        %2057 = vmatpush1.bf16.msra.mxu0 0
        %2058 = vmatprep.subr.bf16.mxu0 0
        %2059 = vmatpush1.bf16.msra.mxu0 0
        %2060 = vmatprep.subr.bf16.mxu0 0
        %2061 = vmatpush1.bf16.msra.mxu0 0
        %2062 = vmatprep.subr.bf16.mxu0 0
        %2063 = vmatpush1.bf16.msra.mxu0 0
        %2064 = vmatprep.subr.bf16.mxu0 0
        %2065 = vmatpush1.bf16.msra.mxu0 0
        %2066 = vmatprep.subr.bf16.mxu0 0
        %2067 = vmatpush1.bf16.msra.mxu0 0
        %2068 = vmatprep.subr.bf16.mxu0 0
        %2069 = vmatpush1.bf16.msra.mxu0 0
        %2070 = vmatprep.subr.bf16.mxu0 0
        %2071 = vmatpush1.bf16.msra.mxu0 0
        %2072 = vmatprep.subr.bf16.mxu0 0
        %2073 = vmatpush1.bf16.msra.mxu0 0
        %2074 = vmatprep.subr.bf16.mxu0 0
        %2075 = vmatpush1.bf16.msra.mxu0 0
        %2076 = vmatprep.subr.bf16.mxu0 0
        %2077 = vmatpush1.bf16.msra.mxu0 0
        %2078 = vmatprep.subr.bf16.mxu0 0
        %2079 = vmatpush1.bf16.msra.mxu0 0
        %2080 = vmatprep.mubr.bf16.mxu0 0
        %2081 = vmatmul.mubr.bf16.gmra.mrb[0].mxu0 %v2006
        %v2082 = vpop.f32.mrb[0].mxu0
        %v2083 = vadd.f32 %v1107, %v2082
        %v2084 = vpop.f32.mrb[0].mxu0
        %v2085 = vpop.f32.mrb[0].mxu0
        %v2086 = vpop.f32.mrb[0].mxu0
        %2087 = vdwg.mxu0
        %2088 = vmatprep.subr.bf16.mxu0 0
        %2089 = vmatpush1.bf16.msra.mxu0 %v1103
        %2090 = vmatprep.subr.bf16.mxu0 0
        %2091 = vmatpush1.bf16.msra.mxu0 %v1104
        %2092 = vmatprep.subr.bf16.mxu0 0
        %2093 = vmatpush1.bf16.msra.mxu0 0
        %2094 = vmatprep.subr.bf16.mxu0 0
        %2095 = vmatpush1.bf16.msra.mxu0 0
        %2096 = vmatprep.subr.bf16.mxu0 0
        %2097 = vmatpush1.bf16.msra.mxu0 0
        %2098 = vmatprep.subr.bf16.mxu0 0
        %2099 = vmatpush1.bf16.msra.mxu0 0
        %2100 = vmatprep.subr.bf16.mxu0 0
        %2101 = vmatpush1.bf16.msra.mxu0 0
        %2102 = vmatprep.subr.bf16.mxu0 0
        %2103 = vmatpush1.bf16.msra.mxu0 0
        %2104 = vmatprep.subr.bf16.mxu0 0
        %2105 = vmatpush1.bf16.msra.mxu0 0
        %2106 = vmatprep.subr.bf16.mxu0 0
        %2107 = vmatpush1.bf16.msra.mxu0 0
        %2108 = vmatprep.subr.bf16.mxu0 0
        %2109 = vmatpush1.bf16.msra.mxu0 0
        %2110 = vmatprep.subr.bf16.mxu0 0
        %2111 = vmatpush1.bf16.msra.mxu0 0
        %2112 = vmatprep.subr.bf16.mxu0 0
        %2113 = vmatpush1.bf16.msra.mxu0 0
        %2114 = vmatprep.subr.bf16.mxu0 0
        %2115 = vmatpush1.bf16.msra.mxu0 0
        %2116 = vmatprep.subr.bf16.mxu0 0
        %2117 = vmatpush1.bf16.msra.mxu0 0
        %2118 = vmatprep.subr.bf16.mxu0 0
        %2119 = vmatpush1.bf16.msra.mxu0 0
        %2120 = vmatprep.mubr.bf16.mxu0 0
        %2121 = vmatmul.mubr.bf16.gmra.mrb[0].mxu0 %v2006
        %v2122 = vpop.f32.mrb[0].mxu0
        %v2123 = vadd.f32 %v1109, %v2122
        %v2124 = vpop.f32.mrb[0].mxu0
        %v2125 = vpop.f32.mrb[0].mxu0
        %v2126 = vpop.f32.mrb[0].mxu0
        %2127 = vdwg.mxu0
        %v2128 = vld [vmem:[#allocation2 + $0x6] sm:$0x1]
        %v2129 = vadd.f32 %v2128, %v2043
        %v2130 = vxor.u32 %v2129, 2147483648
        %v2131 = vmul.f32 %v2130, 1.442695
        %v2132 = vpow.pop %v2131
        %v2133 = vadd.f32 %v2132, 1.0
        %v2134 = vrcp.pop %v2133
        %v2135 = vmul.f32 1.0, %v2134
        %v2136 = vld [vmem:[%s1026 + $0x6] sm:$0x1]
        %v2137 = vadd.f32 %v2136, %v2083
        %v2138 = vxor.u32 %v2137, 2147483648
        %v2139 = vmul.f32 %v2138, 1.442695
        %v2140 = vpow.pop %v2139
        %v2141 = vadd.f32 %v2140, 1.0
        %v2142 = vrcp.pop %v2141
        %v2143 = vmul.f32 1.0, %v2142
        %v2144 = vld [vmem:[%s1083 + $0x6] sm:$0x1]
        %v2145 = vmul.f32 %v2135, %v2123
        %v2146 = vadd.f32 %v2144, %v2145
        %v2147 = vtanh.pop %v2146
        %v2148 = vsub.f32 1.0, %v2143
        %v2149 = vmul.f32 %v2148, %v2147
        %v2150 = vmul.f32 %v2143, %v2002
        %v2151 = vadd.f32 %v2149, %v2150
        %2152 = vst.msk [vmem:[#allocation3 + $0x6] sm:$0x1] %vm1257, %v2151
        %v2153 = vpack.c.bf16 %v2151, %v2151
        %v2155 = vsel %vm898, %v2153, 0
        %2157 = vmatprep.subr.bf16.mxu0 0
        %2158 = vmatpush1.bf16.msra.mxu0 %v1089
        %2159 = vmatprep.subr.bf16.mxu0 0
        %2160 = vmatpush1.bf16.msra.mxu0 %v1090
        %2161 = vmatprep.subr.bf16.mxu0 0
        %2162 = vmatpush1.bf16.msra.mxu0 0
        %2163 = vmatprep.subr.bf16.mxu0 0
        %2164 = vmatpush1.bf16.msra.mxu0 0
        %2165 = vmatprep.subr.bf16.mxu0 0
        %2166 = vmatpush1.bf16.msra.mxu0 0
        %2167 = vmatprep.subr.bf16.mxu0 0
        %2168 = vmatpush1.bf16.msra.mxu0 0
        %2169 = vmatprep.subr.bf16.mxu0 0
        %2170 = vmatpush1.bf16.msra.mxu0 0
        %2171 = vmatprep.subr.bf16.mxu0 0
        %2172 = vmatpush1.bf16.msra.mxu0 0
        %2173 = vmatprep.subr.bf16.mxu0 0
        %2174 = vmatpush1.bf16.msra.mxu0 0
        %2175 = vmatprep.subr.bf16.mxu0 0
        %2176 = vmatpush1.bf16.msra.mxu0 0
        %2177 = vmatprep.subr.bf16.mxu0 0
        %2178 = vmatpush1.bf16.msra.mxu0 0
        %2179 = vmatprep.subr.bf16.mxu0 0
        %2180 = vmatpush1.bf16.msra.mxu0 0
        %2181 = vmatprep.subr.bf16.mxu0 0
        %2182 = vmatpush1.bf16.msra.mxu0 0
        %2183 = vmatprep.subr.bf16.mxu0 0
        %2184 = vmatpush1.bf16.msra.mxu0 0
        %2185 = vmatprep.subr.bf16.mxu0 0
        %2186 = vmatpush1.bf16.msra.mxu0 0
        %2187 = vmatprep.subr.bf16.mxu0 0
        %2188 = vmatpush1.bf16.msra.mxu0 0
        %2189 = vmatprep.mubr.bf16.mxu0 0
        %2190 = vmatmul.mubr.bf16.gmra.mrb[0].mxu0 %v2155
        %v2191 = vpop.f32.mrb[0].mxu0
        %v2192 = vadd.f32 %v1105, %v2191
        %v2193 = vpop.f32.mrb[0].mxu0
        %v2194 = vpop.f32.mrb[0].mxu0
        %v2195 = vpop.f32.mrb[0].mxu0
        %2196 = vdwg.mxu0
        %2197 = vmatprep.subr.bf16.mxu0 0
        %2198 = vmatpush1.bf16.msra.mxu0 %v1096
        %2199 = vmatprep.subr.bf16.mxu0 0
        %2200 = vmatpush1.bf16.msra.mxu0 %v1097
        %2201 = vmatprep.subr.bf16.mxu0 0
        %2202 = vmatpush1.bf16.msra.mxu0 0
        %2203 = vmatprep.subr.bf16.mxu0 0
        %2204 = vmatpush1.bf16.msra.mxu0 0
        %2205 = vmatprep.subr.bf16.mxu0 0
        %2206 = vmatpush1.bf16.msra.mxu0 0
        %2207 = vmatprep.subr.bf16.mxu0 0
        %2208 = vmatpush1.bf16.msra.mxu0 0
        %2209 = vmatprep.subr.bf16.mxu0 0
        %2210 = vmatpush1.bf16.msra.mxu0 0
        %2211 = vmatprep.subr.bf16.mxu0 0
        %2212 = vmatpush1.bf16.msra.mxu0 0
        %2213 = vmatprep.subr.bf16.mxu0 0
        %2214 = vmatpush1.bf16.msra.mxu0 0
        %2215 = vmatprep.subr.bf16.mxu0 0
        %2216 = vmatpush1.bf16.msra.mxu0 0
        %2217 = vmatprep.subr.bf16.mxu0 0
        %2218 = vmatpush1.bf16.msra.mxu0 0
        %2219 = vmatprep.subr.bf16.mxu0 0
        %2220 = vmatpush1.bf16.msra.mxu0 0
        %2221 = vmatprep.subr.bf16.mxu0 0
        %2222 = vmatpush1.bf16.msra.mxu0 0
        %2223 = vmatprep.subr.bf16.mxu0 0
        %2224 = vmatpush1.bf16.msra.mxu0 0
        %2225 = vmatprep.subr.bf16.mxu0 0
        %2226 = vmatpush1.bf16.msra.mxu0 0
        %2227 = vmatprep.subr.bf16.mxu0 0
        %2228 = vmatpush1.bf16.msra.mxu0 0
        %2229 = vmatprep.mubr.bf16.mxu0 0
        %2230 = vmatmul.mubr.bf16.gmra.mrb[0].mxu0 %v2155
        %v2231 = vpop.f32.mrb[0].mxu0
        %v2232 = vadd.f32 %v1107, %v2231
        %v2233 = vpop.f32.mrb[0].mxu0
        %v2234 = vpop.f32.mrb[0].mxu0
        %v2235 = vpop.f32.mrb[0].mxu0
        %2236 = vdwg.mxu0
        %2237 = vmatprep.subr.bf16.mxu0 0
        %2238 = vmatpush1.bf16.msra.mxu0 %v1103
        %2239 = vmatprep.subr.bf16.mxu0 0
        %2240 = vmatpush1.bf16.msra.mxu0 %v1104
        %2241 = vmatprep.subr.bf16.mxu0 0
        %2242 = vmatpush1.bf16.msra.mxu0 0
        %2243 = vmatprep.subr.bf16.mxu0 0
        %2244 = vmatpush1.bf16.msra.mxu0 0
        %2245 = vmatprep.subr.bf16.mxu0 0
        %2246 = vmatpush1.bf16.msra.mxu0 0
        %2247 = vmatprep.subr.bf16.mxu0 0
        %2248 = vmatpush1.bf16.msra.mxu0 0
        %2249 = vmatprep.subr.bf16.mxu0 0
        %2250 = vmatpush1.bf16.msra.mxu0 0
        %2251 = vmatprep.subr.bf16.mxu0 0
        %2252 = vmatpush1.bf16.msra.mxu0 0
        %2253 = vmatprep.subr.bf16.mxu0 0
        %2254 = vmatpush1.bf16.msra.mxu0 0
        %2255 = vmatprep.subr.bf16.mxu0 0
        %2256 = vmatpush1.bf16.msra.mxu0 0
        %2257 = vmatprep.subr.bf16.mxu0 0
        %2258 = vmatpush1.bf16.msra.mxu0 0
        %2259 = vmatprep.subr.bf16.mxu0 0
        %2260 = vmatpush1.bf16.msra.mxu0 0
        %2261 = vmatprep.subr.bf16.mxu0 0
        %2262 = vmatpush1.bf16.msra.mxu0 0
        %2263 = vmatprep.subr.bf16.mxu0 0
        %2264 = vmatpush1.bf16.msra.mxu0 0
        %2265 = vmatprep.subr.bf16.mxu0 0
        %2266 = vmatpush1.bf16.msra.mxu0 0
        %2267 = vmatprep.subr.bf16.mxu0 0
        %2268 = vmatpush1.bf16.msra.mxu0 0
        %2269 = vmatprep.mubr.bf16.mxu0 0
        %2270 = vmatmul.mubr.bf16.gmra.mrb[0].mxu0 %v2155
        %v2271 = vpop.f32.mrb[0].mxu0
        %v2272 = vadd.f32 %v1109, %v2271
        %v2273 = vpop.f32.mrb[0].mxu0
        %v2274 = vpop.f32.mrb[0].mxu0
        %v2275 = vpop.f32.mrb[0].mxu0
        %2276 = vdwg.mxu0
        %v2277 = vld [vmem:[#allocation2 + $0x7] sm:$0x1]
        %v2278 = vadd.f32 %v2277, %v2192
        %v2279 = vxor.u32 %v2278, 2147483648
        %v2280 = vmul.f32 %v2279, 1.442695
        %v2281 = vpow.pop %v2280
        %v2282 = vadd.f32 %v2281, 1.0
        %v2283 = vrcp.pop %v2282
        %v2284 = vmul.f32 1.0, %v2283
        %v2285 = vld [vmem:[%s1026 + $0x7] sm:$0x1]
        %v2286 = vadd.f32 %v2285, %v2232
        %v2287 = vxor.u32 %v2286, 2147483648
        %v2288 = vmul.f32 %v2287, 1.442695
        %v2289 = vpow.pop %v2288
        %v2290 = vadd.f32 %v2289, 1.0
        %v2291 = vrcp.pop %v2290
        %v2292 = vmul.f32 1.0, %v2291
        %v2293 = vld [vmem:[%s1083 + $0x7] sm:$0x1]
        %v2294 = vmul.f32 %v2284, %v2272
        %v2295 = vadd.f32 %v2293, %v2294
        %v2296 = vtanh.pop %v2295
        %v2297 = vsub.f32 1.0, %v2292
        %v2298 = vmul.f32 %v2297, %v2296
        %v2299 = vmul.f32 %v2292, %v2151
        %v2300 = vadd.f32 %v2298, %v2299
        %2301 = vst.msk [vmem:[#allocation3 + $0x7] sm:$0x1] %vm1257, %v2300
        %v2302 = vld [vmem:[#allocation3] sm:$0xff]
        %v2303 = vld [vmem:[#allocation13] sm:$0xff]
        %v2304 = vld [vmem:[#allocation13 + $0x8] sm:$0xff]
        %v2305 = vld [vmem:[#allocation13 + $0x10] sm:$0xff]
        %v2306 = vld [vmem:[#allocation13 + $0x18] sm:$0xff]
        %v2307 = vpack.c.bf16 %v2302, %v2302
        %v2308 = vpack.c.bf16 %v2304, %v2303
        %v2309 = vpack.c.bf16 %v2306, %v2305
        %v2310 = vld [vmem:[#allocation15] sm:$0x1]
        %v2312 = vlaneseq
        %v2313 = vshrl.u32 %v2312, 7
        %v2314 = vsub.s32 0, %v2313
        %v2315 = vrot.slane %v2310, %v2314
        %v2318 = vsel %vm898, %v2307, 0
        %2320 = vmatprep.subr.bf16.mxu0 0
        %2321 = vmatpush1.bf16.msra.mxu0 %v2308
        %2322 = vmatprep.subr.bf16.mxu0 0
        %2323 = vmatpush1.bf16.msra.mxu0 %v2309
        %2324 = vmatprep.subr.bf16.mxu0 0
        %2325 = vmatpush1.bf16.msra.mxu0 0
        %2326 = vmatprep.subr.bf16.mxu0 0
        %2327 = vmatpush1.bf16.msra.mxu0 0
        %2328 = vmatprep.subr.bf16.mxu0 0
        %2329 = vmatpush1.bf16.msra.mxu0 0
        %2330 = vmatprep.subr.bf16.mxu0 0
        %2331 = vmatpush1.bf16.msra.mxu0 0
        %2332 = vmatprep.subr.bf16.mxu0 0
        %2333 = vmatpush1.bf16.msra.mxu0 0
        %2334 = vmatprep.subr.bf16.mxu0 0
        %2335 = vmatpush1.bf16.msra.mxu0 0
        %2336 = vmatprep.subr.bf16.mxu0 0
        %2337 = vmatpush1.bf16.msra.mxu0 0
        %2338 = vmatprep.subr.bf16.mxu0 0
        %2339 = vmatpush1.bf16.msra.mxu0 0
        %2340 = vmatprep.subr.bf16.mxu0 0
        %2341 = vmatpush1.bf16.msra.mxu0 0
        %2342 = vmatprep.subr.bf16.mxu0 0
        %2343 = vmatpush1.bf16.msra.mxu0 0
        %2344 = vmatprep.subr.bf16.mxu0 0
        %2345 = vmatpush1.bf16.msra.mxu0 0
        %2346 = vmatprep.subr.bf16.mxu0 0
        %2347 = vmatpush1.bf16.msra.mxu0 0
        %2348 = vmatprep.subr.bf16.mxu0 0
        %2349 = vmatpush1.bf16.msra.mxu0 0
        %2350 = vmatprep.subr.bf16.mxu0 0
        %2351 = vmatpush1.bf16.msra.mxu0 0
        %2352 = vmatprep.mubr.bf16.mxu0 0
        %2353 = vmatmul.mubr.bf16.gmra.mrb[0].mxu0 %v2318
        %v2354 = vpop.f32.mrb[0].mxu0
        %v2355 = vadd.f32 %v2315, %v2354
        %v2356 = vpop.f32.mrb[0].mxu0
        %v2357 = vpop.f32.mrb[0].mxu0
        %v2358 = vpop.f32.mrb[0].mxu0
        %2359 = vdwg.mxu0
        %v2360 = vadd.f32 %v897, %v2355
        %v2361 = vsel %vm898, %v2360, 0.0
        %2362 = vadd.xlane.f32.xlu0 %v2361
        %v2363 = vpop.xlane.xlu0 %2362
        %v2364 = vmul.f32 %v2363, %v902
        %v2365 = vsub.f32 %v2360, %v2364
        %v2366 = vmul.f32 %v2365, %v2365
        %v2367 = vsel %vm898, %v2366, 0.0
        %2368 = vadd.xlane.f32.xlu0 %v2367
        %v2369 = vpop.xlane.xlu0 %2368
        %v2370 = vmul.f32 %v2369, %v902
        %v2371 = vadd.f32 %v2370, 1e-05
        %v2372 = vrsqrt.pop %v2371
        %v2373 = vmul.f32 %v2365, %v2372
        %v2374 = vld [vmem:[#allocation16] sm:$0xff]
        %v2375 = vld [vmem:[#allocation16 + $0x8] sm:$0xff]
        %v2376 = vld [vmem:[#allocation16 + $0x10] sm:$0xff]
        %v2377 = vld [vmem:[#allocation16 + $0x18] sm:$0xff]
        %v2378 = vpack.c.bf16 %v2373, %v2373
        %v2379 = vpack.c.bf16 %v2375, %v2374
        %v2380 = vpack.c.bf16 %v2377, %v2376
        %v2381 = vld [vmem:[#allocation18] sm:$0x1]
        %v2383 = vlaneseq
        %v2384 = vshrl.u32 %v2383, 7
        %v2385 = vsub.s32 0, %v2384
        %v2386 = vrot.slane %v2381, %v2385
        %v2389 = vsel %vm898, %v2378, 0
        %2391 = vmatprep.subr.bf16.mxu0 0
        %2392 = vmatpush1.bf16.msra.mxu0 %v2379
        %2393 = vmatprep.subr.bf16.mxu0 0
        %2394 = vmatpush1.bf16.msra.mxu0 %v2380
        %2395 = vmatprep.subr.bf16.mxu0 0
        %2396 = vmatpush1.bf16.msra.mxu0 0
        %2397 = vmatprep.subr.bf16.mxu0 0
        %2398 = vmatpush1.bf16.msra.mxu0 0
        %2399 = vmatprep.subr.bf16.mxu0 0
        %2400 = vmatpush1.bf16.msra.mxu0 0
        %2401 = vmatprep.subr.bf16.mxu0 0
        %2402 = vmatpush1.bf16.msra.mxu0 0
        %2403 = vmatprep.subr.bf16.mxu0 0
        %2404 = vmatpush1.bf16.msra.mxu0 0
        %2405 = vmatprep.subr.bf16.mxu0 0
        %2406 = vmatpush1.bf16.msra.mxu0 0
        %2407 = vmatprep.subr.bf16.mxu0 0
        %2408 = vmatpush1.bf16.msra.mxu0 0
        %2409 = vmatprep.subr.bf16.mxu0 0
        %2410 = vmatpush1.bf16.msra.mxu0 0
        %2411 = vmatprep.subr.bf16.mxu0 0
        %2412 = vmatpush1.bf16.msra.mxu0 0
        %2413 = vmatprep.subr.bf16.mxu0 0
        %2414 = vmatpush1.bf16.msra.mxu0 0
        %2415 = vmatprep.subr.bf16.mxu0 0
        %2416 = vmatpush1.bf16.msra.mxu0 0
        %2417 = vmatprep.subr.bf16.mxu0 0
        %2418 = vmatpush1.bf16.msra.mxu0 0
        %2419 = vmatprep.subr.bf16.mxu0 0
        %2420 = vmatpush1.bf16.msra.mxu0 0
        %2421 = vmatprep.subr.bf16.mxu0 0
        %2422 = vmatpush1.bf16.msra.mxu0 0
        %2423 = vmatprep.mubr.bf16.mxu0 0
        %2424 = vmatmul.mubr.bf16.gmra.mrb[0].mxu0 %v2389
        %v2425 = vpop.f32.mrb[0].mxu0
        %v2426 = vadd.f32 %v2386, %v2425
        %v2427 = vpop.f32.mrb[0].mxu0
        %v2428 = vpop.f32.mrb[0].mxu0
        %v2429 = vpop.f32.mrb[0].mxu0
        %2430 = vdwg.mxu0
        %v2431 = vxor.u32 %v2426, 2147483648
        %v2432 = vmul.f32 %v2431, 1.442695
        %v2433 = vpow.pop %v2432
        %v2434 = vadd.f32 %v2433, 1.0
        %v2435 = vrcp.pop %v2434
        %v2436 = vmul.f32 1.0, %v2435
        %v2437 = vmul.f32 %v2426, %v2436
        %v2438 = vld [vmem:[%s9] sm:$0xff]
        %v2439 = vld [vmem:[%s9 + $0x8] sm:$0xff]
        %v2440 = vld [vmem:[%s9 + $0x10] sm:$0xff]
        %v2441 = vld [vmem:[%s9 + $0x18] sm:$0xff]
        %v2442 = vpack.c.bf16 %v2437, %v2437
        %v2443 = vpack.c.bf16 %v2439, %v2438
        %v2444 = vpack.c.bf16 %v2441, %v2440
        %v2445 = vld [vmem:[#allocation19] sm:$0x1]
        %v2447 = vlaneseq
        %v2448 = vshrl.u32 %v2447, 7
        %v2449 = vsub.s32 0, %v2448
        %v2450 = vrot.slane %v2445, %v2449
        %v2453 = vsel %vm898, %v2442, 0
        %2455 = vmatprep.subr.bf16.mxu0 0
        %2456 = vmatpush1.bf16.msra.mxu0 %v2443
        %2457 = vmatprep.subr.bf16.mxu0 0
        %2458 = vmatpush1.bf16.msra.mxu0 %v2444
        %2459 = vmatprep.subr.bf16.mxu0 0
        %2460 = vmatpush1.bf16.msra.mxu0 0
        %2461 = vmatprep.subr.bf16.mxu0 0
        %2462 = vmatpush1.bf16.msra.mxu0 0
        %2463 = vmatprep.subr.bf16.mxu0 0
        %2464 = vmatpush1.bf16.msra.mxu0 0
        %2465 = vmatprep.subr.bf16.mxu0 0
        %2466 = vmatpush1.bf16.msra.mxu0 0
        %2467 = vmatprep.subr.bf16.mxu0 0
        %2468 = vmatpush1.bf16.msra.mxu0 0
        %2469 = vmatprep.subr.bf16.mxu0 0
        %2470 = vmatpush1.bf16.msra.mxu0 0
        %2471 = vmatprep.subr.bf16.mxu0 0
        %2472 = vmatpush1.bf16.msra.mxu0 0
        %2473 = vmatprep.subr.bf16.mxu0 0
        %2474 = vmatpush1.bf16.msra.mxu0 0
        %2475 = vmatprep.subr.bf16.mxu0 0
        %2476 = vmatpush1.bf16.msra.mxu0 0
        %2477 = vmatprep.subr.bf16.mxu0 0
        %2478 = vmatpush1.bf16.msra.mxu0 0
        %2479 = vmatprep.subr.bf16.mxu0 0
        %2480 = vmatpush1.bf16.msra.mxu0 0
        %2481 = vmatprep.subr.bf16.mxu0 0
        %2482 = vmatpush1.bf16.msra.mxu0 0
        %2483 = vmatprep.subr.bf16.mxu0 0
        %2484 = vmatpush1.bf16.msra.mxu0 0
        %2485 = vmatprep.subr.bf16.mxu0 0
        %2486 = vmatpush1.bf16.msra.mxu0 0
        %2487 = vmatprep.mubr.bf16.mxu0 0
        %2488 = vmatmul.mubr.bf16.gmra.mrb[0].mxu0 %v2453
        %v2489 = vpop.f32.mrb[0].mxu0
        %v2490 = vadd.f32 %v2450, %v2489
        %v2491 = vpop.f32.mrb[0].mxu0
        %v2492 = vpop.f32.mrb[0].mxu0
        %v2493 = vpop.f32.mrb[0].mxu0
        %2494 = vdwg.mxu0
        %v2495 = vadd.f32 %v2360, %v2490
        %v2496 = vsel %vm898, %v2495, 0.0
        %2497 = vadd.xlane.f32.xlu0 %v2496
        %v2498 = vpop.xlane.xlu0 %2497
        %v2499 = vmul.f32 %v2498, %v902
        %v2500 = vsub.f32 %v2495, %v2499
        %v2501 = vmul.f32 %v2500, %v2500
        %v2502 = vsel %vm898, %v2501, 0.0
        %2503 = vadd.xlane.f32.xlu0 %v2502
        %v2504 = vpop.xlane.xlu0 %2503
        %v2505 = vmul.f32 %v2504, %v902
        %v2506 = vadd.f32 %v2505, 1e-05
        %v2507 = vrsqrt.pop %v2506
        %v2508 = vmul.f32 %v2500, %v2507
        %v2509 = vld [vmem:[#allocation21] sm:$0xff]
        %v2510 = vld [vmem:[#allocation21 + $0x8] sm:$0xff]
        %v2511 = vld [vmem:[#allocation21 + $0x10] sm:$0xff]
        %v2512 = vld [vmem:[#allocation21 + $0x18] sm:$0xff]
        %v2513 = vpack.c.bf16 %v2508, %v2508
        %v2514 = vpack.c.bf16 %v2510, %v2509
        %v2515 = vpack.c.bf16 %v2512, %v2511
        %v2516 = vld [vmem:[#allocation22] sm:$0x1]
        %v2518 = vlaneseq
        %v2519 = vshrl.u32 %v2518, 7
        %v2520 = vsub.s32 0, %v2519
        %v2521 = vrot.slane %v2516, %v2520
        %v2524 = vsel %vm898, %v2513, 0
        %2526 = vmatprep.subr.bf16.mxu0 0
        %2527 = vmatpush1.bf16.msra.mxu0 %v2514
        %2528 = vmatprep.subr.bf16.mxu0 0
        %2529 = vmatpush1.bf16.msra.mxu0 %v2515
        %2530 = vmatprep.subr.bf16.mxu0 0
        %2531 = vmatpush1.bf16.msra.mxu0 0
        %2532 = vmatprep.subr.bf16.mxu0 0
        %2533 = vmatpush1.bf16.msra.mxu0 0
        %2534 = vmatprep.subr.bf16.mxu0 0
        %2535 = vmatpush1.bf16.msra.mxu0 0
        %2536 = vmatprep.subr.bf16.mxu0 0
        %2537 = vmatpush1.bf16.msra.mxu0 0
        %2538 = vmatprep.subr.bf16.mxu0 0
        %2539 = vmatpush1.bf16.msra.mxu0 0
        %2540 = vmatprep.subr.bf16.mxu0 0
        %2541 = vmatpush1.bf16.msra.mxu0 0
        %2542 = vmatprep.subr.bf16.mxu0 0
        %2543 = vmatpush1.bf16.msra.mxu0 0
        %2544 = vmatprep.subr.bf16.mxu0 0
        %2545 = vmatpush1.bf16.msra.mxu0 0
        %2546 = vmatprep.subr.bf16.mxu0 0
        %2547 = vmatpush1.bf16.msra.mxu0 0
        %2548 = vmatprep.subr.bf16.mxu0 0
        %2549 = vmatpush1.bf16.msra.mxu0 0
        %2550 = vmatprep.subr.bf16.mxu0 0
        %2551 = vmatpush1.bf16.msra.mxu0 0
        %2552 = vmatprep.subr.bf16.mxu0 0
        %2553 = vmatpush1.bf16.msra.mxu0 0
        %2554 = vmatprep.subr.bf16.mxu0 0
        %2555 = vmatpush1.bf16.msra.mxu0 0
        %2556 = vmatprep.subr.bf16.mxu0 0
        %2557 = vmatpush1.bf16.msra.mxu0 0
        %2558 = vmatprep.mubr.bf16.mxu0 0
        %2559 = vmatmul.mubr.bf16.gmra.mrb[0].mxu0 %v2524
        %v2560 = vpop.f32.mrb[0].mxu0
        %v2561 = vadd.f32 %v2521, %v2560
        %v2562 = vpop.f32.mrb[0].mxu0
        %v2563 = vpop.f32.mrb[0].mxu0
        %v2564 = vpop.f32.mrb[0].mxu0
        %2565 = vdwg.mxu0
        %2566 = vst.msk [vmem:[#allocation2] sm:$0xff] %vm898, %v2561
        %s2567 = scalar_lea.vmem [#allocation21], 32
        %v2568 = vld [vmem:[%s2567] sm:$0xff]
        %v2569 = vld [vmem:[%s2567 + $0x8] sm:$0xff]
        %v2570 = vld [vmem:[%s2567 + $0x10] sm:$0xff]
        %v2571 = vld [vmem:[%s2567 + $0x18] sm:$0xff]
        %v2572 = vpack.c.bf16 %v2569, %v2568
        %v2573 = vpack.c.bf16 %v2571, %v2570
        %s2574 = scalar_lea.vmem [#allocation22], 1
        %v2575 = vld [vmem:[%s2574] sm:$0x1]
        %v2577 = vlaneseq
        %v2578 = vshrl.u32 %v2577, 7
        %v2579 = vsub.s32 0, %v2578
        %v2580 = vrot.slane %v2575, %v2579
        %2582 = vmatprep.subr.bf16.mxu0 0
        %2583 = vmatpush1.bf16.msra.mxu0 %v2572
        %2584 = vmatprep.subr.bf16.mxu0 0
        %2585 = vmatpush1.bf16.msra.mxu0 %v2573
        %2586 = vmatprep.subr.bf16.mxu0 0
        %2587 = vmatpush1.bf16.msra.mxu0 0
        %2588 = vmatprep.subr.bf16.mxu0 0
        %2589 = vmatpush1.bf16.msra.mxu0 0
        %2590 = vmatprep.subr.bf16.mxu0 0
        %2591 = vmatpush1.bf16.msra.mxu0 0
        %2592 = vmatprep.subr.bf16.mxu0 0
        %2593 = vmatpush1.bf16.msra.mxu0 0
        %2594 = vmatprep.subr.bf16.mxu0 0
        %2595 = vmatpush1.bf16.msra.mxu0 0
        %2596 = vmatprep.subr.bf16.mxu0 0
        %2597 = vmatpush1.bf16.msra.mxu0 0
        %2598 = vmatprep.subr.bf16.mxu0 0
        %2599 = vmatpush1.bf16.msra.mxu0 0
        %2600 = vmatprep.subr.bf16.mxu0 0
        %2601 = vmatpush1.bf16.msra.mxu0 0
        %2602 = vmatprep.subr.bf16.mxu0 0
        %2603 = vmatpush1.bf16.msra.mxu0 0
        %2604 = vmatprep.subr.bf16.mxu0 0
        %2605 = vmatpush1.bf16.msra.mxu0 0
        %2606 = vmatprep.subr.bf16.mxu0 0
        %2607 = vmatpush1.bf16.msra.mxu0 0
        %2608 = vmatprep.subr.bf16.mxu0 0
        %2609 = vmatpush1.bf16.msra.mxu0 0
        %2610 = vmatprep.subr.bf16.mxu0 0
        %2611 = vmatpush1.bf16.msra.mxu0 0
        %2612 = vmatprep.subr.bf16.mxu0 0
        %2613 = vmatpush1.bf16.msra.mxu0 0
        %2614 = vmatprep.mubr.bf16.mxu0 0
        %2615 = vmatmul.mubr.bf16.gmra.mrb[0].mxu0 %v2524
        %v2616 = vpop.f32.mrb[0].mxu0
        %v2617 = vadd.f32 %v2580, %v2616
        %v2618 = vpop.f32.mrb[0].mxu0
        %v2619 = vpop.f32.mrb[0].mxu0
        %v2620 = vpop.f32.mrb[0].mxu0
        %2621 = vdwg.mxu0
        %2622 = vst.msk [vmem:[%s1026] sm:$0xff] %vm898, %v2617
        %s2623 = scalar_lea.vmem [#allocation21], 64
        %v2624 = vld [vmem:[%s2623] sm:$0xff]
        %v2625 = vld [vmem:[%s2623 + $0x8] sm:$0xff]
        %v2626 = vld [vmem:[%s2623 + $0x10] sm:$0xff]
        %v2627 = vld [vmem:[%s2623 + $0x18] sm:$0xff]
        %v2628 = vpack.c.bf16 %v2625, %v2624
        %v2629 = vpack.c.bf16 %v2627, %v2626
        %s2630 = scalar_lea.vmem [#allocation22], 2
        %v2631 = vld [vmem:[%s2630] sm:$0x1]
        %v2633 = vlaneseq
        %v2634 = vshrl.u32 %v2633, 7
        %v2635 = vsub.s32 0, %v2634
        %v2636 = vrot.slane %v2631, %v2635
        %2638 = vmatprep.subr.bf16.mxu0 0
        %2639 = vmatpush1.bf16.msra.mxu0 %v2628
        %2640 = vmatprep.subr.bf16.mxu0 0
        %2641 = vmatpush1.bf16.msra.mxu0 %v2629
        %2642 = vmatprep.subr.bf16.mxu0 0
        %2643 = vmatpush1.bf16.msra.mxu0 0
        %2644 = vmatprep.subr.bf16.mxu0 0
        %2645 = vmatpush1.bf16.msra.mxu0 0
        %2646 = vmatprep.subr.bf16.mxu0 0
        %2647 = vmatpush1.bf16.msra.mxu0 0
        %2648 = vmatprep.subr.bf16.mxu0 0
        %2649 = vmatpush1.bf16.msra.mxu0 0
        %2650 = vmatprep.subr.bf16.mxu0 0
        %2651 = vmatpush1.bf16.msra.mxu0 0
        %2652 = vmatprep.subr.bf16.mxu0 0
        %2653 = vmatpush1.bf16.msra.mxu0 0
        %2654 = vmatprep.subr.bf16.mxu0 0
        %2655 = vmatpush1.bf16.msra.mxu0 0
        %2656 = vmatprep.subr.bf16.mxu0 0
        %2657 = vmatpush1.bf16.msra.mxu0 0
        %2658 = vmatprep.subr.bf16.mxu0 0
        %2659 = vmatpush1.bf16.msra.mxu0 0
        %2660 = vmatprep.subr.bf16.mxu0 0
        %2661 = vmatpush1.bf16.msra.mxu0 0
        %2662 = vmatprep.subr.bf16.mxu0 0
        %2663 = vmatpush1.bf16.msra.mxu0 0
        %2664 = vmatprep.subr.bf16.mxu0 0
        %2665 = vmatpush1.bf16.msra.mxu0 0
        %2666 = vmatprep.subr.bf16.mxu0 0
        %2667 = vmatpush1.bf16.msra.mxu0 0
        %2668 = vmatprep.subr.bf16.mxu0 0
        %2669 = vmatpush1.bf16.msra.mxu0 0
        %2670 = vmatprep.mubr.bf16.mxu0 0
        %2671 = vmatmul.mubr.bf16.gmra.mrb[0].mxu0 %v2524
        %v2672 = vpop.f32.mrb[0].mxu0
        %v2673 = vadd.f32 %v2636, %v2672
        %v2674 = vpop.f32.mrb[0].mxu0
        %v2675 = vpop.f32.mrb[0].mxu0
        %v2676 = vpop.f32.mrb[0].mxu0
        %2677 = vdwg.mxu0
        %2678 = vst.msk [vmem:[%s1083] sm:$0xff] %vm898, %v2673
        %v2679 = vld [vmem:[#allocation24] sm:$0xff]
        %v2680 = vld [vmem:[#allocation24 + $0x8] sm:$0xff]
        %v2681 = vld [vmem:[#allocation24 + $0x10] sm:$0xff]
        %v2682 = vld [vmem:[#allocation24 + $0x18] sm:$0xff]
        %v2683 = vpack.c.bf16 %v2680, %v2679
        %v2684 = vpack.c.bf16 %v2682, %v2681
        %s2685 = scalar_lea.vmem [#allocation24], 32
        %v2686 = vld [vmem:[%s2685] sm:$0xff]
        %v2687 = vld [vmem:[%s2685 + $0x8] sm:$0xff]
        %v2688 = vld [vmem:[%s2685 + $0x10] sm:$0xff]
        %v2689 = vld [vmem:[%s2685 + $0x18] sm:$0xff]
        %v2690 = vpack.c.bf16 %v2687, %v2686
        %v2691 = vpack.c.bf16 %v2689, %v2688
        %s2692 = scalar_lea.vmem [#allocation24], 64
        %v2693 = vld [vmem:[%s2692] sm:$0xff]
        %v2694 = vld [vmem:[%s2692 + $0x8] sm:$0xff]
        %v2695 = vld [vmem:[%s2692 + $0x10] sm:$0xff]
        %v2696 = vld [vmem:[%s2692 + $0x18] sm:$0xff]
        %v2697 = vpack.c.bf16 %v2694, %v2693
        %v2698 = vpack.c.bf16 %v2696, %v2695
        %v2699 = vld [vmem:[#allocation25] sm:$0x1]
        %s2700 = scalar_lea.vmem [#allocation25], 1
        %v2701 = vld [vmem:[%s2700] sm:$0x1]
        %s2702 = scalar_lea.vmem [#allocation25], 2
        %v2703 = vld [vmem:[%s2702] sm:$0x1]
        %2704 = vmatprep.subr.bf16.mxu0 0
        %2705 = vmatpush1.bf16.msra.mxu0 %v2683
        %2706 = vmatprep.subr.bf16.mxu0 0
        %2707 = vmatpush1.bf16.msra.mxu0 %v2684
        %2708 = vmatprep.subr.bf16.mxu0 0
        %2709 = vmatpush1.bf16.msra.mxu0 0
        %2710 = vmatprep.subr.bf16.mxu0 0
        %2711 = vmatpush1.bf16.msra.mxu0 0
        %2712 = vmatprep.subr.bf16.mxu0 0
        %2713 = vmatpush1.bf16.msra.mxu0 0
        %2714 = vmatprep.subr.bf16.mxu0 0
        %2715 = vmatpush1.bf16.msra.mxu0 0
        %2716 = vmatprep.subr.bf16.mxu0 0
        %2717 = vmatpush1.bf16.msra.mxu0 0
        %2718 = vmatprep.subr.bf16.mxu0 0
        %2719 = vmatpush1.bf16.msra.mxu0 0
        %2720 = vmatprep.subr.bf16.mxu0 0
        %2721 = vmatpush1.bf16.msra.mxu0 0
        %2722 = vmatprep.subr.bf16.mxu0 0
        %2723 = vmatpush1.bf16.msra.mxu0 0
        %2724 = vmatprep.subr.bf16.mxu0 0
        %2725 = vmatpush1.bf16.msra.mxu0 0
        %2726 = vmatprep.subr.bf16.mxu0 0
        %2727 = vmatpush1.bf16.msra.mxu0 0
        %2728 = vmatprep.subr.bf16.mxu0 0
        %2729 = vmatpush1.bf16.msra.mxu0 0
        %2730 = vmatprep.subr.bf16.mxu0 0
        %2731 = vmatpush1.bf16.msra.mxu0 0
        %2732 = vmatprep.subr.bf16.mxu0 0
        %2733 = vmatpush1.bf16.msra.mxu0 0
        %2734 = vmatprep.subr.bf16.mxu0 0
        %2735 = vmatpush1.bf16.msra.mxu0 0
        %2736 = vmatprep.mubr.bf16.mxu0 0
        %2737 = vmatmul.mubr.bf16.gmra.mrb[0].mxu0 %v1111
        %v2738 = vpop.f32.mrb[0].mxu0
        %v2739 = vadd.f32 %v2699, %v2738
        %v2740 = vpop.f32.mrb[0].mxu0
        %v2741 = vpop.f32.mrb[0].mxu0
        %v2742 = vpop.f32.mrb[0].mxu0
        %2743 = vdwg.mxu0
        %2744 = vmatprep.subr.bf16.mxu0 0
        %2745 = vmatpush1.bf16.msra.mxu0 %v2690
        %2746 = vmatprep.subr.bf16.mxu0 0
        %2747 = vmatpush1.bf16.msra.mxu0 %v2691
        %2748 = vmatprep.subr.bf16.mxu0 0
        %2749 = vmatpush1.bf16.msra.mxu0 0
        %2750 = vmatprep.subr.bf16.mxu0 0
        %2751 = vmatpush1.bf16.msra.mxu0 0
        %2752 = vmatprep.subr.bf16.mxu0 0
        %2753 = vmatpush1.bf16.msra.mxu0 0
        %2754 = vmatprep.subr.bf16.mxu0 0
        %2755 = vmatpush1.bf16.msra.mxu0 0
        %2756 = vmatprep.subr.bf16.mxu0 0
        %2757 = vmatpush1.bf16.msra.mxu0 0
        %2758 = vmatprep.subr.bf16.mxu0 0
        %2759 = vmatpush1.bf16.msra.mxu0 0
        %2760 = vmatprep.subr.bf16.mxu0 0
        %2761 = vmatpush1.bf16.msra.mxu0 0
        %2762 = vmatprep.subr.bf16.mxu0 0
        %2763 = vmatpush1.bf16.msra.mxu0 0
        %2764 = vmatprep.subr.bf16.mxu0 0
        %2765 = vmatpush1.bf16.msra.mxu0 0
        %2766 = vmatprep.subr.bf16.mxu0 0
        %2767 = vmatpush1.bf16.msra.mxu0 0
        %2768 = vmatprep.subr.bf16.mxu0 0
        %2769 = vmatpush1.bf16.msra.mxu0 0
        %2770 = vmatprep.subr.bf16.mxu0 0
        %2771 = vmatpush1.bf16.msra.mxu0 0
        %2772 = vmatprep.subr.bf16.mxu0 0
        %2773 = vmatpush1.bf16.msra.mxu0 0
        %2774 = vmatprep.subr.bf16.mxu0 0
        %2775 = vmatpush1.bf16.msra.mxu0 0
        %2776 = vmatprep.mubr.bf16.mxu0 0
        %2777 = vmatmul.mubr.bf16.gmra.mrb[0].mxu0 %v1111
        %v2778 = vpop.f32.mrb[0].mxu0
        %v2779 = vadd.f32 %v2701, %v2778
        %v2780 = vpop.f32.mrb[0].mxu0
        %v2781 = vpop.f32.mrb[0].mxu0
        %v2782 = vpop.f32.mrb[0].mxu0
        %2783 = vdwg.mxu0
        %2784 = vmatprep.subr.bf16.mxu0 0
        %2785 = vmatpush1.bf16.msra.mxu0 %v2697
        %2786 = vmatprep.subr.bf16.mxu0 0
        %2787 = vmatpush1.bf16.msra.mxu0 %v2698
        %2788 = vmatprep.subr.bf16.mxu0 0
        %2789 = vmatpush1.bf16.msra.mxu0 0
        %2790 = vmatprep.subr.bf16.mxu0 0
        %2791 = vmatpush1.bf16.msra.mxu0 0
        %2792 = vmatprep.subr.bf16.mxu0 0
        %2793 = vmatpush1.bf16.msra.mxu0 0
        %2794 = vmatprep.subr.bf16.mxu0 0
        %2795 = vmatpush1.bf16.msra.mxu0 0
        %2796 = vmatprep.subr.bf16.mxu0 0
        %2797 = vmatpush1.bf16.msra.mxu0 0
        %2798 = vmatprep.subr.bf16.mxu0 0
        %2799 = vmatpush1.bf16.msra.mxu0 0
        %2800 = vmatprep.subr.bf16.mxu0 0
        %2801 = vmatpush1.bf16.msra.mxu0 0
        %2802 = vmatprep.subr.bf16.mxu0 0
        %2803 = vmatpush1.bf16.msra.mxu0 0
        %2804 = vmatprep.subr.bf16.mxu0 0
        %2805 = vmatpush1.bf16.msra.mxu0 0
        %2806 = vmatprep.subr.bf16.mxu0 0
        %2807 = vmatpush1.bf16.msra.mxu0 0
        %2808 = vmatprep.subr.bf16.mxu0 0
        %2809 = vmatpush1.bf16.msra.mxu0 0
        %2810 = vmatprep.subr.bf16.mxu0 0
        %2811 = vmatpush1.bf16.msra.mxu0 0
        %2812 = vmatprep.subr.bf16.mxu0 0
        %2813 = vmatpush1.bf16.msra.mxu0 0
        %2814 = vmatprep.subr.bf16.mxu0 0
        %2815 = vmatpush1.bf16.msra.mxu0 0
        %2816 = vmatprep.mubr.bf16.mxu0 0
        %2817 = vmatmul.mubr.bf16.gmra.mrb[0].mxu0 %v1111
        %v2818 = vpop.f32.mrb[0].mxu0
        %v2819 = vadd.f32 %v2703, %v2818
        %v2820 = vpop.f32.mrb[0].mxu0
        %v2821 = vpop.f32.mrb[0].mxu0
        %v2822 = vpop.f32.mrb[0].mxu0
        %2823 = vdwg.mxu0
        %v2824 = vld [vmem:[#allocation2] sm:$0x1]
        %v2825 = vadd.f32 %v2824, %v2739
        %v2826 = vxor.u32 %v2825, 2147483648
        %v2827 = vmul.f32 %v2826, 1.442695
        %v2828 = vpow.pop %v2827
        %v2829 = vadd.f32 %v2828, 1.0
        %v2830 = vrcp.pop %v2829
        %v2831 = vmul.f32 1.0, %v2830
        %v2832 = vld [vmem:[%s1026] sm:$0x1]
        %v2833 = vadd.f32 %v2832, %v2779
        %v2834 = vxor.u32 %v2833, 2147483648
        %v2835 = vmul.f32 %v2834, 1.442695
        %v2836 = vpow.pop %v2835
        %v2837 = vadd.f32 %v2836, 1.0
        %v2838 = vrcp.pop %v2837
        %v2839 = vmul.f32 1.0, %v2838
        %v2840 = vld [vmem:[%s1083] sm:$0x1]
        %v2841 = vmul.f32 %v2831, %v2819
        %v2842 = vadd.f32 %v2840, %v2841
        %v2843 = vtanh.pop %v2842
        %v2844 = vsub.f32 1.0, %v2839
        %v2845 = vmul.f32 %v2844, %v2843
        %v2846 = vmul.f32 %v2839, 0.0
        %v2847 = vadd.f32 %v2845, %v2846
        %2848 = vst.msk [vmem:[#allocation3] sm:$0x1] %vm1257, %v2847
        %v2849 = vpack.c.bf16 %v2847, %v2847
        %v2851 = vsel %vm898, %v2849, 0
        %2853 = vmatprep.subr.bf16.mxu0 0
        %2854 = vmatpush1.bf16.msra.mxu0 %v2683
        %2855 = vmatprep.subr.bf16.mxu0 0
        %2856 = vmatpush1.bf16.msra.mxu0 %v2684
        %2857 = vmatprep.subr.bf16.mxu0 0
        %2858 = vmatpush1.bf16.msra.mxu0 0
        %2859 = vmatprep.subr.bf16.mxu0 0
        %2860 = vmatpush1.bf16.msra.mxu0 0
        %2861 = vmatprep.subr.bf16.mxu0 0
        %2862 = vmatpush1.bf16.msra.mxu0 0
        %2863 = vmatprep.subr.bf16.mxu0 0
        %2864 = vmatpush1.bf16.msra.mxu0 0
        %2865 = vmatprep.subr.bf16.mxu0 0
        %2866 = vmatpush1.bf16.msra.mxu0 0
        %2867 = vmatprep.subr.bf16.mxu0 0
        %2868 = vmatpush1.bf16.msra.mxu0 0
        %2869 = vmatprep.subr.bf16.mxu0 0
        %2870 = vmatpush1.bf16.msra.mxu0 0
        %2871 = vmatprep.subr.bf16.mxu0 0
        %2872 = vmatpush1.bf16.msra.mxu0 0
        %2873 = vmatprep.subr.bf16.mxu0 0
        %2874 = vmatpush1.bf16.msra.mxu0 0
        %2875 = vmatprep.subr.bf16.mxu0 0
        %2876 = vmatpush1.bf16.msra.mxu0 0
        %2877 = vmatprep.subr.bf16.mxu0 0
        %2878 = vmatpush1.bf16.msra.mxu0 0
        %2879 = vmatprep.subr.bf16.mxu0 0
        %2880 = vmatpush1.bf16.msra.mxu0 0
        %2881 = vmatprep.subr.bf16.mxu0 0
        %2882 = vmatpush1.bf16.msra.mxu0 0
        %2883 = vmatprep.subr.bf16.mxu0 0
        %2884 = vmatpush1.bf16.msra.mxu0 0
        %2885 = vmatprep.mubr.bf16.mxu0 0
        %2886 = vmatmul.mubr.bf16.gmra.mrb[0].mxu0 %v2851
        %v2887 = vpop.f32.mrb[0].mxu0
        %v2888 = vadd.f32 %v2699, %v2887
        %v2889 = vpop.f32.mrb[0].mxu0
        %v2890 = vpop.f32.mrb[0].mxu0
        %v2891 = vpop.f32.mrb[0].mxu0
        %2892 = vdwg.mxu0
        %2893 = vmatprep.subr.bf16.mxu0 0
        %2894 = vmatpush1.bf16.msra.mxu0 %v2690
        %2895 = vmatprep.subr.bf16.mxu0 0
        %2896 = vmatpush1.bf16.msra.mxu0 %v2691
        %2897 = vmatprep.subr.bf16.mxu0 0
        %2898 = vmatpush1.bf16.msra.mxu0 0
        %2899 = vmatprep.subr.bf16.mxu0 0
        %2900 = vmatpush1.bf16.msra.mxu0 0
        %2901 = vmatprep.subr.bf16.mxu0 0
        %2902 = vmatpush1.bf16.msra.mxu0 0
        %2903 = vmatprep.subr.bf16.mxu0 0
        %2904 = vmatpush1.bf16.msra.mxu0 0
        %2905 = vmatprep.subr.bf16.mxu0 0
        %2906 = vmatpush1.bf16.msra.mxu0 0
        %2907 = vmatprep.subr.bf16.mxu0 0
        %2908 = vmatpush1.bf16.msra.mxu0 0
        %2909 = vmatprep.subr.bf16.mxu0 0
        %2910 = vmatpush1.bf16.msra.mxu0 0
        %2911 = vmatprep.subr.bf16.mxu0 0
        %2912 = vmatpush1.bf16.msra.mxu0 0
        %2913 = vmatprep.subr.bf16.mxu0 0
        %2914 = vmatpush1.bf16.msra.mxu0 0
        %2915 = vmatprep.subr.bf16.mxu0 0
        %2916 = vmatpush1.bf16.msra.mxu0 0
        %2917 = vmatprep.subr.bf16.mxu0 0
        %2918 = vmatpush1.bf16.msra.mxu0 0
        %2919 = vmatprep.subr.bf16.mxu0 0
        %2920 = vmatpush1.bf16.msra.mxu0 0
        %2921 = vmatprep.subr.bf16.mxu0 0
        %2922 = vmatpush1.bf16.msra.mxu0 0
        %2923 = vmatprep.subr.bf16.mxu0 0
        %2924 = vmatpush1.bf16.msra.mxu0 0
        %2925 = vmatprep.mubr.bf16.mxu0 0
        %2926 = vmatmul.mubr.bf16.gmra.mrb[0].mxu0 %v2851
        %v2927 = vpop.f32.mrb[0].mxu0
        %v2928 = vadd.f32 %v2701, %v2927
        %v2929 = vpop.f32.mrb[0].mxu0
        %v2930 = vpop.f32.mrb[0].mxu0
        %v2931 = vpop.f32.mrb[0].mxu0
        %2932 = vdwg.mxu0
        %2933 = vmatprep.subr.bf16.mxu0 0
        %2934 = vmatpush1.bf16.msra.mxu0 %v2697
        %2935 = vmatprep.subr.bf16.mxu0 0
        %2936 = vmatpush1.bf16.msra.mxu0 %v2698
        %2937 = vmatprep.subr.bf16.mxu0 0
        %2938 = vmatpush1.bf16.msra.mxu0 0
        %2939 = vmatprep.subr.bf16.mxu0 0
        %2940 = vmatpush1.bf16.msra.mxu0 0
        %2941 = vmatprep.subr.bf16.mxu0 0
        %2942 = vmatpush1.bf16.msra.mxu0 0
        %2943 = vmatprep.subr.bf16.mxu0 0
        %2944 = vmatpush1.bf16.msra.mxu0 0
        %2945 = vmatprep.subr.bf16.mxu0 0
        %2946 = vmatpush1.bf16.msra.mxu0 0
        %2947 = vmatprep.subr.bf16.mxu0 0
        %2948 = vmatpush1.bf16.msra.mxu0 0
        %2949 = vmatprep.subr.bf16.mxu0 0
        %2950 = vmatpush1.bf16.msra.mxu0 0
        %2951 = vmatprep.subr.bf16.mxu0 0
        %2952 = vmatpush1.bf16.msra.mxu0 0
        %2953 = vmatprep.subr.bf16.mxu0 0
        %2954 = vmatpush1.bf16.msra.mxu0 0
        %2955 = vmatprep.subr.bf16.mxu0 0
        %2956 = vmatpush1.bf16.msra.mxu0 0
        %2957 = vmatprep.subr.bf16.mxu0 0
        %2958 = vmatpush1.bf16.msra.mxu0 0
        %2959 = vmatprep.subr.bf16.mxu0 0
        %2960 = vmatpush1.bf16.msra.mxu0 0
        %2961 = vmatprep.subr.bf16.mxu0 0
        %2962 = vmatpush1.bf16.msra.mxu0 0
        %2963 = vmatprep.subr.bf16.mxu0 0
        %2964 = vmatpush1.bf16.msra.mxu0 0
        %2965 = vmatprep.mubr.bf16.mxu0 0
        %2966 = vmatmul.mubr.bf16.gmra.mrb[0].mxu0 %v2851
        %v2967 = vpop.f32.mrb[0].mxu0
        %v2968 = vadd.f32 %v2703, %v2967
        %v2969 = vpop.f32.mrb[0].mxu0
        %v2970 = vpop.f32.mrb[0].mxu0
        %v2971 = vpop.f32.mrb[0].mxu0
        %2972 = vdwg.mxu0
        %v2973 = vld [vmem:[#allocation2 + $0x1] sm:$0x1]
        %v2974 = vadd.f32 %v2973, %v2888
        %v2975 = vxor.u32 %v2974, 2147483648
        %v2976 = vmul.f32 %v2975, 1.442695
        %v2977 = vpow.pop %v2976
        %v2978 = vadd.f32 %v2977, 1.0
        %v2979 = vrcp.pop %v2978
        %v2980 = vmul.f32 1.0, %v2979
        %v2981 = vld [vmem:[%s1026 + $0x1] sm:$0x1]
        %v2982 = vadd.f32 %v2981, %v2928
        %v2983 = vxor.u32 %v2982, 2147483648
        %v2984 = vmul.f32 %v2983, 1.442695
        %v2985 = vpow.pop %v2984
        %v2986 = vadd.f32 %v2985, 1.0
        %v2987 = vrcp.pop %v2986
        %v2988 = vmul.f32 1.0, %v2987
        %v2989 = vld [vmem:[%s1083 + $0x1] sm:$0x1]
        %v2990 = vmul.f32 %v2980, %v2968
        %v2991 = vadd.f32 %v2989, %v2990
        %v2992 = vtanh.pop %v2991
        %v2993 = vsub.f32 1.0, %v2988
        %v2994 = vmul.f32 %v2993, %v2992
        %v2995 = vmul.f32 %v2988, %v2847
        %v2996 = vadd.f32 %v2994, %v2995
        %2997 = vst.msk [vmem:[#allocation3 + $0x1] sm:$0x1] %vm1257, %v2996
        %v2998 = vpack.c.bf16 %v2996, %v2996
        %v3000 = vsel %vm898, %v2998, 0
        %3002 = vmatprep.subr.bf16.mxu0 0
        %3003 = vmatpush1.bf16.msra.mxu0 %v2683
        %3004 = vmatprep.subr.bf16.mxu0 0
        %3005 = vmatpush1.bf16.msra.mxu0 %v2684
        %3006 = vmatprep.subr.bf16.mxu0 0
        %3007 = vmatpush1.bf16.msra.mxu0 0
        %3008 = vmatprep.subr.bf16.mxu0 0
        %3009 = vmatpush1.bf16.msra.mxu0 0
        %3010 = vmatprep.subr.bf16.mxu0 0
        %3011 = vmatpush1.bf16.msra.mxu0 0
        %3012 = vmatprep.subr.bf16.mxu0 0
        %3013 = vmatpush1.bf16.msra.mxu0 0
        %3014 = vmatprep.subr.bf16.mxu0 0
        %3015 = vmatpush1.bf16.msra.mxu0 0
        %3016 = vmatprep.subr.bf16.mxu0 0
        %3017 = vmatpush1.bf16.msra.mxu0 0
        %3018 = vmatprep.subr.bf16.mxu0 0
        %3019 = vmatpush1.bf16.msra.mxu0 0
        %3020 = vmatprep.subr.bf16.mxu0 0
        %3021 = vmatpush1.bf16.msra.mxu0 0
        %3022 = vmatprep.subr.bf16.mxu0 0
        %3023 = vmatpush1.bf16.msra.mxu0 0
        %3024 = vmatprep.subr.bf16.mxu0 0
        %3025 = vmatpush1.bf16.msra.mxu0 0
        %3026 = vmatprep.subr.bf16.mxu0 0
        %3027 = vmatpush1.bf16.msra.mxu0 0
        %3028 = vmatprep.subr.bf16.mxu0 0
        %3029 = vmatpush1.bf16.msra.mxu0 0
        %3030 = vmatprep.subr.bf16.mxu0 0
        %3031 = vmatpush1.bf16.msra.mxu0 0
        %3032 = vmatprep.subr.bf16.mxu0 0
        %3033 = vmatpush1.bf16.msra.mxu0 0
        %3034 = vmatprep.mubr.bf16.mxu0 0
        %3035 = vmatmul.mubr.bf16.gmra.mrb[0].mxu0 %v3000
        %v3036 = vpop.f32.mrb[0].mxu0
        %v3037 = vadd.f32 %v2699, %v3036
        %v3038 = vpop.f32.mrb[0].mxu0
        %v3039 = vpop.f32.mrb[0].mxu0
        %v3040 = vpop.f32.mrb[0].mxu0
        %3041 = vdwg.mxu0
        %3042 = vmatprep.subr.bf16.mxu0 0
        %3043 = vmatpush1.bf16.msra.mxu0 %v2690
        %3044 = vmatprep.subr.bf16.mxu0 0
        %3045 = vmatpush1.bf16.msra.mxu0 %v2691
        %3046 = vmatprep.subr.bf16.mxu0 0
        %3047 = vmatpush1.bf16.msra.mxu0 0
        %3048 = vmatprep.subr.bf16.mxu0 0
        %3049 = vmatpush1.bf16.msra.mxu0 0
        %3050 = vmatprep.subr.bf16.mxu0 0
        %3051 = vmatpush1.bf16.msra.mxu0 0
        %3052 = vmatprep.subr.bf16.mxu0 0
        %3053 = vmatpush1.bf16.msra.mxu0 0
        %3054 = vmatprep.subr.bf16.mxu0 0
        %3055 = vmatpush1.bf16.msra.mxu0 0
        %3056 = vmatprep.subr.bf16.mxu0 0
        %3057 = vmatpush1.bf16.msra.mxu0 0
        %3058 = vmatprep.subr.bf16.mxu0 0
        %3059 = vmatpush1.bf16.msra.mxu0 0
        %3060 = vmatprep.subr.bf16.mxu0 0
        %3061 = vmatpush1.bf16.msra.mxu0 0
        %3062 = vmatprep.subr.bf16.mxu0 0
        %3063 = vmatpush1.bf16.msra.mxu0 0
        %3064 = vmatprep.subr.bf16.mxu0 0
        %3065 = vmatpush1.bf16.msra.mxu0 0
        %3066 = vmatprep.subr.bf16.mxu0 0
        %3067 = vmatpush1.bf16.msra.mxu0 0
        %3068 = vmatprep.subr.bf16.mxu0 0
        %3069 = vmatpush1.bf16.msra.mxu0 0
        %3070 = vmatprep.subr.bf16.mxu0 0
        %3071 = vmatpush1.bf16.msra.mxu0 0
        %3072 = vmatprep.subr.bf16.mxu0 0
        %3073 = vmatpush1.bf16.msra.mxu0 0
        %3074 = vmatprep.mubr.bf16.mxu0 0
        %3075 = vmatmul.mubr.bf16.gmra.mrb[0].mxu0 %v3000
        %v3076 = vpop.f32.mrb[0].mxu0
        %v3077 = vadd.f32 %v2701, %v3076
        %v3078 = vpop.f32.mrb[0].mxu0
        %v3079 = vpop.f32.mrb[0].mxu0
        %v3080 = vpop.f32.mrb[0].mxu0
        %3081 = vdwg.mxu0
        %3082 = vmatprep.subr.bf16.mxu0 0
        %3083 = vmatpush1.bf16.msra.mxu0 %v2697
        %3084 = vmatprep.subr.bf16.mxu0 0
        %3085 = vmatpush1.bf16.msra.mxu0 %v2698
        %3086 = vmatprep.subr.bf16.mxu0 0
        %3087 = vmatpush1.bf16.msra.mxu0 0
        %3088 = vmatprep.subr.bf16.mxu0 0
        %3089 = vmatpush1.bf16.msra.mxu0 0
        %3090 = vmatprep.subr.bf16.mxu0 0
        %3091 = vmatpush1.bf16.msra.mxu0 0
        %3092 = vmatprep.subr.bf16.mxu0 0
        %3093 = vmatpush1.bf16.msra.mxu0 0
        %3094 = vmatprep.subr.bf16.mxu0 0
        %3095 = vmatpush1.bf16.msra.mxu0 0
        %3096 = vmatprep.subr.bf16.mxu0 0
        %3097 = vmatpush1.bf16.msra.mxu0 0
        %3098 = vmatprep.subr.bf16.mxu0 0
        %3099 = vmatpush1.bf16.msra.mxu0 0
        %3100 = vmatprep.subr.bf16.mxu0 0
        %3101 = vmatpush1.bf16.msra.mxu0 0
        %3102 = vmatprep.subr.bf16.mxu0 0
        %3103 = vmatpush1.bf16.msra.mxu0 0
        %3104 = vmatprep.subr.bf16.mxu0 0
        %3105 = vmatpush1.bf16.msra.mxu0 0
        %3106 = vmatprep.subr.bf16.mxu0 0
        %3107 = vmatpush1.bf16.msra.mxu0 0
        %3108 = vmatprep.subr.bf16.mxu0 0
        %3109 = vmatpush1.bf16.msra.mxu0 0
        %3110 = vmatprep.subr.bf16.mxu0 0
        %3111 = vmatpush1.bf16.msra.mxu0 0
        %3112 = vmatprep.subr.bf16.mxu0 0
        %3113 = vmatpush1.bf16.msra.mxu0 0
        %3114 = vmatprep.mubr.bf16.mxu0 0
        %3115 = vmatmul.mubr.bf16.gmra.mrb[0].mxu0 %v3000
        %v3116 = vpop.f32.mrb[0].mxu0
        %v3117 = vadd.f32 %v2703, %v3116
        %v3118 = vpop.f32.mrb[0].mxu0
        %v3119 = vpop.f32.mrb[0].mxu0
        %v3120 = vpop.f32.mrb[0].mxu0
        %3121 = vdwg.mxu0
        %v3122 = vld [vmem:[#allocation2 + $0x2] sm:$0x1]
        %v3123 = vadd.f32 %v3122, %v3037
        %v3124 = vxor.u32 %v3123, 2147483648
        %v3125 = vmul.f32 %v3124, 1.442695
        %v3126 = vpow.pop %v3125
        %v3127 = vadd.f32 %v3126, 1.0
        %v3128 = vrcp.pop %v3127
        %v3129 = vmul.f32 1.0, %v3128
        %v3130 = vld [vmem:[%s1026 + $0x2] sm:$0x1]
        %v3131 = vadd.f32 %v3130, %v3077
        %v3132 = vxor.u32 %v3131, 2147483648
        %v3133 = vmul.f32 %v3132, 1.442695
        %v3134 = vpow.pop %v3133
        %v3135 = vadd.f32 %v3134, 1.0
        %v3136 = vrcp.pop %v3135
        %v3137 = vmul.f32 1.0, %v3136
        %v3138 = vld [vmem:[%s1083 + $0x2] sm:$0x1]
        %v3139 = vmul.f32 %v3129, %v3117
        %v3140 = vadd.f32 %v3138, %v3139
        %v3141 = vtanh.pop %v3140
        %v3142 = vsub.f32 1.0, %v3137
        %v3143 = vmul.f32 %v3142, %v3141
        %v3144 = vmul.f32 %v3137, %v2996
        %v3145 = vadd.f32 %v3143, %v3144
        %3146 = vst.msk [vmem:[#allocation3 + $0x2] sm:$0x1] %vm1257, %v3145
        %v3147 = vpack.c.bf16 %v3145, %v3145
        %v3149 = vsel %vm898, %v3147, 0
        %3151 = vmatprep.subr.bf16.mxu0 0
        %3152 = vmatpush1.bf16.msra.mxu0 %v2683
        %3153 = vmatprep.subr.bf16.mxu0 0
        %3154 = vmatpush1.bf16.msra.mxu0 %v2684
        %3155 = vmatprep.subr.bf16.mxu0 0
        %3156 = vmatpush1.bf16.msra.mxu0 0
        %3157 = vmatprep.subr.bf16.mxu0 0
        %3158 = vmatpush1.bf16.msra.mxu0 0
        %3159 = vmatprep.subr.bf16.mxu0 0
        %3160 = vmatpush1.bf16.msra.mxu0 0
        %3161 = vmatprep.subr.bf16.mxu0 0
        %3162 = vmatpush1.bf16.msra.mxu0 0
        %3163 = vmatprep.subr.bf16.mxu0 0
        %3164 = vmatpush1.bf16.msra.mxu0 0
        %3165 = vmatprep.subr.bf16.mxu0 0
        %3166 = vmatpush1.bf16.msra.mxu0 0
        %3167 = vmatprep.subr.bf16.mxu0 0
        %3168 = vmatpush1.bf16.msra.mxu0 0
        %3169 = vmatprep.subr.bf16.mxu0 0
        %3170 = vmatpush1.bf16.msra.mxu0 0
        %3171 = vmatprep.subr.bf16.mxu0 0
        %3172 = vmatpush1.bf16.msra.mxu0 0
        %3173 = vmatprep.subr.bf16.mxu0 0
        %3174 = vmatpush1.bf16.msra.mxu0 0
        %3175 = vmatprep.subr.bf16.mxu0 0
        %3176 = vmatpush1.bf16.msra.mxu0 0
        %3177 = vmatprep.subr.bf16.mxu0 0
        %3178 = vmatpush1.bf16.msra.mxu0 0
        %3179 = vmatprep.subr.bf16.mxu0 0
        %3180 = vmatpush1.bf16.msra.mxu0 0
        %3181 = vmatprep.subr.bf16.mxu0 0
        %3182 = vmatpush1.bf16.msra.mxu0 0
        %3183 = vmatprep.mubr.bf16.mxu0 0
        %3184 = vmatmul.mubr.bf16.gmra.mrb[0].mxu0 %v3149
        %v3185 = vpop.f32.mrb[0].mxu0
        %v3186 = vadd.f32 %v2699, %v3185
        %v3187 = vpop.f32.mrb[0].mxu0
        %v3188 = vpop.f32.mrb[0].mxu0
        %v3189 = vpop.f32.mrb[0].mxu0
        %3190 = vdwg.mxu0
        %3191 = vmatprep.subr.bf16.mxu0 0
        %3192 = vmatpush1.bf16.msra.mxu0 %v2690
        %3193 = vmatprep.subr.bf16.mxu0 0
        %3194 = vmatpush1.bf16.msra.mxu0 %v2691
        %3195 = vmatprep.subr.bf16.mxu0 0
        %3196 = vmatpush1.bf16.msra.mxu0 0
        %3197 = vmatprep.subr.bf16.mxu0 0
        %3198 = vmatpush1.bf16.msra.mxu0 0
        %3199 = vmatprep.subr.bf16.mxu0 0
        %3200 = vmatpush1.bf16.msra.mxu0 0
        %3201 = vmatprep.subr.bf16.mxu0 0
        %3202 = vmatpush1.bf16.msra.mxu0 0
        %3203 = vmatprep.subr.bf16.mxu0 0
        %3204 = vmatpush1.bf16.msra.mxu0 0
        %3205 = vmatprep.subr.bf16.mxu0 0
        %3206 = vmatpush1.bf16.msra.mxu0 0
        %3207 = vmatprep.subr.bf16.mxu0 0
        %3208 = vmatpush1.bf16.msra.mxu0 0
        %3209 = vmatprep.subr.bf16.mxu0 0
        %3210 = vmatpush1.bf16.msra.mxu0 0
        %3211 = vmatprep.subr.bf16.mxu0 0
        %3212 = vmatpush1.bf16.msra.mxu0 0
        %3213 = vmatprep.subr.bf16.mxu0 0
        %3214 = vmatpush1.bf16.msra.mxu0 0
        %3215 = vmatprep.subr.bf16.mxu0 0
        %3216 = vmatpush1.bf16.msra.mxu0 0
        %3217 = vmatprep.subr.bf16.mxu0 0
        %3218 = vmatpush1.bf16.msra.mxu0 0
        %3219 = vmatprep.subr.bf16.mxu0 0
        %3220 = vmatpush1.bf16.msra.mxu0 0
        %3221 = vmatprep.subr.bf16.mxu0 0
        %3222 = vmatpush1.bf16.msra.mxu0 0
        %3223 = vmatprep.mubr.bf16.mxu0 0
        %3224 = vmatmul.mubr.bf16.gmra.mrb[0].mxu0 %v3149
        %v3225 = vpop.f32.mrb[0].mxu0
        %v3226 = vadd.f32 %v2701, %v3225
        %v3227 = vpop.f32.mrb[0].mxu0
        %v3228 = vpop.f32.mrb[0].mxu0
        %v3229 = vpop.f32.mrb[0].mxu0
        %3230 = vdwg.mxu0
        %3231 = vmatprep.subr.bf16.mxu0 0
        %3232 = vmatpush1.bf16.msra.mxu0 %v2697
        %3233 = vmatprep.subr.bf16.mxu0 0
        %3234 = vmatpush1.bf16.msra.mxu0 %v2698
        %3235 = vmatprep.subr.bf16.mxu0 0
        %3236 = vmatpush1.bf16.msra.mxu0 0
        %3237 = vmatprep.subr.bf16.mxu0 0
        %3238 = vmatpush1.bf16.msra.mxu0 0
        %3239 = vmatprep.subr.bf16.mxu0 0
        %3240 = vmatpush1.bf16.msra.mxu0 0
        %3241 = vmatprep.subr.bf16.mxu0 0
        %3242 = vmatpush1.bf16.msra.mxu0 0
        %3243 = vmatprep.subr.bf16.mxu0 0
        %3244 = vmatpush1.bf16.msra.mxu0 0
        %3245 = vmatprep.subr.bf16.mxu0 0
        %3246 = vmatpush1.bf16.msra.mxu0 0
        %3247 = vmatprep.subr.bf16.mxu0 0
        %3248 = vmatpush1.bf16.msra.mxu0 0
        %3249 = vmatprep.subr.bf16.mxu0 0
        %3250 = vmatpush1.bf16.msra.mxu0 0
        %3251 = vmatprep.subr.bf16.mxu0 0
        %3252 = vmatpush1.bf16.msra.mxu0 0
        %3253 = vmatprep.subr.bf16.mxu0 0
        %3254 = vmatpush1.bf16.msra.mxu0 0
        %3255 = vmatprep.subr.bf16.mxu0 0
        %3256 = vmatpush1.bf16.msra.mxu0 0
        %3257 = vmatprep.subr.bf16.mxu0 0
        %3258 = vmatpush1.bf16.msra.mxu0 0
        %3259 = vmatprep.subr.bf16.mxu0 0
        %3260 = vmatpush1.bf16.msra.mxu0 0
        %3261 = vmatprep.subr.bf16.mxu0 0
        %3262 = vmatpush1.bf16.msra.mxu0 0
        %3263 = vmatprep.mubr.bf16.mxu0 0
        %3264 = vmatmul.mubr.bf16.gmra.mrb[0].mxu0 %v3149
        %v3265 = vpop.f32.mrb[0].mxu0
        %v3266 = vadd.f32 %v2703, %v3265
        %v3267 = vpop.f32.mrb[0].mxu0
        %v3268 = vpop.f32.mrb[0].mxu0
        %v3269 = vpop.f32.mrb[0].mxu0
        %3270 = vdwg.mxu0
        %v3271 = vld [vmem:[#allocation2 + $0x3] sm:$0x1]
        %v3272 = vadd.f32 %v3271, %v3186
        %v3273 = vxor.u32 %v3272, 2147483648
        %v3274 = vmul.f32 %v3273, 1.442695
        %v3275 = vpow.pop %v3274
        %v3276 = vadd.f32 %v3275, 1.0
        %v3277 = vrcp.pop %v3276
        %v3278 = vmul.f32 1.0, %v3277
        %v3279 = vld [vmem:[%s1026 + $0x3] sm:$0x1]
        %v3280 = vadd.f32 %v3279, %v3226
        %v3281 = vxor.u32 %v3280, 2147483648
        %v3282 = vmul.f32 %v3281, 1.442695
        %v3283 = vpow.pop %v3282
        %v3284 = vadd.f32 %v3283, 1.0
        %v3285 = vrcp.pop %v3284
        %v3286 = vmul.f32 1.0, %v3285
        %v3287 = vld [vmem:[%s1083 + $0x3] sm:$0x1]
        %v3288 = vmul.f32 %v3278, %v3266
        %v3289 = vadd.f32 %v3287, %v3288
        %v3290 = vtanh.pop %v3289
        %v3291 = vsub.f32 1.0, %v3286
        %v3292 = vmul.f32 %v3291, %v3290
        %v3293 = vmul.f32 %v3286, %v3145
        %v3294 = vadd.f32 %v3292, %v3293
        %3295 = vst.msk [vmem:[#allocation3 + $0x3] sm:$0x1] %vm1257, %v3294
        %v3296 = vpack.c.bf16 %v3294, %v3294
        %v3298 = vsel %vm898, %v3296, 0
        %3300 = vmatprep.subr.bf16.mxu0 0
        %3301 = vmatpush1.bf16.msra.mxu0 %v2683
        %3302 = vmatprep.subr.bf16.mxu0 0
        %3303 = vmatpush1.bf16.msra.mxu0 %v2684
        %3304 = vmatprep.subr.bf16.mxu0 0
        %3305 = vmatpush1.bf16.msra.mxu0 0
        %3306 = vmatprep.subr.bf16.mxu0 0
        %3307 = vmatpush1.bf16.msra.mxu0 0
        %3308 = vmatprep.subr.bf16.mxu0 0
        %3309 = vmatpush1.bf16.msra.mxu0 0
        %3310 = vmatprep.subr.bf16.mxu0 0
        %3311 = vmatpush1.bf16.msra.mxu0 0
        %3312 = vmatprep.subr.bf16.mxu0 0
        %3313 = vmatpush1.bf16.msra.mxu0 0
        %3314 = vmatprep.subr.bf16.mxu0 0
        %3315 = vmatpush1.bf16.msra.mxu0 0
        %3316 = vmatprep.subr.bf16.mxu0 0
        %3317 = vmatpush1.bf16.msra.mxu0 0
        %3318 = vmatprep.subr.bf16.mxu0 0
        %3319 = vmatpush1.bf16.msra.mxu0 0
        %3320 = vmatprep.subr.bf16.mxu0 0
        %3321 = vmatpush1.bf16.msra.mxu0 0
        %3322 = vmatprep.subr.bf16.mxu0 0
        %3323 = vmatpush1.bf16.msra.mxu0 0
        %3324 = vmatprep.subr.bf16.mxu0 0
        %3325 = vmatpush1.bf16.msra.mxu0 0
        %3326 = vmatprep.subr.bf16.mxu0 0
        %3327 = vmatpush1.bf16.msra.mxu0 0
        %3328 = vmatprep.subr.bf16.mxu0 0
        %3329 = vmatpush1.bf16.msra.mxu0 0
        %3330 = vmatprep.subr.bf16.mxu0 0
        %3331 = vmatpush1.bf16.msra.mxu0 0
        %3332 = vmatprep.mubr.bf16.mxu0 0
        %3333 = vmatmul.mubr.bf16.gmra.mrb[0].mxu0 %v3298
        %v3334 = vpop.f32.mrb[0].mxu0
        %v3335 = vadd.f32 %v2699, %v3334
        %v3336 = vpop.f32.mrb[0].mxu0
        %v3337 = vpop.f32.mrb[0].mxu0
        %v3338 = vpop.f32.mrb[0].mxu0
        %3339 = vdwg.mxu0
        %3340 = vmatprep.subr.bf16.mxu0 0
        %3341 = vmatpush1.bf16.msra.mxu0 %v2690
        %3342 = vmatprep.subr.bf16.mxu0 0
        %3343 = vmatpush1.bf16.msra.mxu0 %v2691
        %3344 = vmatprep.subr.bf16.mxu0 0
        %3345 = vmatpush1.bf16.msra.mxu0 0
        %3346 = vmatprep.subr.bf16.mxu0 0
        %3347 = vmatpush1.bf16.msra.mxu0 0
        %3348 = vmatprep.subr.bf16.mxu0 0
        %3349 = vmatpush1.bf16.msra.mxu0 0
        %3350 = vmatprep.subr.bf16.mxu0 0
        %3351 = vmatpush1.bf16.msra.mxu0 0
        %3352 = vmatprep.subr.bf16.mxu0 0
        %3353 = vmatpush1.bf16.msra.mxu0 0
        %3354 = vmatprep.subr.bf16.mxu0 0
        %3355 = vmatpush1.bf16.msra.mxu0 0
        %3356 = vmatprep.subr.bf16.mxu0 0
        %3357 = vmatpush1.bf16.msra.mxu0 0
        %3358 = vmatprep.subr.bf16.mxu0 0
        %3359 = vmatpush1.bf16.msra.mxu0 0
        %3360 = vmatprep.subr.bf16.mxu0 0
        %3361 = vmatpush1.bf16.msra.mxu0 0
        %3362 = vmatprep.subr.bf16.mxu0 0
        %3363 = vmatpush1.bf16.msra.mxu0 0
        %3364 = vmatprep.subr.bf16.mxu0 0
        %3365 = vmatpush1.bf16.msra.mxu0 0
        %3366 = vmatprep.subr.bf16.mxu0 0
        %3367 = vmatpush1.bf16.msra.mxu0 0
        %3368 = vmatprep.subr.bf16.mxu0 0
        %3369 = vmatpush1.bf16.msra.mxu0 0
        %3370 = vmatprep.subr.bf16.mxu0 0
        %3371 = vmatpush1.bf16.msra.mxu0 0
        %3372 = vmatprep.mubr.bf16.mxu0 0
        %3373 = vmatmul.mubr.bf16.gmra.mrb[0].mxu0 %v3298
        %v3374 = vpop.f32.mrb[0].mxu0
        %v3375 = vadd.f32 %v2701, %v3374
        %v3376 = vpop.f32.mrb[0].mxu0
        %v3377 = vpop.f32.mrb[0].mxu0
        %v3378 = vpop.f32.mrb[0].mxu0
        %3379 = vdwg.mxu0
        %3380 = vmatprep.subr.bf16.mxu0 0
        %3381 = vmatpush1.bf16.msra.mxu0 %v2697
        %3382 = vmatprep.subr.bf16.mxu0 0
        %3383 = vmatpush1.bf16.msra.mxu0 %v2698
        %3384 = vmatprep.subr.bf16.mxu0 0
        %3385 = vmatpush1.bf16.msra.mxu0 0
        %3386 = vmatprep.subr.bf16.mxu0 0
        %3387 = vmatpush1.bf16.msra.mxu0 0
        %3388 = vmatprep.subr.bf16.mxu0 0
        %3389 = vmatpush1.bf16.msra.mxu0 0
        %3390 = vmatprep.subr.bf16.mxu0 0
        %3391 = vmatpush1.bf16.msra.mxu0 0
        %3392 = vmatprep.subr.bf16.mxu0 0
        %3393 = vmatpush1.bf16.msra.mxu0 0
        %3394 = vmatprep.subr.bf16.mxu0 0
        %3395 = vmatpush1.bf16.msra.mxu0 0
        %3396 = vmatprep.subr.bf16.mxu0 0
        %3397 = vmatpush1.bf16.msra.mxu0 0
        %3398 = vmatprep.subr.bf16.mxu0 0
        %3399 = vmatpush1.bf16.msra.mxu0 0
        %3400 = vmatprep.subr.bf16.mxu0 0
        %3401 = vmatpush1.bf16.msra.mxu0 0
        %3402 = vmatprep.subr.bf16.mxu0 0
        %3403 = vmatpush1.bf16.msra.mxu0 0
        %3404 = vmatprep.subr.bf16.mxu0 0
        %3405 = vmatpush1.bf16.msra.mxu0 0
        %3406 = vmatprep.subr.bf16.mxu0 0
        %3407 = vmatpush1.bf16.msra.mxu0 0
        %3408 = vmatprep.subr.bf16.mxu0 0
        %3409 = vmatpush1.bf16.msra.mxu0 0
        %3410 = vmatprep.subr.bf16.mxu0 0
        %3411 = vmatpush1.bf16.msra.mxu0 0
        %3412 = vmatprep.mubr.bf16.mxu0 0
        %3413 = vmatmul.mubr.bf16.gmra.mrb[0].mxu0 %v3298
        %v3414 = vpop.f32.mrb[0].mxu0
        %v3415 = vadd.f32 %v2703, %v3414
        %v3416 = vpop.f32.mrb[0].mxu0
        %v3417 = vpop.f32.mrb[0].mxu0
        %v3418 = vpop.f32.mrb[0].mxu0
        %3419 = vdwg.mxu0
        %v3420 = vld [vmem:[#allocation2 + $0x4] sm:$0x1]
        %v3421 = vadd.f32 %v3420, %v3335
        %v3422 = vxor.u32 %v3421, 2147483648
        %v3423 = vmul.f32 %v3422, 1.442695
        %v3424 = vpow.pop %v3423
        %v3425 = vadd.f32 %v3424, 1.0
        %v3426 = vrcp.pop %v3425
        %v3427 = vmul.f32 1.0, %v3426
        %v3428 = vld [vmem:[%s1026 + $0x4] sm:$0x1]
        %v3429 = vadd.f32 %v3428, %v3375
        %v3430 = vxor.u32 %v3429, 2147483648
        %v3431 = vmul.f32 %v3430, 1.442695
        %v3432 = vpow.pop %v3431
        %v3433 = vadd.f32 %v3432, 1.0
        %v3434 = vrcp.pop %v3433
        %v3435 = vmul.f32 1.0, %v3434
        %v3436 = vld [vmem:[%s1083 + $0x4] sm:$0x1]
        %v3437 = vmul.f32 %v3427, %v3415
        %v3438 = vadd.f32 %v3436, %v3437
        %v3439 = vtanh.pop %v3438
        %v3440 = vsub.f32 1.0, %v3435
        %v3441 = vmul.f32 %v3440, %v3439
        %v3442 = vmul.f32 %v3435, %v3294
        %v3443 = vadd.f32 %v3441, %v3442
        %3444 = vst.msk [vmem:[#allocation3 + $0x4] sm:$0x1] %vm1257, %v3443
        %v3445 = vpack.c.bf16 %v3443, %v3443
        %v3447 = vsel %vm898, %v3445, 0
        %3449 = vmatprep.subr.bf16.mxu0 0
        %3450 = vmatpush1.bf16.msra.mxu0 %v2683
        %3451 = vmatprep.subr.bf16.mxu0 0
        %3452 = vmatpush1.bf16.msra.mxu0 %v2684
        %3453 = vmatprep.subr.bf16.mxu0 0
        %3454 = vmatpush1.bf16.msra.mxu0 0
        %3455 = vmatprep.subr.bf16.mxu0 0
        %3456 = vmatpush1.bf16.msra.mxu0 0
        %3457 = vmatprep.subr.bf16.mxu0 0
        %3458 = vmatpush1.bf16.msra.mxu0 0
        %3459 = vmatprep.subr.bf16.mxu0 0
        %3460 = vmatpush1.bf16.msra.mxu0 0
        %3461 = vmatprep.subr.bf16.mxu0 0
        %3462 = vmatpush1.bf16.msra.mxu0 0
        %3463 = vmatprep.subr.bf16.mxu0 0
        %3464 = vmatpush1.bf16.msra.mxu0 0
        %3465 = vmatprep.subr.bf16.mxu0 0
        %3466 = vmatpush1.bf16.msra.mxu0 0
        %3467 = vmatprep.subr.bf16.mxu0 0
        %3468 = vmatpush1.bf16.msra.mxu0 0
        %3469 = vmatprep.subr.bf16.mxu0 0
        %3470 = vmatpush1.bf16.msra.mxu0 0
        %3471 = vmatprep.subr.bf16.mxu0 0
        %3472 = vmatpush1.bf16.msra.mxu0 0
        %3473 = vmatprep.subr.bf16.mxu0 0
        %3474 = vmatpush1.bf16.msra.mxu0 0
        %3475 = vmatprep.subr.bf16.mxu0 0
        %3476 = vmatpush1.bf16.msra.mxu0 0
        %3477 = vmatprep.subr.bf16.mxu0 0
        %3478 = vmatpush1.bf16.msra.mxu0 0
        %3479 = vmatprep.subr.bf16.mxu0 0
        %3480 = vmatpush1.bf16.msra.mxu0 0
        %3481 = vmatprep.mubr.bf16.mxu0 0
        %3482 = vmatmul.mubr.bf16.gmra.mrb[0].mxu0 %v3447
        %v3483 = vpop.f32.mrb[0].mxu0
        %v3484 = vadd.f32 %v2699, %v3483
        %v3485 = vpop.f32.mrb[0].mxu0
        %v3486 = vpop.f32.mrb[0].mxu0
        %v3487 = vpop.f32.mrb[0].mxu0
        %3488 = vdwg.mxu0
        %3489 = vmatprep.subr.bf16.mxu0 0
        %3490 = vmatpush1.bf16.msra.mxu0 %v2690
        %3491 = vmatprep.subr.bf16.mxu0 0
        %3492 = vmatpush1.bf16.msra.mxu0 %v2691
        %3493 = vmatprep.subr.bf16.mxu0 0
        %3494 = vmatpush1.bf16.msra.mxu0 0
        %3495 = vmatprep.subr.bf16.mxu0 0
        %3496 = vmatpush1.bf16.msra.mxu0 0
        %3497 = vmatprep.subr.bf16.mxu0 0
        %3498 = vmatpush1.bf16.msra.mxu0 0
        %3499 = vmatprep.subr.bf16.mxu0 0
        %3500 = vmatpush1.bf16.msra.mxu0 0
        %3501 = vmatprep.subr.bf16.mxu0 0
        %3502 = vmatpush1.bf16.msra.mxu0 0
        %3503 = vmatprep.subr.bf16.mxu0 0
        %3504 = vmatpush1.bf16.msra.mxu0 0
        %3505 = vmatprep.subr.bf16.mxu0 0
        %3506 = vmatpush1.bf16.msra.mxu0 0
        %3507 = vmatprep.subr.bf16.mxu0 0
        %3508 = vmatpush1.bf16.msra.mxu0 0
        %3509 = vmatprep.subr.bf16.mxu0 0
        %3510 = vmatpush1.bf16.msra.mxu0 0
        %3511 = vmatprep.subr.bf16.mxu0 0
        %3512 = vmatpush1.bf16.msra.mxu0 0
        %3513 = vmatprep.subr.bf16.mxu0 0
        %3514 = vmatpush1.bf16.msra.mxu0 0
        %3515 = vmatprep.subr.bf16.mxu0 0
        %3516 = vmatpush1.bf16.msra.mxu0 0
        %3517 = vmatprep.subr.bf16.mxu0 0
        %3518 = vmatpush1.bf16.msra.mxu0 0
        %3519 = vmatprep.subr.bf16.mxu0 0
        %3520 = vmatpush1.bf16.msra.mxu0 0
        %3521 = vmatprep.mubr.bf16.mxu0 0
        %3522 = vmatmul.mubr.bf16.gmra.mrb[0].mxu0 %v3447
        %v3523 = vpop.f32.mrb[0].mxu0
        %v3524 = vadd.f32 %v2701, %v3523
        %v3525 = vpop.f32.mrb[0].mxu0
        %v3526 = vpop.f32.mrb[0].mxu0
        %v3527 = vpop.f32.mrb[0].mxu0
        %3528 = vdwg.mxu0
        %3529 = vmatprep.subr.bf16.mxu0 0
        %3530 = vmatpush1.bf16.msra.mxu0 %v2697
        %3531 = vmatprep.subr.bf16.mxu0 0
        %3532 = vmatpush1.bf16.msra.mxu0 %v2698
        %3533 = vmatprep.subr.bf16.mxu0 0
        %3534 = vmatpush1.bf16.msra.mxu0 0
        %3535 = vmatprep.subr.bf16.mxu0 0
        %3536 = vmatpush1.bf16.msra.mxu0 0
        %3537 = vmatprep.subr.bf16.mxu0 0
        %3538 = vmatpush1.bf16.msra.mxu0 0
        %3539 = vmatprep.subr.bf16.mxu0 0
        %3540 = vmatpush1.bf16.msra.mxu0 0
        %3541 = vmatprep.subr.bf16.mxu0 0
        %3542 = vmatpush1.bf16.msra.mxu0 0
        %3543 = vmatprep.subr.bf16.mxu0 0
        %3544 = vmatpush1.bf16.msra.mxu0 0
        %3545 = vmatprep.subr.bf16.mxu0 0
        %3546 = vmatpush1.bf16.msra.mxu0 0
        %3547 = vmatprep.subr.bf16.mxu0 0
        %3548 = vmatpush1.bf16.msra.mxu0 0
        %3549 = vmatprep.subr.bf16.mxu0 0
        %3550 = vmatpush1.bf16.msra.mxu0 0
        %3551 = vmatprep.subr.bf16.mxu0 0
        %3552 = vmatpush1.bf16.msra.mxu0 0
        %3553 = vmatprep.subr.bf16.mxu0 0
        %3554 = vmatpush1.bf16.msra.mxu0 0
        %3555 = vmatprep.subr.bf16.mxu0 0
        %3556 = vmatpush1.bf16.msra.mxu0 0
        %3557 = vmatprep.subr.bf16.mxu0 0
        %3558 = vmatpush1.bf16.msra.mxu0 0
        %3559 = vmatprep.subr.bf16.mxu0 0
        %3560 = vmatpush1.bf16.msra.mxu0 0
        %3561 = vmatprep.mubr.bf16.mxu0 0
        %3562 = vmatmul.mubr.bf16.gmra.mrb[0].mxu0 %v3447
        %v3563 = vpop.f32.mrb[0].mxu0
        %v3564 = vadd.f32 %v2703, %v3563
        %v3565 = vpop.f32.mrb[0].mxu0
        %v3566 = vpop.f32.mrb[0].mxu0
        %v3567 = vpop.f32.mrb[0].mxu0
        %3568 = vdwg.mxu0
        %v3569 = vld [vmem:[#allocation2 + $0x5] sm:$0x1]
        %v3570 = vadd.f32 %v3569, %v3484
        %v3571 = vxor.u32 %v3570, 2147483648
        %v3572 = vmul.f32 %v3571, 1.442695
        %v3573 = vpow.pop %v3572
        %v3574 = vadd.f32 %v3573, 1.0
        %v3575 = vrcp.pop %v3574
        %v3576 = vmul.f32 1.0, %v3575
        %v3577 = vld [vmem:[%s1026 + $0x5] sm:$0x1]
        %v3578 = vadd.f32 %v3577, %v3524
        %v3579 = vxor.u32 %v3578, 2147483648
        %v3580 = vmul.f32 %v3579, 1.442695
        %v3581 = vpow.pop %v3580
        %v3582 = vadd.f32 %v3581, 1.0
        %v3583 = vrcp.pop %v3582
        %v3584 = vmul.f32 1.0, %v3583
        %v3585 = vld [vmem:[%s1083 + $0x5] sm:$0x1]
        %v3586 = vmul.f32 %v3576, %v3564
        %v3587 = vadd.f32 %v3585, %v3586
        %v3588 = vtanh.pop %v3587
        %v3589 = vsub.f32 1.0, %v3584
        %v3590 = vmul.f32 %v3589, %v3588
        %v3591 = vmul.f32 %v3584, %v3443
        %v3592 = vadd.f32 %v3590, %v3591
        %3593 = vst.msk [vmem:[#allocation3 + $0x5] sm:$0x1] %vm1257, %v3592
        %v3594 = vpack.c.bf16 %v3592, %v3592
        %v3596 = vsel %vm898, %v3594, 0
        %3598 = vmatprep.subr.bf16.mxu0 0
        %3599 = vmatpush1.bf16.msra.mxu0 %v2683
        %3600 = vmatprep.subr.bf16.mxu0 0
        %3601 = vmatpush1.bf16.msra.mxu0 %v2684
        %3602 = vmatprep.subr.bf16.mxu0 0
        %3603 = vmatpush1.bf16.msra.mxu0 0
        %3604 = vmatprep.subr.bf16.mxu0 0
        %3605 = vmatpush1.bf16.msra.mxu0 0
        %3606 = vmatprep.subr.bf16.mxu0 0
        %3607 = vmatpush1.bf16.msra.mxu0 0
        %3608 = vmatprep.subr.bf16.mxu0 0
        %3609 = vmatpush1.bf16.msra.mxu0 0
        %3610 = vmatprep.subr.bf16.mxu0 0
        %3611 = vmatpush1.bf16.msra.mxu0 0
        %3612 = vmatprep.subr.bf16.mxu0 0
        %3613 = vmatpush1.bf16.msra.mxu0 0
        %3614 = vmatprep.subr.bf16.mxu0 0
        %3615 = vmatpush1.bf16.msra.mxu0 0
        %3616 = vmatprep.subr.bf16.mxu0 0
        %3617 = vmatpush1.bf16.msra.mxu0 0
        %3618 = vmatprep.subr.bf16.mxu0 0
        %3619 = vmatpush1.bf16.msra.mxu0 0
        %3620 = vmatprep.subr.bf16.mxu0 0
        %3621 = vmatpush1.bf16.msra.mxu0 0
        %3622 = vmatprep.subr.bf16.mxu0 0
        %3623 = vmatpush1.bf16.msra.mxu0 0
        %3624 = vmatprep.subr.bf16.mxu0 0
        %3625 = vmatpush1.bf16.msra.mxu0 0
        %3626 = vmatprep.subr.bf16.mxu0 0
        %3627 = vmatpush1.bf16.msra.mxu0 0
        %3628 = vmatprep.subr.bf16.mxu0 0
        %3629 = vmatpush1.bf16.msra.mxu0 0
        %3630 = vmatprep.mubr.bf16.mxu0 0
        %3631 = vmatmul.mubr.bf16.gmra.mrb[0].mxu0 %v3596
        %v3632 = vpop.f32.mrb[0].mxu0
        %v3633 = vadd.f32 %v2699, %v3632
        %v3634 = vpop.f32.mrb[0].mxu0
        %v3635 = vpop.f32.mrb[0].mxu0
        %v3636 = vpop.f32.mrb[0].mxu0
        %3637 = vdwg.mxu0
        %3638 = vmatprep.subr.bf16.mxu0 0
        %3639 = vmatpush1.bf16.msra.mxu0 %v2690
        %3640 = vmatprep.subr.bf16.mxu0 0
        %3641 = vmatpush1.bf16.msra.mxu0 %v2691
        %3642 = vmatprep.subr.bf16.mxu0 0
        %3643 = vmatpush1.bf16.msra.mxu0 0
        %3644 = vmatprep.subr.bf16.mxu0 0
        %3645 = vmatpush1.bf16.msra.mxu0 0
        %3646 = vmatprep.subr.bf16.mxu0 0
        %3647 = vmatpush1.bf16.msra.mxu0 0
        %3648 = vmatprep.subr.bf16.mxu0 0
        %3649 = vmatpush1.bf16.msra.mxu0 0
        %3650 = vmatprep.subr.bf16.mxu0 0
        %3651 = vmatpush1.bf16.msra.mxu0 0
        %3652 = vmatprep.subr.bf16.mxu0 0
        %3653 = vmatpush1.bf16.msra.mxu0 0
        %3654 = vmatprep.subr.bf16.mxu0 0
        %3655 = vmatpush1.bf16.msra.mxu0 0
        %3656 = vmatprep.subr.bf16.mxu0 0
        %3657 = vmatpush1.bf16.msra.mxu0 0
        %3658 = vmatprep.subr.bf16.mxu0 0
        %3659 = vmatpush1.bf16.msra.mxu0 0
        %3660 = vmatprep.subr.bf16.mxu0 0
        %3661 = vmatpush1.bf16.msra.mxu0 0
        %3662 = vmatprep.subr.bf16.mxu0 0
        %3663 = vmatpush1.bf16.msra.mxu0 0
        %3664 = vmatprep.subr.bf16.mxu0 0
        %3665 = vmatpush1.bf16.msra.mxu0 0
        %3666 = vmatprep.subr.bf16.mxu0 0
        %3667 = vmatpush1.bf16.msra.mxu0 0
        %3668 = vmatprep.subr.bf16.mxu0 0
        %3669 = vmatpush1.bf16.msra.mxu0 0
        %3670 = vmatprep.mubr.bf16.mxu0 0
        %3671 = vmatmul.mubr.bf16.gmra.mrb[0].mxu0 %v3596
        %v3672 = vpop.f32.mrb[0].mxu0
        %v3673 = vadd.f32 %v2701, %v3672
        %v3674 = vpop.f32.mrb[0].mxu0
        %v3675 = vpop.f32.mrb[0].mxu0
        %v3676 = vpop.f32.mrb[0].mxu0
        %3677 = vdwg.mxu0
        %3678 = vmatprep.subr.bf16.mxu0 0
        %3679 = vmatpush1.bf16.msra.mxu0 %v2697
        %3680 = vmatprep.subr.bf16.mxu0 0
        %3681 = vmatpush1.bf16.msra.mxu0 %v2698
        %3682 = vmatprep.subr.bf16.mxu0 0
        %3683 = vmatpush1.bf16.msra.mxu0 0
        %3684 = vmatprep.subr.bf16.mxu0 0
        %3685 = vmatpush1.bf16.msra.mxu0 0
        %3686 = vmatprep.subr.bf16.mxu0 0
        %3687 = vmatpush1.bf16.msra.mxu0 0
        %3688 = vmatprep.subr.bf16.mxu0 0
        %3689 = vmatpush1.bf16.msra.mxu0 0
        %3690 = vmatprep.subr.bf16.mxu0 0
        %3691 = vmatpush1.bf16.msra.mxu0 0
        %3692 = vmatprep.subr.bf16.mxu0 0
        %3693 = vmatpush1.bf16.msra.mxu0 0
        %3694 = vmatprep.subr.bf16.mxu0 0
        %3695 = vmatpush1.bf16.msra.mxu0 0
        %3696 = vmatprep.subr.bf16.mxu0 0
        %3697 = vmatpush1.bf16.msra.mxu0 0
        %3698 = vmatprep.subr.bf16.mxu0 0
        %3699 = vmatpush1.bf16.msra.mxu0 0
        %3700 = vmatprep.subr.bf16.mxu0 0
        %3701 = vmatpush1.bf16.msra.mxu0 0
        %3702 = vmatprep.subr.bf16.mxu0 0
        %3703 = vmatpush1.bf16.msra.mxu0 0
        %3704 = vmatprep.subr.bf16.mxu0 0
        %3705 = vmatpush1.bf16.msra.mxu0 0
        %3706 = vmatprep.subr.bf16.mxu0 0
        %3707 = vmatpush1.bf16.msra.mxu0 0
        %3708 = vmatprep.subr.bf16.mxu0 0
        %3709 = vmatpush1.bf16.msra.mxu0 0
        %3710 = vmatprep.mubr.bf16.mxu0 0
        %3711 = vmatmul.mubr.bf16.gmra.mrb[0].mxu0 %v3596
        %v3712 = vpop.f32.mrb[0].mxu0
        %v3713 = vadd.f32 %v2703, %v3712
        %v3714 = vpop.f32.mrb[0].mxu0
        %v3715 = vpop.f32.mrb[0].mxu0
        %v3716 = vpop.f32.mrb[0].mxu0
        %3717 = vdwg.mxu0
        %v3718 = vld [vmem:[#allocation2 + $0x6] sm:$0x1]
        %v3719 = vadd.f32 %v3718, %v3633
        %v3720 = vxor.u32 %v3719, 2147483648
        %v3721 = vmul.f32 %v3720, 1.442695
        %v3722 = vpow.pop %v3721
        %v3723 = vadd.f32 %v3722, 1.0
        %v3724 = vrcp.pop %v3723
        %v3725 = vmul.f32 1.0, %v3724
        %v3726 = vld [vmem:[%s1026 + $0x6] sm:$0x1]
        %v3727 = vadd.f32 %v3726, %v3673
        %v3728 = vxor.u32 %v3727, 2147483648
        %v3729 = vmul.f32 %v3728, 1.442695
        %v3730 = vpow.pop %v3729
        %v3731 = vadd.f32 %v3730, 1.0
        %v3732 = vrcp.pop %v3731
        %v3733 = vmul.f32 1.0, %v3732
        %v3734 = vld [vmem:[%s1083 + $0x6] sm:$0x1]
        %v3735 = vmul.f32 %v3725, %v3713
        %v3736 = vadd.f32 %v3734, %v3735
        %v3737 = vtanh.pop %v3736
        %v3738 = vsub.f32 1.0, %v3733
        %v3739 = vmul.f32 %v3738, %v3737
        %v3740 = vmul.f32 %v3733, %v3592
        %v3741 = vadd.f32 %v3739, %v3740
        %3742 = vst.msk [vmem:[#allocation3 + $0x6] sm:$0x1] %vm1257, %v3741
        %v3743 = vpack.c.bf16 %v3741, %v3741
        %v3745 = vsel %vm898, %v3743, 0
        %3747 = vmatprep.subr.bf16.mxu0 0
        %3748 = vmatpush1.bf16.msra.mxu0 %v2683
        %3749 = vmatprep.subr.bf16.mxu0 0
        %3750 = vmatpush1.bf16.msra.mxu0 %v2684
        %3751 = vmatprep.subr.bf16.mxu0 0
        %3752 = vmatpush1.bf16.msra.mxu0 0
        %3753 = vmatprep.subr.bf16.mxu0 0
        %3754 = vmatpush1.bf16.msra.mxu0 0
        %3755 = vmatprep.subr.bf16.mxu0 0
        %3756 = vmatpush1.bf16.msra.mxu0 0
        %3757 = vmatprep.subr.bf16.mxu0 0
        %3758 = vmatpush1.bf16.msra.mxu0 0
        %3759 = vmatprep.subr.bf16.mxu0 0
        %3760 = vmatpush1.bf16.msra.mxu0 0
        %3761 = vmatprep.subr.bf16.mxu0 0
        %3762 = vmatpush1.bf16.msra.mxu0 0
        %3763 = vmatprep.subr.bf16.mxu0 0
        %3764 = vmatpush1.bf16.msra.mxu0 0
        %3765 = vmatprep.subr.bf16.mxu0 0
        %3766 = vmatpush1.bf16.msra.mxu0 0
        %3767 = vmatprep.subr.bf16.mxu0 0
        %3768 = vmatpush1.bf16.msra.mxu0 0
        %3769 = vmatprep.subr.bf16.mxu0 0
        %3770 = vmatpush1.bf16.msra.mxu0 0
        %3771 = vmatprep.subr.bf16.mxu0 0
        %3772 = vmatpush1.bf16.msra.mxu0 0
        %3773 = vmatprep.subr.bf16.mxu0 0
        %3774 = vmatpush1.bf16.msra.mxu0 0
        %3775 = vmatprep.subr.bf16.mxu0 0
        %3776 = vmatpush1.bf16.msra.mxu0 0
        %3777 = vmatprep.subr.bf16.mxu0 0
        %3778 = vmatpush1.bf16.msra.mxu0 0
        %3779 = vmatprep.mubr.bf16.mxu0 0
        %3780 = vmatmul.mubr.bf16.gmra.mrb[0].mxu0 %v3745
        %v3781 = vpop.f32.mrb[0].mxu0
        %v3782 = vadd.f32 %v2699, %v3781
        %v3783 = vpop.f32.mrb[0].mxu0
        %v3784 = vpop.f32.mrb[0].mxu0
        %v3785 = vpop.f32.mrb[0].mxu0
        %3786 = vdwg.mxu0
        %3787 = vmatprep.subr.bf16.mxu0 0
        %3788 = vmatpush1.bf16.msra.mxu0 %v2690
        %3789 = vmatprep.subr.bf16.mxu0 0
        %3790 = vmatpush1.bf16.msra.mxu0 %v2691
        %3791 = vmatprep.subr.bf16.mxu0 0
        %3792 = vmatpush1.bf16.msra.mxu0 0
        %3793 = vmatprep.subr.bf16.mxu0 0
        %3794 = vmatpush1.bf16.msra.mxu0 0
        %3795 = vmatprep.subr.bf16.mxu0 0
        %3796 = vmatpush1.bf16.msra.mxu0 0
        %3797 = vmatprep.subr.bf16.mxu0 0
        %3798 = vmatpush1.bf16.msra.mxu0 0
        %3799 = vmatprep.subr.bf16.mxu0 0
        %3800 = vmatpush1.bf16.msra.mxu0 0
        %3801 = vmatprep.subr.bf16.mxu0 0
        %3802 = vmatpush1.bf16.msra.mxu0 0
        %3803 = vmatprep.subr.bf16.mxu0 0
        %3804 = vmatpush1.bf16.msra.mxu0 0
        %3805 = vmatprep.subr.bf16.mxu0 0
        %3806 = vmatpush1.bf16.msra.mxu0 0
        %3807 = vmatprep.subr.bf16.mxu0 0
        %3808 = vmatpush1.bf16.msra.mxu0 0
        %3809 = vmatprep.subr.bf16.mxu0 0
        %3810 = vmatpush1.bf16.msra.mxu0 0
        %3811 = vmatprep.subr.bf16.mxu0 0
        %3812 = vmatpush1.bf16.msra.mxu0 0
        %3813 = vmatprep.subr.bf16.mxu0 0
        %3814 = vmatpush1.bf16.msra.mxu0 0
        %3815 = vmatprep.subr.bf16.mxu0 0
        %3816 = vmatpush1.bf16.msra.mxu0 0
        %3817 = vmatprep.subr.bf16.mxu0 0
        %3818 = vmatpush1.bf16.msra.mxu0 0
        %3819 = vmatprep.mubr.bf16.mxu0 0
        %3820 = vmatmul.mubr.bf16.gmra.mrb[0].mxu0 %v3745
        %v3821 = vpop.f32.mrb[0].mxu0
        %v3822 = vadd.f32 %v2701, %v3821
        %v3823 = vpop.f32.mrb[0].mxu0
        %v3824 = vpop.f32.mrb[0].mxu0
        %v3825 = vpop.f32.mrb[0].mxu0
        %3826 = vdwg.mxu0
        %3827 = vmatprep.subr.bf16.mxu0 0
        %3828 = vmatpush1.bf16.msra.mxu0 %v2697
        %3829 = vmatprep.subr.bf16.mxu0 0
        %3830 = vmatpush1.bf16.msra.mxu0 %v2698
        %3831 = vmatprep.subr.bf16.mxu0 0
        %3832 = vmatpush1.bf16.msra.mxu0 0
        %3833 = vmatprep.subr.bf16.mxu0 0
        %3834 = vmatpush1.bf16.msra.mxu0 0
        %3835 = vmatprep.subr.bf16.mxu0 0
        %3836 = vmatpush1.bf16.msra.mxu0 0
        %3837 = vmatprep.subr.bf16.mxu0 0
        %3838 = vmatpush1.bf16.msra.mxu0 0
        %3839 = vmatprep.subr.bf16.mxu0 0
        %3840 = vmatpush1.bf16.msra.mxu0 0
        %3841 = vmatprep.subr.bf16.mxu0 0
        %3842 = vmatpush1.bf16.msra.mxu0 0
        %3843 = vmatprep.subr.bf16.mxu0 0
        %3844 = vmatpush1.bf16.msra.mxu0 0
        %3845 = vmatprep.subr.bf16.mxu0 0
        %3846 = vmatpush1.bf16.msra.mxu0 0
        %3847 = vmatprep.subr.bf16.mxu0 0
        %3848 = vmatpush1.bf16.msra.mxu0 0
        %3849 = vmatprep.subr.bf16.mxu0 0
        %3850 = vmatpush1.bf16.msra.mxu0 0
        %3851 = vmatprep.subr.bf16.mxu0 0
        %3852 = vmatpush1.bf16.msra.mxu0 0
        %3853 = vmatprep.subr.bf16.mxu0 0
        %3854 = vmatpush1.bf16.msra.mxu0 0
        %3855 = vmatprep.subr.bf16.mxu0 0
        %3856 = vmatpush1.bf16.msra.mxu0 0
        %3857 = vmatprep.subr.bf16.mxu0 0
        %3858 = vmatpush1.bf16.msra.mxu0 0
        %3859 = vmatprep.mubr.bf16.mxu0 0
        %3860 = vmatmul.mubr.bf16.gmra.mrb[0].mxu0 %v3745
        %v3861 = vpop.f32.mrb[0].mxu0
        %v3862 = vadd.f32 %v2703, %v3861
        %v3863 = vpop.f32.mrb[0].mxu0
        %v3864 = vpop.f32.mrb[0].mxu0
        %v3865 = vpop.f32.mrb[0].mxu0
        %3866 = vdwg.mxu0
        %v3867 = vld [vmem:[#allocation2 + $0x7] sm:$0x1]
        %v3868 = vadd.f32 %v3867, %v3782
        %v3869 = vxor.u32 %v3868, 2147483648
        %v3870 = vmul.f32 %v3869, 1.442695
        %v3871 = vpow.pop %v3870
        %v3872 = vadd.f32 %v3871, 1.0
        %v3873 = vrcp.pop %v3872
        %v3874 = vmul.f32 1.0, %v3873
        %v3875 = vld [vmem:[%s1026 + $0x7] sm:$0x1]
        %v3876 = vadd.f32 %v3875, %v3822
        %v3877 = vxor.u32 %v3876, 2147483648
        %v3878 = vmul.f32 %v3877, 1.442695
        %v3879 = vpow.pop %v3878
        %v3880 = vadd.f32 %v3879, 1.0
        %v3881 = vrcp.pop %v3880
        %v3882 = vmul.f32 1.0, %v3881
        %v3883 = vld [vmem:[%s1083 + $0x7] sm:$0x1]
        %v3884 = vmul.f32 %v3874, %v3862
        %v3885 = vadd.f32 %v3883, %v3884
        %v3886 = vtanh.pop %v3885
        %v3887 = vsub.f32 1.0, %v3882
        %v3888 = vmul.f32 %v3887, %v3886
        %v3889 = vmul.f32 %v3882, %v3741
        %v3890 = vadd.f32 %v3888, %v3889
        %3891 = vst.msk [vmem:[#allocation3 + $0x7] sm:$0x1] %vm1257, %v3890
        %v3892 = vld [vmem:[#allocation3] sm:$0xff]
        %v3893 = vld [vmem:[#allocation27] sm:$0xff]
        %v3894 = vld [vmem:[#allocation27 + $0x8] sm:$0xff]
        %v3895 = vld [vmem:[#allocation27 + $0x10] sm:$0xff]
        %v3896 = vld [vmem:[#allocation27 + $0x18] sm:$0xff]
        %v3897 = vpack.c.bf16 %v3892, %v3892
        %v3898 = vpack.c.bf16 %v3894, %v3893
        %v3899 = vpack.c.bf16 %v3896, %v3895
        %v3900 = vld [vmem:[#allocation28] sm:$0x1]
        %v3902 = vlaneseq
        %v3903 = vshrl.u32 %v3902, 7
        %v3904 = vsub.s32 0, %v3903
        %v3905 = vrot.slane %v3900, %v3904
        %v3908 = vsel %vm898, %v3897, 0
        %3910 = vmatprep.subr.bf16.mxu0 0
        %3911 = vmatpush1.bf16.msra.mxu0 %v3898
        %3912 = vmatprep.subr.bf16.mxu0 0
        %3913 = vmatpush1.bf16.msra.mxu0 %v3899
        %3914 = vmatprep.subr.bf16.mxu0 0
        %3915 = vmatpush1.bf16.msra.mxu0 0
        %3916 = vmatprep.subr.bf16.mxu0 0
        %3917 = vmatpush1.bf16.msra.mxu0 0
        %3918 = vmatprep.subr.bf16.mxu0 0
        %3919 = vmatpush1.bf16.msra.mxu0 0
        %3920 = vmatprep.subr.bf16.mxu0 0
        %3921 = vmatpush1.bf16.msra.mxu0 0
        %3922 = vmatprep.subr.bf16.mxu0 0
        %3923 = vmatpush1.bf16.msra.mxu0 0
        %3924 = vmatprep.subr.bf16.mxu0 0
        %3925 = vmatpush1.bf16.msra.mxu0 0
        %3926 = vmatprep.subr.bf16.mxu0 0
        %3927 = vmatpush1.bf16.msra.mxu0 0
        %3928 = vmatprep.subr.bf16.mxu0 0
        %3929 = vmatpush1.bf16.msra.mxu0 0
        %3930 = vmatprep.subr.bf16.mxu0 0
        %3931 = vmatpush1.bf16.msra.mxu0 0
        %3932 = vmatprep.subr.bf16.mxu0 0
        %3933 = vmatpush1.bf16.msra.mxu0 0
        %3934 = vmatprep.subr.bf16.mxu0 0
        %3935 = vmatpush1.bf16.msra.mxu0 0
        %3936 = vmatprep.subr.bf16.mxu0 0
        %3937 = vmatpush1.bf16.msra.mxu0 0
        %3938 = vmatprep.subr.bf16.mxu0 0
        %3939 = vmatpush1.bf16.msra.mxu0 0
        %3940 = vmatprep.subr.bf16.mxu0 0
        %3941 = vmatpush1.bf16.msra.mxu0 0
        %3942 = vmatprep.mubr.bf16.mxu0 0
        %3943 = vmatmul.mubr.bf16.gmra.mrb[0].mxu0 %v3908
        %v3944 = vpop.f32.mrb[0].mxu0
        %v3945 = vadd.f32 %v3905, %v3944
        %v3946 = vpop.f32.mrb[0].mxu0
        %v3947 = vpop.f32.mrb[0].mxu0
        %v3948 = vpop.f32.mrb[0].mxu0
        %3949 = vdwg.mxu0
        %v3950 = vadd.f32 %v2495, %v3945
        %v3951 = vsel %vm898, %v3950, 0.0
        %3952 = vadd.xlane.f32.xlu0 %v3951
        %v3953 = vpop.xlane.xlu0 %3952
        %v3954 = vmul.f32 %v3953, %v902
        %v3955 = vsub.f32 %v3950, %v3954
        %v3956 = vmul.f32 %v3955, %v3955
        %v3957 = vsel %vm898, %v3956, 0.0
        %3958 = vadd.xlane.f32.xlu0 %v3957
        %v3959 = vpop.xlane.xlu0 %3958
        %v3960 = vmul.f32 %v3959, %v902
        %v3961 = vadd.f32 %v3960, 1e-05
        %v3962 = vrsqrt.pop %v3961
        %v3963 = vmul.f32 %v3955, %v3962
        %v3964 = vld [vmem:[%s17] sm:$0xff]
        %v3965 = vld [vmem:[%s17 + $0x8] sm:$0xff]
        %v3966 = vld [vmem:[%s17 + $0x10] sm:$0xff]
        %v3967 = vld [vmem:[%s17 + $0x18] sm:$0xff]
        %v3968 = vpack.c.bf16 %v3963, %v3963
        %v3969 = vpack.c.bf16 %v3965, %v3964
        %v3970 = vpack.c.bf16 %v3967, %v3966
        %v3971 = vld [vmem:[%s18] sm:$0x1]
        %v3973 = vlaneseq
        %v3974 = vshrl.u32 %v3973, 7
        %v3975 = vsub.s32 0, %v3974
        %v3976 = vrot.slane %v3971, %v3975
        %v3979 = vsel %vm898, %v3968, 0
        %3981 = vmatprep.subr.bf16.mxu0 0
        %3982 = vmatpush1.bf16.msra.mxu0 %v3969
        %3983 = vmatprep.subr.bf16.mxu0 0
        %3984 = vmatpush1.bf16.msra.mxu0 %v3970
        %3985 = vmatprep.subr.bf16.mxu0 0
        %3986 = vmatpush1.bf16.msra.mxu0 0
        %3987 = vmatprep.subr.bf16.mxu0 0
        %3988 = vmatpush1.bf16.msra.mxu0 0
        %3989 = vmatprep.subr.bf16.mxu0 0
        %3990 = vmatpush1.bf16.msra.mxu0 0
        %3991 = vmatprep.subr.bf16.mxu0 0
        %3992 = vmatpush1.bf16.msra.mxu0 0
        %3993 = vmatprep.subr.bf16.mxu0 0
        %3994 = vmatpush1.bf16.msra.mxu0 0
        %3995 = vmatprep.subr.bf16.mxu0 0
        %3996 = vmatpush1.bf16.msra.mxu0 0
        %3997 = vmatprep.subr.bf16.mxu0 0
        %3998 = vmatpush1.bf16.msra.mxu0 0
        %3999 = vmatprep.subr.bf16.mxu0 0
        %4000 = vmatpush1.bf16.msra.mxu0 0
        %4001 = vmatprep.subr.bf16.mxu0 0
        %4002 = vmatpush1.bf16.msra.mxu0 0
        %4003 = vmatprep.subr.bf16.mxu0 0
        %4004 = vmatpush1.bf16.msra.mxu0 0
        %4005 = vmatprep.subr.bf16.mxu0 0
        %4006 = vmatpush1.bf16.msra.mxu0 0
        %4007 = vmatprep.subr.bf16.mxu0 0
        %4008 = vmatpush1.bf16.msra.mxu0 0
        %4009 = vmatprep.subr.bf16.mxu0 0
        %4010 = vmatpush1.bf16.msra.mxu0 0
        %4011 = vmatprep.subr.bf16.mxu0 0
        %4012 = vmatpush1.bf16.msra.mxu0 0
        %4013 = vmatprep.mubr.bf16.mxu0 0
        %4014 = vmatmul.mubr.bf16.gmra.mrb[0].mxu0 %v3979
        %v4015 = vpop.f32.mrb[0].mxu0
        %v4016 = vadd.f32 %v3976, %v4015
        %v4017 = vpop.f32.mrb[0].mxu0
        %v4018 = vpop.f32.mrb[0].mxu0
        %v4019 = vpop.f32.mrb[0].mxu0
        %4020 = vdwg.mxu0
        %v4021 = vxor.u32 %v4016, 2147483648
        %v4022 = vmul.f32 %v4021, 1.442695
        %v4023 = vpow.pop %v4022
        %v4024 = vadd.f32 %v4023, 1.0
        %v4025 = vrcp.pop %v4024
        %v4026 = vmul.f32 1.0, %v4025
        %v4027 = vmul.f32 %v4016, %v4026
        %v4028 = vld [vmem:[#allocation30] sm:$0xff]
        %v4029 = vld [vmem:[#allocation30 + $0x8] sm:$0xff]
        %v4030 = vld [vmem:[#allocation30 + $0x10] sm:$0xff]
        %v4031 = vld [vmem:[#allocation30 + $0x18] sm:$0xff]
        %v4032 = vpack.c.bf16 %v4027, %v4027
        %v4033 = vpack.c.bf16 %v4029, %v4028
        %v4034 = vpack.c.bf16 %v4031, %v4030
        %v4035 = vld [vmem:[%s20] sm:$0x1]
        %v4037 = vlaneseq
        %v4038 = vshrl.u32 %v4037, 7
        %v4039 = vsub.s32 0, %v4038
        %v4040 = vrot.slane %v4035, %v4039
        %v4043 = vsel %vm898, %v4032, 0
        %4045 = vmatprep.subr.bf16.mxu0 0
        %4046 = vmatpush1.bf16.msra.mxu0 %v4033
        %4047 = vmatprep.subr.bf16.mxu0 0
        %4048 = vmatpush1.bf16.msra.mxu0 %v4034
        %4049 = vmatprep.subr.bf16.mxu0 0
        %4050 = vmatpush1.bf16.msra.mxu0 0
        %4051 = vmatprep.subr.bf16.mxu0 0
        %4052 = vmatpush1.bf16.msra.mxu0 0
        %4053 = vmatprep.subr.bf16.mxu0 0
        %4054 = vmatpush1.bf16.msra.mxu0 0
        %4055 = vmatprep.subr.bf16.mxu0 0
        %4056 = vmatpush1.bf16.msra.mxu0 0
        %4057 = vmatprep.subr.bf16.mxu0 0
        %4058 = vmatpush1.bf16.msra.mxu0 0
        %4059 = vmatprep.subr.bf16.mxu0 0
        %4060 = vmatpush1.bf16.msra.mxu0 0
        %4061 = vmatprep.subr.bf16.mxu0 0
        %4062 = vmatpush1.bf16.msra.mxu0 0
        %4063 = vmatprep.subr.bf16.mxu0 0
        %4064 = vmatpush1.bf16.msra.mxu0 0
        %4065 = vmatprep.subr.bf16.mxu0 0
        %4066 = vmatpush1.bf16.msra.mxu0 0
        %4067 = vmatprep.subr.bf16.mxu0 0
        %4068 = vmatpush1.bf16.msra.mxu0 0
        %4069 = vmatprep.subr.bf16.mxu0 0
        %4070 = vmatpush1.bf16.msra.mxu0 0
        %4071 = vmatprep.subr.bf16.mxu0 0
        %4072 = vmatpush1.bf16.msra.mxu0 0
        %4073 = vmatprep.subr.bf16.mxu0 0
        %4074 = vmatpush1.bf16.msra.mxu0 0
        %4075 = vmatprep.subr.bf16.mxu0 0
        %4076 = vmatpush1.bf16.msra.mxu0 0
        %4077 = vmatprep.mubr.bf16.mxu0 0
        %4078 = vmatmul.mubr.bf16.gmra.mrb[0].mxu0 %v4043
        %v4079 = vpop.f32.mrb[0].mxu0
        %v4080 = vadd.f32 %v4040, %v4079
        %v4081 = vpop.f32.mrb[0].mxu0
        %v4082 = vpop.f32.mrb[0].mxu0
        %v4083 = vpop.f32.mrb[0].mxu0
        %4084 = vdwg.mxu0
        %v4085 = vadd.f32 %v3950, %v4080
        %4086 = vst.msk [vmem:[%s895] sm:$0xff] %vm898, %v4085
        %s4087 = sand.u32 %s500, 1
        %s4088 = scalar_lea.sflag [#allocation6], %s4087
        %s4089 = sand.u32 %s500, 1
        %s4090 = smul.addr %s4089, 8
        %s4091 = scalar_lea.vmem [#allocation31], %s4090
        // Predicated region
        $region173: #{tpu_custom_call.1} parent=103 // pred_check
          %p4092 = pneg %p510
        $region174: #{tpu_custom_call.1} parent=103 // pred_check_branch
          %4094 = sbr.rel (%p4092) target = $region176
        $region175: #{tpu_custom_call.1} parent=103 // pred_region
          %s4096 = ssub.s32 128, 128
          %4097 = vsyncadd %s4088, %s4096
          %s4098 = smul.addr %s46, 128
          %s4099 = scalar_lea.hbm %s21, %s4098
          %s4101 = sshll.u32 %s4091, 4
          %s4102 = int_to_ptr.vmem [resolvable:$true] %s4101
          %4104 = dma.vmem_to_hbm [thread:$0]  %s4102, 128, %s4099, %s4088
        $region176: #{tpu_custom_call.1} parent=103 // pred_fallthru
          _
      $region104: #{tpu_custom_call.1} parent=5 // pred_fallthru
        _
      %p4105 = scmp.le.s32.totalorder 2, %s41
      // Predicated region
      $region177: #{tpu_custom_call.1} parent=5 // pred_check
        %p4106 = pneg %p4105
      $region178: #{tpu_custom_call.1} parent=5 // pred_check_branch
        %4108 = sbr.rel (%p4106) target = $region180
      $region179: #{tpu_custom_call.1} parent=5 // pred_region
        %s4109 = ssub.s32 %s41, 2
        // Predicated region
        $region181: #{tpu_custom_call.1} parent=179 // pred_check
          %p4110 = pneg %p516
        $region182: #{tpu_custom_call.1} parent=179 // pred_check_branch
          %4112 = sbr.rel (%p4110) target = $region184
        $region183: #{tpu_custom_call.1} parent=179 // pred_region
          %s4113 = sand.u32 %s501, 1
          %s4114 = scalar_lea.sflag [#allocation6], %s4113
          %s4115 = sand.u32 %s501, 1
          %s4116 = smul.addr %s4115, 8
          %s4117 = scalar_lea.vmem [#allocation31], %s4116
          %4118 = dma.done %s4114, 128
        $region184: #{tpu_custom_call.1} parent=179 // pred_fallthru
          _
      $region180: #{tpu_custom_call.1} parent=5 // pred_fallthru
        _
    $region6: #{tpu_custom_call.1} parent=1 // loop_footer
      %s45 = sadd.s32 1, %s41
    $region7: #{tpu_custom_call.1} parent=1 // loop_footer_branch
      %40 = sbr.rel target = $region3
    $region8: #{tpu_custom_call.1} parent=1 // loop_exit
      _
    %4119 = vsyncpa [#allocation5], 1
    %s4120 = scalar_lea.sflag [#allocation5], 1
    %4121 = vsyncpa %s4120, 1
    %4122 = vsyncpa [#allocation8], 1
    %4123 = vsyncpa [#allocation11], 1
    %4124 = vsyncpa [#allocation14], 1
    %4125 = vsyncpa [#allocation17], 1
    %4126 = vsyncpa [#allocation20], 1
    %4127 = vsyncpa [#allocation23], 1
    %4128 = vsyncpa [#allocation26], 1
    %4129 = vsyncpa [#allocation29], 1
    %4130 = vsyncpa [#allocation6], 1
    %s4131 = scalar_lea.sflag [#allocation6], 1
    %4132 = vsyncpa %s4131, 1

</llo_original>
